<compile_context>
chip_gen: v6e
topology: v6e:2x2x1
jax: 0.10.0
libtpu: 0.0.40
codegen_flags: <defaults>
</compile_context>

<pallas_src>
import functools

import jax
import jax.numpy as jnp
from jax.experimental import pallas as pl
from jax.experimental.pallas import tpu as pltpu


def _pick_cout_tile(cout: int) -> int:
    """Largest lane-aligned tile that divides Cout (keeps weights VMEM-resident)."""
    if cout <= 256:
        return cout
    for cand in (512, 384, 256, 128):
        if cout % cand == 0:
            return cand
    return cout


def _conv3x3_bn_relu_kernel(x_ref, w_ref, b_ref, o_ref, *, H, W, Cin, tn):
    """Fused 3x3 conv (9 accumulated tap matmuls) + folded-BN bias + ReLU.

    x_ref: (H+2, W+2, Cin) bf16   whole padded image (halo included)
    w_ref: (9, Cin, tn)     bf16  folded conv+BN weights (VMEM resident)
    b_ref: (1, tn)          f32   folded conv+BN bias
    o_ref: (H, W, tn)             output tile
    """
    x = x_ref[...]                                   # single VMEM load
    acc = jnp.zeros((H * W, tn), dtype=jnp.float32)
    for dy in range(3):
        for dx in range(3):
            xs = x[dy:dy + H, dx:dx + W, :].reshape(H * W, Cin)
            acc = acc + jnp.dot(xs, w_ref[dy * 3 + dx],
                                preferred_element_type=jnp.float32)
    y = acc + b_ref[...]                             # folded conv+BN bias
    o_ref[...] = jnp.maximum(y, 0.0).reshape(H, W, tn).astype(o_ref.dtype)


def conv3x3_bn_relu(x_nhwc, w_oihw, conv_bias, gamma, beta, mean, var,
                    *, eps=1e-5, out_dtype=jnp.float32):
    """Fused Conv2d(3x3, pad=1) + BatchNorm2d (running stats) + ReLU, NHWC."""
    N, H, W, Cin = x_nhwc.shape
    Cout = w_oihw.shape[0]
    tn = _pick_cout_tile(Cout)

    # --- Fold BatchNorm into conv weight / bias (inference form). ---
    scale = gamma / jnp.sqrt(var + eps)                              # (Cout,)
    # (Cout, Cin, 3, 3) -> (kh, kw, Cin, Cout) -> (9, Cin, Cout), BN-scaled.
    w = (jnp.transpose(w_oihw, (2, 3, 1, 0)) * scale).reshape(9, Cin, Cout)
    w = w.astype(jnp.bfloat16)
    b = ((conv_bias - mean) * scale + beta).reshape(1, Cout).astype(jnp.float32)

    # Single spatial 'SAME' pad of the bf16 activation; the 3x3 gather happens
    # inside the kernel (no 9x im2col expansion, no K/N padding).
    xp = jnp.pad(x_nhwc.astype(jnp.bfloat16),
                 ((0, 0), (1, 1), (1, 1), (0, 0)))

    out_itemsize = jnp.dtype(out_dtype).itemsize
    # Explicit VMEM budget check (v7x has only 64 MiB per TensorCore).
    block_bytes = (2 * (H + 2) * (W + 2) * Cin * 2       # x block, dbl-buffered
                   + 2 * 9 * Cin * tn * 2                # weights
                   + 2 * H * W * tn * out_itemsize       # output block
                   + H * W * tn * 4)                     # f32 accumulator
    assert block_bytes < 40 * 1024 * 1024, (
        "per-image block exceeds VMEM budget; "
        "TODO(synk): row-tile with halo DMA for large images")

    kernel = functools.partial(_conv3x3_bn_relu_kernel,
                               H=H, W=W, Cin=Cin, tn=tn)

    flops = 2 * N * H * W * 9 * Cin * Cout
    bytes_accessed = (xp.size * 2 + w.size * 2 + b.size * 4
                      + N * H * W * Cout * out_itemsize)

    out = pl.pallas_call(
        kernel,
        out_shape=jax.ShapeDtypeStruct((N, H, W, Cout), out_dtype),
        grid_spec=pltpu.PrefetchScalarGridSpec(
            num_scalar_prefetch=0,
            grid=(N, Cout // tn),
            in_specs=[
                pl.BlockSpec((None, H + 2, W + 2, Cin),
                             lambda n, j: (n, 0, 0, 0)),
                pl.BlockSpec((9, Cin, tn), lambda n, j: (0, 0, j)),
                pl.BlockSpec((1, tn), lambda n, j: (0, j)),
            ],
            out_specs=pl.BlockSpec((None, H, W, tn),
                                   lambda n, j: (n, 0, 0, j)),
        ),
        compiler_params=pltpu.CompilerParams(
            dimension_semantics=("parallel", "parallel"),
            vmem_limit_bytes=48 * 1024 * 1024,
        ),
        cost_estimate=pl.CostEstimate(flops=flops, transcendentals=0,
                                      bytes_accessed=bytes_accessed),
    )(xp, w, b)
    return out


def double_conv(x_nchw, params):
    """Pallas forward of PyTorch DoubleConv: (conv3x3 -> BN -> ReLU) x 2."""
    x = jnp.transpose(x_nchw, (0, 2, 3, 1))                  # NCHW -> NHWC once
    # Intermediate activation kept bf16 (it is re-cast to bf16 for the second
    # matmul anyway); final output f32.
    y = conv3x3_bn_relu(x, params["w1"], params["b1"], params["g1"],
                        params["be1"], params["m1"], params["v1"],
                        out_dtype=jnp.bfloat16)
    y = conv3x3_bn_relu(y, params["w2"], params["b2"], params["g2"],
                        params["be2"], params["m2"], params["v2"],
                        out_dtype=jnp.float32)
    return jnp.transpose(y, (0, 3, 1, 2))                    # NHWC -> NCHW once


# ---------------------------- pure-JAX reference ----------------------------

def _ref_conv_bn_relu(x_nhwc, w_oihw, conv_bias, gamma, beta, mean, var,
                      eps=1e-5):
    w_hwio = jnp.transpose(w_oihw, (2, 3, 1, 0))
    y = jax.lax.conv_general_dilated(
        x_nhwc, w_hwio, window_strides=(1, 1), padding="SAME",
        dimension_numbers=("NHWC", "HWIO", "NHWC"))
    y = y + conv_bias
    y = (y - mean) * (gamma / jnp.sqrt(var + eps)) + beta
    return jnp.maximum(y, 0.0)


def _ref_double_conv(x_nchw, p):
    x = jnp.transpose(x_nchw, (0, 2, 3, 1))
    y = _ref_conv_bn_relu(x, p["w1"], p["b1"], p["g1"], p["be1"], p["m1"], p["v1"])
    y = _ref_conv_bn_relu(y, p["w2"], p["b2"], p["g2"], p["be2"], p["m2"], p["v2"])
    return jnp.transpose(y, (0, 3, 1, 2))


if __name__ == "__main__":
    key = jax.random.PRNGKey(0)
    in_channels, out_channels = 4, 8
    N, H, W = 2, 16, 16

    keys = jax.random.split(key, 13)
    x = jax.random.normal(keys[0], (N, in_channels, H, W), dtype=jnp.float32)

    def bn_params(kg, kb, km, kv, c):
        return (jax.random.normal(kg, (c,), jnp.float32) * 0.5 + 1.0,   # gamma
                jax.random.normal(kb, (c,), jnp.float32) * 0.1,         # beta
                jax.random.normal(km, (c,), jnp.float32) * 0.1,         # mean
                jax.random.uniform(kv, (c,), jnp.float32, 0.5, 1.5))    # var

    g1, be1, m1, v1 = bn_params(keys[3], keys[4], keys[5], keys[6], out_channels)
    g2, be2, m2, v2 = bn_params(keys[9], keys[10], keys[11], keys[12], out_channels)

    params = dict(
        w1=jax.random.normal(keys[1], (out_channels, in_channels, 3, 3),
                             jnp.float32) * 0.2,
        b1=jax.random.normal(keys[2], (out_channels,), jnp.float32) * 0.1,
        g1=g1, be1=be1, m1=m1, v1=v1,
        w2=jax.random.normal(keys[7], (out_channels, out_channels, 3, 3),
                             jnp.float32) * 0.2,
        b2=jax.random.normal(keys[8], (out_channels,), jnp.float32) * 0.1,
        g2=g2, be2=be2, m2=m2, v2=v2,
    )

    out = jax.block_until_ready(jax.jit(double_conv)(x, params))
    ref = jax.block_until_ready(_ref_double_conv(x, params))

    assert out.shape == (N, out_channels, H, W) and out.dtype == jnp.float32
    err = float(jnp.max(jnp.abs(out - ref)))
    scale = float(jnp.max(jnp.abs(ref))) + 1e-6
    # bf16 matmul inputs (f32 accumulation) across two conv layers: allow 3e-2.
    assert err / scale < 3e-2, f"max error {err:.3e} (rel-to-max {err/scale:.3e})"

    print("KERNEL_OK")
</pallas_src>

<mosaic_0001>
module attributes {stable_mosaic.version = 11 : i64} {
  func.func @_conv3x3_bn_relu_kernel(%arg0: i32, %arg1: i32, %arg2: memref<1x18x18x4xbf16, #tpu.memory_space<vmem>>, %arg3: memref<9x4x8xbf16, #tpu.memory_space<vmem>>, %arg4: memref<1x8xf32, #tpu.memory_space<vmem>>, %arg5: memref<1x16x16x8xbf16, #tpu.memory_space<vmem>>) attributes {dimension_semantics = [#tpu.dimension_semantics<parallel>, #tpu.dimension_semantics<parallel>], iteration_bounds = array<i64: 2, 1>, scalar_prefetch = 0 : i64, scratch_operands = 0 : i64, tpu.core_type = #tpu.core_type<tc>, window_params = [{transform_indices = @transform_0, window_bounds = array<i64: 1, 18, 18, 4>}, {transform_indices = @transform_1, window_bounds = array<i64: 9, 4, 8>}, {transform_indices = @transform_2, window_bounds = array<i64: 1, 8>}, {transform_indices = @transform_3, window_bounds = array<i64: 1, 16, 16, 8>}]} {
    %c0 = arith.constant 0 : index
    %c0_0 = arith.constant 0 : index
    %c0_1 = arith.constant 0 : index
    %c0_2 = arith.constant 0 : index
    %0 = vector.load %arg2[%c0, %c0_0, %c0_1, %c0_2] : memref<1x18x18x4xbf16, #tpu.memory_space<vmem>>, vector<1x18x18x4xbf16>
    %1 = vector.shape_cast %0 : vector<1x18x18x4xbf16> to vector<18x18x4xbf16>
    %cst = arith.constant 0.000000e+00 : f32
    %2 = vector.broadcast %cst : f32 to vector<256x8xf32>
    %3 = vector.extract_strided_slice %1 {offsets = [0, 0, 0], sizes = [16, 16, 4], strides = [1, 1, 1]} : vector<18x18x4xbf16> to vector<16x16x4xbf16>
    %4 = vector.shape_cast %3 : vector<16x16x4xbf16> to vector<256x4xbf16>
    %c0_3 = arith.constant 0 : index
    %c0_4 = arith.constant 0 : index
    %c0_5 = arith.constant 0 : index
    %5 = vector.load %arg3[%c0_3, %c0_4, %c0_5] : memref<9x4x8xbf16, #tpu.memory_space<vmem>>, vector<1x4x8xbf16>
    %6 = vector.shape_cast %5 : vector<1x4x8xbf16> to vector<4x8xbf16>
    %cst_6 = arith.constant dense<0.000000e+00> : vector<256x8xf32>
    %7 = tpu.matmul %4, %6, %cst_6 {dimension_numbers = #tpu.dot_dimension_numbers<[1], [0], [0], [1], [0, 0, 1, 1], [], []>} : vector<256x4xbf16>, vector<4x8xbf16>, vector<256x8xf32> -> vector<256x8xf32>
    %8 = arith.addf %2, %7 : vector<256x8xf32>
    %9 = vector.extract_strided_slice %1 {offsets = [0, 1, 0], sizes = [16, 16, 4], strides = [1, 1, 1]} : vector<18x18x4xbf16> to vector<16x16x4xbf16>
    %10 = vector.shape_cast %9 : vector<16x16x4xbf16> to vector<256x4xbf16>
    %c1 = arith.constant 1 : index
    %c0_7 = arith.constant 0 : index
    %c0_8 = arith.constant 0 : index
    %11 = vector.load %arg3[%c1, %c0_7, %c0_8] : memref<9x4x8xbf16, #tpu.memory_space<vmem>>, vector<1x4x8xbf16>
    %12 = vector.shape_cast %11 : vector<1x4x8xbf16> to vector<4x8xbf16>
    %cst_9 = arith.constant dense<0.000000e+00> : vector<256x8xf32>
    %13 = tpu.matmul %10, %12, %cst_9 {dimension_numbers = #tpu.dot_dimension_numbers<[1], [0], [0], [1], [0, 0, 1, 1], [], []>} : vector<256x4xbf16>, vector<4x8xbf16>, vector<256x8xf32> -> vector<256x8xf32>
    %14 = arith.addf %8, %13 : vector<256x8xf32>
    %15 = vector.extract_strided_slice %1 {offsets = [0, 2, 0], sizes = [16, 16, 4], strides = [1, 1, 1]} : vector<18x18x4xbf16> to vector<16x16x4xbf16>
    %16 = vector.shape_cast %15 : vector<16x16x4xbf16> to vector<256x4xbf16>
    %c2 = arith.constant 2 : index
    %c0_10 = arith.constant 0 : index
    %c0_11 = arith.constant 0 : index
    %17 = vector.load %arg3[%c2, %c0_10, %c0_11] : memref<9x4x8xbf16, #tpu.memory_space<vmem>>, vector<1x4x8xbf16>
    %18 = vector.shape_cast %17 : vector<1x4x8xbf16> to vector<4x8xbf16>
    %cst_12 = arith.constant dense<0.000000e+00> : vector<256x8xf32>
    %19 = tpu.matmul %16, %18, %cst_12 {dimension_numbers = #tpu.dot_dimension_numbers<[1], [0], [0], [1], [0, 0, 1, 1], [], []>} : vector<256x4xbf16>, vector<4x8xbf16>, vector<256x8xf32> -> vector<256x8xf32>
    %20 = arith.addf %14, %19 : vector<256x8xf32>
    %21 = vector.extract_strided_slice %1 {offsets = [1, 0, 0], sizes = [16, 16, 4], strides = [1, 1, 1]} : vector<18x18x4xbf16> to vector<16x16x4xbf16>
    %22 = vector.shape_cast %21 : vector<16x16x4xbf16> to vector<256x4xbf16>
    %c3 = arith.constant 3 : index
    %c0_13 = arith.constant 0 : index
    %c0_14 = arith.constant 0 : index
    %23 = vector.load %arg3[%c3, %c0_13, %c0_14] : memref<9x4x8xbf16, #tpu.memory_space<vmem>>, vector<1x4x8xbf16>
    %24 = vector.shape_cast %23 : vector<1x4x8xbf16> to vector<4x8xbf16>
    %cst_15 = arith.constant dense<0.000000e+00> : vector<256x8xf32>
    %25 = tpu.matmul %22, %24, %cst_15 {dimension_numbers = #tpu.dot_dimension_numbers<[1], [0], [0], [1], [0, 0, 1, 1], [], []>} : vector<256x4xbf16>, vector<4x8xbf16>, vector<256x8xf32> -> vector<256x8xf32>
    %26 = arith.addf %20, %25 : vector<256x8xf32>
    %27 = vector.extract_strided_slice %1 {offsets = [1, 1, 0], sizes = [16, 16, 4], strides = [1, 1, 1]} : vector<18x18x4xbf16> to vector<16x16x4xbf16>
    %28 = vector.shape_cast %27 : vector<16x16x4xbf16> to vector<256x4xbf16>
    %c4 = arith.constant 4 : index
    %c0_16 = arith.constant 0 : index
    %c0_17 = arith.constant 0 : index
    %29 = vector.load %arg3[%c4, %c0_16, %c0_17] : memref<9x4x8xbf16, #tpu.memory_space<vmem>>, vector<1x4x8xbf16>
    %30 = vector.shape_cast %29 : vector<1x4x8xbf16> to vector<4x8xbf16>
    %cst_18 = arith.constant dense<0.000000e+00> : vector<256x8xf32>
    %31 = tpu.matmul %28, %30, %cst_18 {dimension_numbers = #tpu.dot_dimension_numbers<[1], [0], [0], [1], [0, 0, 1, 1], [], []>} : vector<256x4xbf16>, vector<4x8xbf16>, vector<256x8xf32> -> vector<256x8xf32>
    %32 = arith.addf %26, %31 : vector<256x8xf32>
    %33 = vector.extract_strided_slice %1 {offsets = [1, 2, 0], sizes = [16, 16, 4], strides = [1, 1, 1]} : vector<18x18x4xbf16> to vector<16x16x4xbf16>
    %34 = vector.shape_cast %33 : vector<16x16x4xbf16> to vector<256x4xbf16>
    %c5 = arith.constant 5 : index
    %c0_19 = arith.constant 0 : index
    %c0_20 = arith.constant 0 : index
    %35 = vector.load %arg3[%c5, %c0_19, %c0_20] : memref<9x4x8xbf16, #tpu.memory_space<vmem>>, vector<1x4x8xbf16>
    %36 = vector.shape_cast %35 : vector<1x4x8xbf16> to vector<4x8xbf16>
    %cst_21 = arith.constant dense<0.000000e+00> : vector<256x8xf32>
    %37 = tpu.matmul %34, %36, %cst_21 {dimension_numbers = #tpu.dot_dimension_numbers<[1], [0], [0], [1], [0, 0, 1, 1], [], []>} : vector<256x4xbf16>, vector<4x8xbf16>, vector<256x8xf32> -> vector<256x8xf32>
    %38 = arith.addf %32, %37 : vector<256x8xf32>
    %39 = vector.extract_strided_slice %1 {offsets = [2, 0, 0], sizes = [16, 16, 4], strides = [1, 1, 1]} : vector<18x18x4xbf16> to vector<16x16x4xbf16>
    %40 = vector.shape_cast %39 : vector<16x16x4xbf16> to vector<256x4xbf16>
    %c6 = arith.constant 6 : index
    %c0_22 = arith.constant 0 : index
    %c0_23 = arith.constant 0 : index
    %41 = vector.load %arg3[%c6, %c0_22, %c0_23] : memref<9x4x8xbf16, #tpu.memory_space<vmem>>, vector<1x4x8xbf16>
    %42 = vector.shape_cast %41 : vector<1x4x8xbf16> to vector<4x8xbf16>
    %cst_24 = arith.constant dense<0.000000e+00> : vector<256x8xf32>
    %43 = tpu.matmul %40, %42, %cst_24 {dimension_numbers = #tpu.dot_dimension_numbers<[1], [0], [0], [1], [0, 0, 1, 1], [], []>} : vector<256x4xbf16>, vector<4x8xbf16>, vector<256x8xf32> -> vector<256x8xf32>
    %44 = arith.addf %38, %43 : vector<256x8xf32>
    %45 = vector.extract_strided_slice %1 {offsets = [2, 1, 0], sizes = [16, 16, 4], strides = [1, 1, 1]} : vector<18x18x4xbf16> to vector<16x16x4xbf16>
    %46 = vector.shape_cast %45 : vector<16x16x4xbf16> to vector<256x4xbf16>
    %c7 = arith.constant 7 : index
    %c0_25 = arith.constant 0 : index
    %c0_26 = arith.constant 0 : index
    %47 = vector.load %arg3[%c7, %c0_25, %c0_26] : memref<9x4x8xbf16, #tpu.memory_space<vmem>>, vector<1x4x8xbf16>
    %48 = vector.shape_cast %47 : vector<1x4x8xbf16> to vector<4x8xbf16>
    %cst_27 = arith.constant dense<0.000000e+00> : vector<256x8xf32>
    %49 = tpu.matmul %46, %48, %cst_27 {dimension_numbers = #tpu.dot_dimension_numbers<[1], [0], [0], [1], [0, 0, 1, 1], [], []>} : vector<256x4xbf16>, vector<4x8xbf16>, vector<256x8xf32> -> vector<256x8xf32>
    %50 = arith.addf %44, %49 : vector<256x8xf32>
    %51 = vector.extract_strided_slice %1 {offsets = [2, 2, 0], sizes = [16, 16, 4], strides = [1, 1, 1]} : vector<18x18x4xbf16> to vector<16x16x4xbf16>
    %52 = vector.shape_cast %51 : vector<16x16x4xbf16> to vector<256x4xbf16>
    %c8 = arith.constant 8 : index
    %c0_28 = arith.constant 0 : index
    %c0_29 = arith.constant 0 : index
    %53 = vector.load %arg3[%c8, %c0_28, %c0_29] : memref<9x4x8xbf16, #tpu.memory_space<vmem>>, vector<1x4x8xbf16>
    %54 = vector.shape_cast %53 : vector<1x4x8xbf16> to vector<4x8xbf16>
    %cst_30 = arith.constant dense<0.000000e+00> : vector<256x8xf32>
    %55 = tpu.matmul %52, %54, %cst_30 {dimension_numbers = #tpu.dot_dimension_numbers<[1], [0], [0], [1], [0, 0, 1, 1], [], []>} : vector<256x4xbf16>, vector<4x8xbf16>, vector<256x8xf32> -> vector<256x8xf32>
    %56 = arith.addf %50, %55 : vector<256x8xf32>
    %c0_31 = arith.constant 0 : index
    %c0_32 = arith.constant 0 : index
    %57 = vector.load %arg4[%c0_31, %c0_32] : memref<1x8xf32, #tpu.memory_space<vmem>>, vector<1x8xf32>
    %58 = vector.broadcast %57 : vector<1x8xf32> to vector<256x8xf32>
    %59 = arith.addf %56, %58 : vector<256x8xf32>
    %cst_33 = arith.constant 0.000000e+00 : f32
    %60 = vector.broadcast %cst_33 : f32 to vector<256x8xf32>
    %61 = arith.maximumf %59, %60 : vector<256x8xf32>
    %62 = vector.shape_cast %61 : vector<256x8xf32> to vector<16x16x8xf32>
    %63 = arith.truncf %62 : vector<16x16x8xf32> to vector<16x16x8xbf16>
    %c0_34 = arith.constant 0 : index
    %c0_35 = arith.constant 0 : index
    %c0_36 = arith.constant 0 : index
    %c0_37 = arith.constant 0 : index
    %64 = vector.load %arg5[%c0_34, %c0_35, %c0_36, %c0_37] : memref<1x16x16x8xbf16, #tpu.memory_space<vmem>>, vector<1x16x16x8xbf16>
    %65 = vector.shape_cast %64 : vector<1x16x16x8xbf16> to vector<16x16x8xbf16>
    %66 = vector.shape_cast %63 : vector<16x16x8xbf16> to vector<1x16x16x8xbf16>
    tpu.vector_store %arg5[%c0_34, %c0_35, %c0_36, %c0_37], %66 {strides = array<i32>} : memref<1x16x16x8xbf16, #tpu.memory_space<vmem>>, vector<1x16x16x8xbf16>,
    return
  }
  func.func @transform_0(%arg0: i32, %arg1: i32) -> (i32, i32, i32, i32) {
    %c0_i32 = arith.constant 0 : i32
    %c0_i32_0 = arith.constant 0 : i32
    %c0_i32_1 = arith.constant 0 : i32
    %c0_i32_2 = arith.constant 0 : i32
    return %arg0, %c0_i32, %c0_i32_0, %c0_i32_1 : i32, i32, i32, i32
  }
  func.func @transform_1(%arg0: i32, %arg1: i32) -> (i32, i32, i32) {
    %c0_i32 = arith.constant 0 : i32
    %c0_i32_0 = arith.constant 0 : i32
    %c0_i32_1 = arith.constant 0 : i32
    return %c0_i32, %c0_i32_0, %arg1 : i32, i32, i32
  }
  func.func @transform_2(%arg0: i32, %arg1: i32) -> (i32, i32) {
    %c0_i32 = arith.constant 0 : i32
    %c0_i32_0 = arith.constant 0 : i32
    return %c0_i32, %arg1 : i32, i32
  }
  func.func @transform_3(%arg0: i32, %arg1: i32) -> (i32, i32, i32, i32) {
    %c0_i32 = arith.constant 0 : i32
    %c0_i32_0 = arith.constant 0 : i32
    %c0_i32_1 = arith.constant 0 : i32
    return %arg0, %c0_i32, %c0_i32_0, %arg1 : i32, i32, i32, i32
  }
}

module attributes {stable_mosaic.version = 11 : i64} {
  func.func @_conv3x3_bn_relu_kernel(%arg0: i32, %arg1: i32, %arg2: memref<1x18x18x8xbf16, #tpu.memory_space<vmem>>, %arg3: memref<9x8x8xbf16, #tpu.memory_space<vmem>>, %arg4: memref<1x8xf32, #tpu.memory_space<vmem>>, %arg5: memref<1x16x16x8xf32, #tpu.memory_space<vmem>>) attributes {dimension_semantics = [#tpu.dimension_semantics<parallel>, #tpu.dimension_semantics<parallel>], iteration_bounds = array<i64: 2, 1>, scalar_prefetch = 0 : i64, scratch_operands = 0 : i64, tpu.core_type = #tpu.core_type<tc>, window_params = [{transform_indices = @transform_0, window_bounds = array<i64: 1, 18, 18, 8>}, {transform_indices = @transform_1, window_bounds = array<i64: 9, 8, 8>}, {transform_indices = @transform_2, window_bounds = array<i64: 1, 8>}, {transform_indices = @transform_3, window_bounds = array<i64: 1, 16, 16, 8>}]} {
    %c0 = arith.constant 0 : index
    %c0_0 = arith.constant 0 : index
    %c0_1 = arith.constant 0 : index
    %c0_2 = arith.constant 0 : index
    %0 = vector.load %arg2[%c0, %c0_0, %c0_1, %c0_2] : memref<1x18x18x8xbf16, #tpu.memory_space<vmem>>, vector<1x18x18x8xbf16>
    %1 = vector.shape_cast %0 : vector<1x18x18x8xbf16> to vector<18x18x8xbf16>
    %cst = arith.constant 0.000000e+00 : f32
    %2 = vector.broadcast %cst : f32 to vector<256x8xf32>
    %3 = vector.extract_strided_slice %1 {offsets = [0, 0, 0], sizes = [16, 16, 8], strides = [1, 1, 1]} : vector<18x18x8xbf16> to vector<16x16x8xbf16>
    %4 = vector.shape_cast %3 : vector<16x16x8xbf16> to vector<256x8xbf16>
    %c0_3 = arith.constant 0 : index
    %c0_4 = arith.constant 0 : index
    %c0_5 = arith.constant 0 : index
    %5 = vector.load %arg3[%c0_3, %c0_4, %c0_5] : memref<9x8x8xbf16, #tpu.memory_space<vmem>>, vector<1x8x8xbf16>
    %6 = vector.shape_cast %5 : vector<1x8x8xbf16> to vector<8x8xbf16>
    %cst_6 = arith.constant dense<0.000000e+00> : vector<256x8xf32>
    %7 = tpu.matmul %4, %6, %cst_6 {dimension_numbers = #tpu.dot_dimension_numbers<[1], [0], [0], [1], [0, 0, 1, 1], [], []>} : vector<256x8xbf16>, vector<8x8xbf16>, vector<256x8xf32> -> vector<256x8xf32>
    %8 = arith.addf %2, %7 : vector<256x8xf32>
    %9 = vector.extract_strided_slice %1 {offsets = [0, 1, 0], sizes = [16, 16, 8], strides = [1, 1, 1]} : vector<18x18x8xbf16> to vector<16x16x8xbf16>
    %10 = vector.shape_cast %9 : vector<16x16x8xbf16> to vector<256x8xbf16>
    %c1 = arith.constant 1 : index
    %c0_7 = arith.constant 0 : index
    %c0_8 = arith.constant 0 : index
    %11 = vector.load %arg3[%c1, %c0_7, %c0_8] : memref<9x8x8xbf16, #tpu.memory_space<vmem>>, vector<1x8x8xbf16>
    %12 = vector.shape_cast %11 : vector<1x8x8xbf16> to vector<8x8xbf16>
    %cst_9 = arith.constant dense<0.000000e+00> : vector<256x8xf32>
    %13 = tpu.matmul %10, %12, %cst_9 {dimension_numbers = #tpu.dot_dimension_numbers<[1], [0], [0], [1], [0, 0, 1, 1], [], []>} : vector<256x8xbf16>, vector<8x8xbf16>, vector<256x8xf32> -> vector<256x8xf32>
    %14 = arith.addf %8, %13 : vector<256x8xf32>
    %15 = vector.extract_strided_slice %1 {offsets = [0, 2, 0], sizes = [16, 16, 8], strides = [1, 1, 1]} : vector<18x18x8xbf16> to vector<16x16x8xbf16>
    %16 = vector.shape_cast %15 : vector<16x16x8xbf16> to vector<256x8xbf16>
    %c2 = arith.constant 2 : index
    %c0_10 = arith.constant 0 : index
    %c0_11 = arith.constant 0 : index
    %17 = vector.load %arg3[%c2, %c0_10, %c0_11] : memref<9x8x8xbf16, #tpu.memory_space<vmem>>, vector<1x8x8xbf16>
    %18 = vector.shape_cast %17 : vector<1x8x8xbf16> to vector<8x8xbf16>
    %cst_12 = arith.constant dense<0.000000e+00> : vector<256x8xf32>
    %19 = tpu.matmul %16, %18, %cst_12 {dimension_numbers = #tpu.dot_dimension_numbers<[1], [0], [0], [1], [0, 0, 1, 1], [], []>} : vector<256x8xbf16>, vector<8x8xbf16>, vector<256x8xf32> -> vector<256x8xf32>
    %20 = arith.addf %14, %19 : vector<256x8xf32>
    %21 = vector.extract_strided_slice %1 {offsets = [1, 0, 0], sizes = [16, 16, 8], strides = [1, 1, 1]} : vector<18x18x8xbf16> to vector<16x16x8xbf16>
    %22 = vector.shape_cast %21 : vector<16x16x8xbf16> to vector<256x8xbf16>
    %c3 = arith.constant 3 : index
    %c0_13 = arith.constant 0 : index
    %c0_14 = arith.constant 0 : index
    %23 = vector.load %arg3[%c3, %c0_13, %c0_14] : memref<9x8x8xbf16, #tpu.memory_space<vmem>>, vector<1x8x8xbf16>
    %24 = vector.shape_cast %23 : vector<1x8x8xbf16> to vector<8x8xbf16>
    %cst_15 = arith.constant dense<0.000000e+00> : vector<256x8xf32>
    %25 = tpu.matmul %22, %24, %cst_15 {dimension_numbers = #tpu.dot_dimension_numbers<[1], [0], [0], [1], [0, 0, 1, 1], [], []>} : vector<256x8xbf16>, vector<8x8xbf16>, vector<256x8xf32> -> vector<256x8xf32>
    %26 = arith.addf %20, %25 : vector<256x8xf32>
    %27 = vector.extract_strided_slice %1 {offsets = [1, 1, 0], sizes = [16, 16, 8], strides = [1, 1, 1]} : vector<18x18x8xbf16> to vector<16x16x8xbf16>
    %28 = vector.shape_cast %27 : vector<16x16x8xbf16> to vector<256x8xbf16>
    %c4 = arith.constant 4 : index
    %c0_16 = arith.constant 0 : index
    %c0_17 = arith.constant 0 : index
    %29 = vector.load %arg3[%c4, %c0_16, %c0_17] : memref<9x8x8xbf16, #tpu.memory_space<vmem>>, vector<1x8x8xbf16>
    %30 = vector.shape_cast %29 : vector<1x8x8xbf16> to vector<8x8xbf16>
    %cst_18 = arith.constant dense<0.000000e+00> : vector<256x8xf32>
    %31 = tpu.matmul %28, %30, %cst_18 {dimension_numbers = #tpu.dot_dimension_numbers<[1], [0], [0], [1], [0, 0, 1, 1], [], []>} : vector<256x8xbf16>, vector<8x8xbf16>, vector<256x8xf32> -> vector<256x8xf32>
    %32 = arith.addf %26, %31 : vector<256x8xf32>
    %33 = vector.extract_strided_slice %1 {offsets = [1, 2, 0], sizes = [16, 16, 8], strides = [1, 1, 1]} : vector<18x18x8xbf16> to vector<16x16x8xbf16>
    %34 = vector.shape_cast %33 : vector<16x16x8xbf16> to vector<256x8xbf16>
    %c5 = arith.constant 5 : index
    %c0_19 = arith.constant 0 : index
    %c0_20 = arith.constant 0 : index
    %35 = vector.load %arg3[%c5, %c0_19, %c0_20] : memref<9x8x8xbf16, #tpu.memory_space<vmem>>, vector<1x8x8xbf16>
    %36 = vector.shape_cast %35 : vector<1x8x8xbf16> to vector<8x8xbf16>
    %cst_21 = arith.constant dense<0.000000e+00> : vector<256x8xf32>
    %37 = tpu.matmul %34, %36, %cst_21 {dimension_numbers = #tpu.dot_dimension_numbers<[1], [0], [0], [1], [0, 0, 1, 1], [], []>} : vector<256x8xbf16>, vector<8x8xbf16>, vector<256x8xf32> -> vector<256x8xf32>
    %38 = arith.addf %32, %37 : vector<256x8xf32>
    %39 = vector.extract_strided_slice %1 {offsets = [2, 0, 0], sizes = [16, 16, 8], strides = [1, 1, 1]} : vector<18x18x8xbf16> to vector<16x16x8xbf16>
    %40 = vector.shape_cast %39 : vector<16x16x8xbf16> to vector<256x8xbf16>
    %c6 = arith.constant 6 : index
    %c0_22 = arith.constant 0 : index
    %c0_23 = arith.constant 0 : index
    %41 = vector.load %arg3[%c6, %c0_22, %c0_23] : memref<9x8x8xbf16, #tpu.memory_space<vmem>>, vector<1x8x8xbf16>
    %42 = vector.shape_cast %41 : vector<1x8x8xbf16> to vector<8x8xbf16>
    %cst_24 = arith.constant dense<0.000000e+00> : vector<256x8xf32>
    %43 = tpu.matmul %40, %42, %cst_24 {dimension_numbers = #tpu.dot_dimension_numbers<[1], [0], [0], [1], [0, 0, 1, 1], [], []>} : vector<256x8xbf16>, vector<8x8xbf16>, vector<256x8xf32> -> vector<256x8xf32>
    %44 = arith.addf %38, %43 : vector<256x8xf32>
    %45 = vector.extract_strided_slice %1 {offsets = [2, 1, 0], sizes = [16, 16, 8], strides = [1, 1, 1]} : vector<18x18x8xbf16> to vector<16x16x8xbf16>
    %46 = vector.shape_cast %45 : vector<16x16x8xbf16> to vector<256x8xbf16>
    %c7 = arith.constant 7 : index
    %c0_25 = arith.constant 0 : index
    %c0_26 = arith.constant 0 : index
    %47 = vector.load %arg3[%c7, %c0_25, %c0_26] : memref<9x8x8xbf16, #tpu.memory_space<vmem>>, vector<1x8x8xbf16>
    %48 = vector.shape_cast %47 : vector<1x8x8xbf16> to vector<8x8xbf16>
    %cst_27 = arith.constant dense<0.000000e+00> : vector<256x8xf32>
    %49 = tpu.matmul %46, %48, %cst_27 {dimension_numbers = #tpu.dot_dimension_numbers<[1], [0], [0], [1], [0, 0, 1, 1], [], []>} : vector<256x8xbf16>, vector<8x8xbf16>, vector<256x8xf32> -> vector<256x8xf32>
    %50 = arith.addf %44, %49 : vector<256x8xf32>
    %51 = vector.extract_strided_slice %1 {offsets = [2, 2, 0], sizes = [16, 16, 8], strides = [1, 1, 1]} : vector<18x18x8xbf16> to vector<16x16x8xbf16>
    %52 = vector.shape_cast %51 : vector<16x16x8xbf16> to vector<256x8xbf16>
    %c8 = arith.constant 8 : index
    %c0_28 = arith.constant 0 : index
    %c0_29 = arith.constant 0 : index
    %53 = vector.load %arg3[%c8, %c0_28, %c0_29] : memref<9x8x8xbf16, #tpu.memory_space<vmem>>, vector<1x8x8xbf16>
    %54 = vector.shape_cast %53 : vector<1x8x8xbf16> to vector<8x8xbf16>
    %cst_30 = arith.constant dense<0.000000e+00> : vector<256x8xf32>
    %55 = tpu.matmul %52, %54, %cst_30 {dimension_numbers = #tpu.dot_dimension_numbers<[1], [0], [0], [1], [0, 0, 1, 1], [], []>} : vector<256x8xbf16>, vector<8x8xbf16>, vector<256x8xf32> -> vector<256x8xf32>
    %56 = arith.addf %50, %55 : vector<256x8xf32>
    %c0_31 = arith.constant 0 : index
    %c0_32 = arith.constant 0 : index
    %57 = vector.load %arg4[%c0_31, %c0_32] : memref<1x8xf32, #tpu.memory_space<vmem>>, vector<1x8xf32>
    %58 = vector.broadcast %57 : vector<1x8xf32> to vector<256x8xf32>
    %59 = arith.addf %56, %58 : vector<256x8xf32>
    %cst_33 = arith.constant 0.000000e+00 : f32
    %60 = vector.broadcast %cst_33 : f32 to vector<256x8xf32>
    %61 = arith.maximumf %59, %60 : vector<256x8xf32>
    %62 = vector.shape_cast %61 : vector<256x8xf32> to vector<16x16x8xf32>
    %c0_34 = arith.constant 0 : index
    %c0_35 = arith.constant 0 : index
    %c0_36 = arith.constant 0 : index
    %c0_37 = arith.constant 0 : index
    %63 = vector.load %arg5[%c0_34, %c0_35, %c0_36, %c0_37] : memref<1x16x16x8xf32, #tpu.memory_space<vmem>>, vector<1x16x16x8xf32>
    %64 = vector.shape_cast %63 : vector<1x16x16x8xf32> to vector<16x16x8xf32>
    %65 = vector.shape_cast %62 : vector<16x16x8xf32> to vector<1x16x16x8xf32>
    tpu.vector_store %arg5[%c0_34, %c0_35, %c0_36, %c0_37], %65 {strides = array<i32>} : memref<1x16x16x8xf32, #tpu.memory_space<vmem>>, vector<1x16x16x8xf32>,
    return
  }
  func.func @transform_0(%arg0: i32, %arg1: i32) -> (i32, i32, i32, i32) {
    %c0_i32 = arith.constant 0 : i32
    %c0_i32_0 = arith.constant 0 : i32
    %c0_i32_1 = arith.constant 0 : i32
    %c0_i32_2 = arith.constant 0 : i32
    return %arg0, %c0_i32, %c0_i32_0, %c0_i32_1 : i32, i32, i32, i32
  }
  func.func @transform_1(%arg0: i32, %arg1: i32) -> (i32, i32, i32) {
    %c0_i32 = arith.constant 0 : i32
    %c0_i32_0 = arith.constant 0 : i32
    %c0_i32_1 = arith.constant 0 : i32
    return %c0_i32, %c0_i32_0, %arg1 : i32, i32, i32
  }
  func.func @transform_2(%arg0: i32, %arg1: i32) -> (i32, i32) {
    %c0_i32 = arith.constant 0 : i32
    %c0_i32_0 = arith.constant 0 : i32
    return %c0_i32, %arg1 : i32, i32
  }
  func.func @transform_3(%arg0: i32, %arg1: i32) -> (i32, i32, i32, i32) {
    %c0_i32 = arith.constant 0 : i32
    %c0_i32_0 = arith.constant 0 : i32
    %c0_i32_1 = arith.constant 0 : i32
    return %arg0, %c0_i32, %c0_i32_0, %arg1 : i32, i32, i32, i32
  }
}

</mosaic_0001>

<llo_original>
// kernel: double_conv.2
$region0: #{double_conv.2}
  #allocation0 [shape = 'u32[]', space=smem, size = 0x4, offset = 0x4, fixed_abs, tag = 'smem constant byte address 0x4 - core index']
  #allocation1 [shape = 'u32[144,128]{1,0:T(1,128)}', space=vmem, size = 0x12000, scoped, tag = 'internal scratch']
  %s0 = inlined_call_operand.vmem [shape: bf16[2,18,18,4], index: 0, kind: input, shape index: {}]
  %s1 = inlined_call_operand.vmem [shape: bf16[9,4,8], index: 1, kind: input, shape index: {}]
  %s2 = inlined_call_operand.vmem [shape: f32[1,8], index: 2, kind: input, shape index: {}]
  %s3 = inlined_call_operand.vmem [shape: bf16[2,16,16,8], index: 3, kind: output, shape index: {}]
  %s4 = sld [smem:[#allocation0]]
  $region45: #{double_conv.2} parent=0
    _
  %s6 = ssub.s32 1, %s4
  %s7 = scalar_select 0, %s6, %s4
  loop: start=0, step=1, limit=4
  $region2: #{double_conv.2} parent=0 // loop_pre_header
    _
  $region3: #{double_conv.2} parent=0 // loop_header
    %s9 = sphi 0, %s13
    %p10 = scmp.ge.s32.totalorder %s9, 4
    %s16 = sphi 0, %s28
    %s17 = sphi 0, %s24
    %s18 = sphi 0, %s16
    %s19 = sphi 0, %s17
    %s20 = sphi 0, %s18
    %s21 = sphi 0, %s19
    %s31 = sphi 0, %s33
    %s34 = sphi 0, %s31
    %s35 = sphi 0, %s34
    %s51 = sphi 0, %s35
    %s57 = sphi 0, %s59
    %s60 = sphi 0, %s57
    %s61 = sphi 0, %s60
    %s77 = sphi 0, %s61
    %s83 = sphi 0, %s85
    %s86 = sphi 0, %s83
    %s87 = sphi 0, %s86
    %s103 = sphi 0, %s87
    %s111 = sphi 0, %s113
    %s114 = sphi 0, %s111
    %s115 = sphi 0, %s114
    %s131 = sphi 0, %s115
  $region4: #{double_conv.2} parent=0 // loop_header_branch
    %12 = sbr.rel (%p10) target = $region8
  $region5: #{double_conv.2} parent=0 // loop_body
    %s14 = ssub.s32 %s9, 1
    %s15 = ssub.s32 %s9, 2
    %s22 = sadd.s32 1, %s17
    %p23 = scmp.ge.s32.totalorder %s22, 1
    %s24 = scalar_select %p23, 0, %s22
    %s25 = sadd.s32 1, %s16
    %s26 = scalar_select %p23, %s25, %s16
    %p27 = scmp.ge.s32.totalorder %s26, 2
    %s28 = scalar_select %p27, 0, %s26
    %s29 = ssub.s32 %s16, %s28
    %p30 = scmp.eq.s32.totalorder %s29, 0
    %s32 = sadd.s32 %s31, 1
    %s33 = scalar_select %p30, %s31, %s32
    %p36 = pneg %p30
    %p37 = scmp.eq.s32.totalorder %s9, 1
    %p38 = por %p36, %p37
    %p39 = scmp.ne.s32.totalorder %s31, %s34
    %p40 = scmp.eq.s32.totalorder %s9, 0
    %p41 = por %p39, %p40
    %p42 = scmp.ne.s32.totalorder %s31, %s34
    %p43 = scmp.eq.s32.totalorder %s14, 1
    %p44 = por %p42, %p43
    %p45 = scmp.ne.s32.totalorder %s34, %s35
    %p46 = scmp.eq.s32.totalorder %s14, 0
    %p47 = por %p45, %p46
    %p48 = scmp.ne.s32.totalorder %s34, %s35
    %p49 = scmp.eq.s32.totalorder %s15, 1
    %p50 = por %p48, %p49
    %p52 = scmp.ne.s32.totalorder %s35, %s51
    %p53 = scmp.eq.s32.totalorder %s15, 0
    %p54 = por %p52, %p53
    %s55 = ssub.s32 %s17, %s24
    %p56 = scmp.eq.s32.totalorder %s55, 0
    %s58 = sadd.s32 %s57, 1
    %s59 = scalar_select %p56, %s57, %s58
    %p62 = pneg %p56
    %p63 = scmp.eq.s32.totalorder %s9, 1
    %p64 = por %p62, %p63
    %p65 = scmp.ne.s32.totalorder %s57, %s60
    %p66 = scmp.eq.s32.totalorder %s9, 0
    %p67 = por %p65, %p66
    %p68 = scmp.ne.s32.totalorder %s57, %s60
    %p69 = scmp.eq.s32.totalorder %s14, 1
    %p70 = por %p68, %p69
    %p71 = scmp.ne.s32.totalorder %s60, %s61
    %p72 = scmp.eq.s32.totalorder %s14, 0
    %p73 = por %p71, %p72
    %p74 = scmp.ne.s32.totalorder %s60, %s61
    %p75 = scmp.eq.s32.totalorder %s15, 1
    %p76 = por %p74, %p75
    %p78 = scmp.ne.s32.totalorder %s61, %s77
    %p79 = scmp.eq.s32.totalorder %s15, 0
    %p80 = por %p78, %p79
    %s81 = ssub.s32 %s17, %s24
    %p82 = scmp.eq.s32.totalorder %s81, 0
    %s84 = sadd.s32 %s83, 1
    %s85 = scalar_select %p82, %s83, %s84
    %p88 = pneg %p82
    %p89 = scmp.eq.s32.totalorder %s9, 1
    %p90 = por %p88, %p89
    %p91 = scmp.ne.s32.totalorder %s83, %s86
    %p92 = scmp.eq.s32.totalorder %s9, 0
    %p93 = por %p91, %p92
    %p94 = scmp.ne.s32.totalorder %s83, %s86
    %p95 = scmp.eq.s32.totalorder %s14, 1
    %p96 = por %p94, %p95
    %p97 = scmp.ne.s32.totalorder %s86, %s87
    %p98 = scmp.eq.s32.totalorder %s14, 0
    %p99 = por %p97, %p98
    %p100 = scmp.ne.s32.totalorder %s86, %s87
    %p101 = scmp.eq.s32.totalorder %s15, 1
    %p102 = por %p100, %p101
    %p104 = scmp.ne.s32.totalorder %s87, %s103
    %p105 = scmp.eq.s32.totalorder %s15, 0
    %p106 = por %p104, %p105
    %s107 = ssub.s32 %s16, %s28
    %s108 = ssub.s32 %s17, %s24
    %s109 = sor.u32 %s107, %s108
    %p110 = scmp.eq.s32.totalorder %s109, 0
    %s112 = sadd.s32 %s111, 1
    %s113 = scalar_select %p110, %s111, %s112
    %p116 = pneg %p110
    %p117 = scmp.eq.s32.totalorder %s9, 1
    %p118 = por %p116, %p117
    %p119 = scmp.ne.s32.totalorder %s111, %s114
    %p120 = scmp.eq.s32.totalorder %s9, 0
    %p121 = por %p119, %p120
    %p122 = scmp.ne.s32.totalorder %s111, %s114
    %p123 = scmp.eq.s32.totalorder %s14, 1
    %p124 = por %p122, %p123
    %p125 = scmp.ne.s32.totalorder %s114, %s115
    %p126 = scmp.eq.s32.totalorder %s14, 0
    %p127 = por %p125, %p126
    %p128 = scmp.ne.s32.totalorder %s114, %s115
    %p129 = scmp.eq.s32.totalorder %s15, 1
    %p130 = por %p128, %p129
    %p132 = scmp.ne.s32.totalorder %s115, %s131
    %p133 = scmp.eq.s32.totalorder %s15, 0
    %p134 = por %p132, %p133
    %p135 = scmp.le.s32.totalorder 1, %s9
    %p136 = scmp.lt.s32.totalorder %s9, 3
    %p137 = pnand %p135, %p136
    %p138 = pneg %p137
    // Predicated region
    $region9: #{double_conv.2} parent=5 // pred_check
      _
    $region10: #{double_conv.2} parent=5 // pred_check_branch
      %140 = sbr.rel (%p137) target = $region12
    $region11: #{double_conv.2} parent=5 // pred_region
      %s141 = ssub.s32 %s9, 1
      // Predicated region
      $region13: #{double_conv.2} parent=11 // pred_check
        %p142 = pneg %p73
      $region14: #{double_conv.2} parent=11 // pred_check_branch
        %144 = sbr.rel (%p142) target = $region16
      $region15: #{double_conv.2} parent=11 // pred_region
        %p145 = scmp.lt.s32.totalorder %s19, 0
        %s146 = scalar_select %p145, %s19, 0
        %s147 = smul.addr %s146, 2
        %s148 = scalar_lea.vmem %s1, %s147
      $region16: #{double_conv.2} parent=11 // pred_fallthru
        _
      // Predicated region
      $region17: #{double_conv.2} parent=11 // pred_check
        %p149 = pneg %p99
      $region18: #{double_conv.2} parent=11 // pred_check_branch
        %151 = sbr.rel (%p149) target = $region20
      $region19: #{double_conv.2} parent=11 // pred_region
        %p152 = scmp.lt.s32.totalorder %s19, 0
        %s153 = scalar_select %p152, %s19, 0
        %s154 = scalar_lea.vmem %s2, %s153
      $region20: #{double_conv.2} parent=11 // pred_fallthru
        _
    $region12: #{double_conv.2} parent=5 // pred_fallthru
      _
    %p155 = scmp.lt.s32.totalorder %s9, 2
    // Predicated region
    $region21: #{double_conv.2} parent=5 // pred_check
      %p156 = pneg %p155
    $region22: #{double_conv.2} parent=5 // pred_check_branch
      %158 = sbr.rel (%p156) target = $region24
    $region23: #{double_conv.2} parent=5 // pred_region
      // Predicated region
      $region25: #{double_conv.2} parent=23 // pred_check
        %p159 = pneg %p41
      $region26: #{double_conv.2} parent=23 // pred_check_branch
        %161 = sbr.rel (%p159) target = $region28
      $region27: #{double_conv.2} parent=23 // pred_region
        %p162 = scmp.lt.s32.totalorder %s16, 1
        %s163 = scalar_select %p162, %s16, 1
        %s164 = smul.addr %s163, 54
        %s165 = smul.addr %s164, 4
        %s166 = scalar_lea.vmem %s0, %s165
      $region28: #{double_conv.2} parent=23 // pred_fallthru
        _
    $region24: #{double_conv.2} parent=5 // pred_fallthru
      _
    %p167 = scmp.le.s32.totalorder 1, %s9
    %p168 = scmp.lt.s32.totalorder %s9, 3
    %p169 = pnand %p167, %p168
    %p170 = pneg %p169
    // Predicated region
    $region29: #{double_conv.2} parent=5 // pred_check
      _
    $region30: #{double_conv.2} parent=5 // pred_check_branch
      %172 = sbr.rel (%p169) target = $region32
    $region31: #{double_conv.2} parent=5 // pred_region
      %s173 = ssub.s32 %s9, 1
      %p174 = scmp.lt.s32.totalorder %s18, 1
      %s175 = scalar_select %p174, %s18, 1
      %s176 = smul.addr %s175, 54
      %s177 = smul.addr %s176, 4
      %s178 = scalar_lea.vmem %s0, %s177
      %p179 = pneg %p47
      %p180 = pneg %p44
      %p181 = scmp.lt.s32.totalorder %s19, 0
      %s182 = scalar_select %p181, %s19, 0
      %s183 = smul.addr %s182, 2
      %s184 = scalar_lea.vmem %s1, %s183
      %p185 = pneg %p73
      %p186 = pneg %p70
      %p187 = scmp.lt.s32.totalorder %s19, 0
      %s188 = scalar_select %p187, %s19, 0
      %s189 = scalar_lea.vmem %s2, %s188
      %p190 = pneg %p99
      %p191 = pneg %p96
      %p192 = pneg %p127
      %p193 = pneg %p124
      %p194 = scmp.lt.s32.totalorder %s18, 1
      %s195 = scalar_select %p194, %s18, 1
      %p196 = scmp.lt.s32.totalorder %s19, 0
      %s197 = scalar_select %p196, %s19, 0
      %s198 = smul.addr %s195, 32
      %s199 = sadd.s32 %s197, %s198
      %s200 = smul.addr %s199, 4
      %s201 = scalar_lea.vmem %s3, %s200
      %p202 = scmp.lt.s32.totalorder %s18, 1
      %s203 = scalar_select %p202, %s18, 1
      %s204 = smul.addr %s203, 54
      %s205 = smul.addr %s204, 4
      %s206 = scalar_lea.vmem %s0, %s205
      %p207 = scmp.lt.s32.totalorder %s19, 0
      %s208 = scalar_select %p207, %s19, 0
      %s209 = smul.addr %s208, 2
      %s210 = scalar_lea.vmem %s1, %s209
      %p211 = scmp.lt.s32.totalorder %s19, 0
      %s212 = scalar_select %p211, %s19, 0
      %s213 = scalar_lea.vmem %s2, %s212
      %p214 = scmp.lt.s32.totalorder %s18, 1
      %s215 = scalar_select %p214, %s18, 1
      %p216 = scmp.lt.s32.totalorder %s19, 0
      %s217 = scalar_select %p216, %s19, 0
      %s218 = smul.addr %s215, 32
      %s219 = sadd.s32 %s217, %s218
      %s220 = smul.addr %s219, 4
      %s221 = scalar_lea.vmem %s3, %s220
      %v223 = vld [vmem:[%s206] sm:$0xf]
      %v224 = vld [vmem:[%s206 + $0x4] sm:$0xf]
      %v225 = vld [vmem:[%s206 + $0x8] sm:$0x1]
      %v226 = vld [vmem:[%s206 + $0xc] sm:$0xf]
      %v227 = vld [vmem:[%s206 + $0x10] sm:$0xf]
      %v228 = vld [vmem:[%s206 + $0x14] sm:$0x1]
      %v229 = vld [vmem:[%s206 + $0x18] sm:$0xf]
      %v230 = vld [vmem:[%s206 + $0x1c] sm:$0xf]
      %v231 = vld [vmem:[%s206 + $0x20] sm:$0x1]
      %v232 = vld [vmem:[%s206 + $0x24] sm:$0xf]
      %v233 = vld [vmem:[%s206 + $0x28] sm:$0xf]
      %v234 = vld [vmem:[%s206 + $0x2c] sm:$0x1]
      %v235 = vld [vmem:[%s206 + $0x30] sm:$0xf]
      %v236 = vld [vmem:[%s206 + $0x34] sm:$0xf]
      %v237 = vld [vmem:[%s206 + $0x38] sm:$0x1]
      %v238 = vld [vmem:[%s206 + $0x3c] sm:$0xf]
      %v239 = vld [vmem:[%s206 + $0x40] sm:$0xf]
      %v240 = vld [vmem:[%s206 + $0x44] sm:$0x1]
      %v241 = vld [vmem:[%s206 + $0x48] sm:$0xf]
      %v242 = vld [vmem:[%s206 + $0x4c] sm:$0xf]
      %v243 = vld [vmem:[%s206 + $0x50] sm:$0x1]
      %v244 = vld [vmem:[%s206 + $0x54] sm:$0xf]
      %v245 = vld [vmem:[%s206 + $0x58] sm:$0xf]
      %v246 = vld [vmem:[%s206 + $0x5c] sm:$0x1]
      %v247 = vld [vmem:[%s206 + $0x60] sm:$0xf]
      %v248 = vld [vmem:[%s206 + $0x64] sm:$0xf]
      %v249 = vld [vmem:[%s206 + $0x68] sm:$0x1]
      %v250 = vld [vmem:[%s206 + $0x6c] sm:$0xf]
      %v251 = vld [vmem:[%s206 + $0x70] sm:$0xf]
      %v252 = vld [vmem:[%s206 + $0x74] sm:$0x1]
      %v253 = vld [vmem:[%s206 + $0x78] sm:$0xf]
      %v254 = vld [vmem:[%s206 + $0x7c] sm:$0xf]
      %v255 = vld [vmem:[%s206 + $0x80] sm:$0x1]
      %v256 = vld [vmem:[%s206 + $0x84] sm:$0xf]
      %v257 = vld [vmem:[%s206 + $0x88] sm:$0xf]
      %v258 = vld [vmem:[%s206 + $0x8c] sm:$0x1]
      %v259 = vld [vmem:[%s206 + $0x90] sm:$0xf]
      %v260 = vld [vmem:[%s206 + $0x94] sm:$0xf]
      %v261 = vld [vmem:[%s206 + $0x98] sm:$0x1]
      %v262 = vld [vmem:[%s206 + $0x9c] sm:$0xf]
      %v263 = vld [vmem:[%s206 + $0xa0] sm:$0xf]
      %v264 = vld [vmem:[%s206 + $0xa4] sm:$0x1]
      %v265 = vld [vmem:[%s206 + $0xa8] sm:$0xf]
      %v266 = vld [vmem:[%s206 + $0xac] sm:$0xf]
      %v267 = vld [vmem:[%s206 + $0xb0] sm:$0x1]
      %v268 = vld [vmem:[%s206 + $0xb4] sm:$0xf]
      %v269 = vld [vmem:[%s206 + $0xb8] sm:$0xf]
      %v270 = vld [vmem:[%s206 + $0xbc] sm:$0x1]
      %v271 = vld [vmem:[%s206 + $0xc0] sm:$0xf]
      %v272 = vld [vmem:[%s206 + $0xc4] sm:$0xf]
      %v273 = vld [vmem:[%s206 + $0xc8] sm:$0x1]
      %v274 = vld [vmem:[%s206 + $0xcc] sm:$0xf]
      %v275 = vld [vmem:[%s206 + $0xd0] sm:$0xf]
      %v276 = vld [vmem:[%s206 + $0xd4] sm:$0x1]
      %v277 = vld [vmem:[%s210] sm:$0x3]
      %vm278 = vsmask.f32 3328
      %vm279 = vsmask.f32 7440
      %vm280 = vmor %vm278, %vm279
      %v282 = vshrl.u32 %v223, 16
      %v284 = vrot.slane %v282, 4
      %v285 = vshll.u32 %v223, 16
      %v287 = vrot.slane %v285, 5
      %v288 = vor.u32 %v284, %v287
      %v289 = vrot.slane %v288, 4
      %v291 = vshll.u32 %v224, 16
      %v293 = vrot.slane %v291, 5
      %v294 = vsel %vm280, %v289, %v293
      %v295 = vshrl.u32 %v224, 16
      %v297 = vrot.slane %v295, 4
      %v298 = vor.u32 %v297, %v293
      %v299 = vrot.slane %v298, 4
      %v301 = vshll.u32 %v225, 16
      %v303 = vrot.slane %v301, 5
      %v304 = vsel %vm280, %v299, %v303
      %v306 = vshrl.u32 %v226, 16
      %v308 = vrot.slane %v306, 4
      %v309 = vshll.u32 %v226, 16
      %v311 = vrot.slane %v309, 5
      %v312 = vor.u32 %v308, %v311
      %v313 = vrot.slane %v312, 4
      %v315 = vshll.u32 %v227, 16
      %v317 = vrot.slane %v315, 5
      %v318 = vsel %vm280, %v313, %v317
      %v319 = vshrl.u32 %v227, 16
      %v321 = vrot.slane %v319, 4
      %v322 = vor.u32 %v321, %v317
      %v323 = vrot.slane %v322, 4
      %v325 = vshll.u32 %v228, 16
      %v327 = vrot.slane %v325, 5
      %v328 = vsel %vm280, %v323, %v327
      %v330 = vshrl.u32 %v229, 16
      %v332 = vrot.slane %v330, 4
      %v333 = vshll.u32 %v229, 16
      %v335 = vrot.slane %v333, 5
      %v336 = vor.u32 %v332, %v335
      %v337 = vrot.slane %v336, 4
      %v339 = vshll.u32 %v230, 16
      %v341 = vrot.slane %v339, 5
      %v342 = vsel %vm280, %v337, %v341
      %v343 = vshrl.u32 %v230, 16
      %v345 = vrot.slane %v343, 4
      %v346 = vor.u32 %v345, %v341
      %v347 = vrot.slane %v346, 4
      %v349 = vshll.u32 %v231, 16
      %v351 = vrot.slane %v349, 5
      %v352 = vsel %vm280, %v347, %v351
      %v354 = vshrl.u32 %v232, 16
      %v356 = vrot.slane %v354, 4
      %v357 = vshll.u32 %v232, 16
      %v359 = vrot.slane %v357, 5
      %v360 = vor.u32 %v356, %v359
      %v361 = vrot.slane %v360, 4
      %v363 = vshll.u32 %v233, 16
      %v365 = vrot.slane %v363, 5
      %v366 = vsel %vm280, %v361, %v365
      %v367 = vshrl.u32 %v233, 16
      %v369 = vrot.slane %v367, 4
      %v370 = vor.u32 %v369, %v365
      %v371 = vrot.slane %v370, 4
      %v373 = vshll.u32 %v234, 16
      %v375 = vrot.slane %v373, 5
      %v376 = vsel %vm280, %v371, %v375
      %v378 = vshrl.u32 %v235, 16
      %v380 = vrot.slane %v378, 4
      %v381 = vshll.u32 %v235, 16
      %v383 = vrot.slane %v381, 5
      %v384 = vor.u32 %v380, %v383
      %v385 = vrot.slane %v384, 4
      %v387 = vshll.u32 %v236, 16
      %v389 = vrot.slane %v387, 5
      %v390 = vsel %vm280, %v385, %v389
      %v391 = vshrl.u32 %v236, 16
      %v393 = vrot.slane %v391, 4
      %v394 = vor.u32 %v393, %v389
      %v395 = vrot.slane %v394, 4
      %v397 = vshll.u32 %v237, 16
      %v399 = vrot.slane %v397, 5
      %v400 = vsel %vm280, %v395, %v399
      %v402 = vshrl.u32 %v238, 16
      %v404 = vrot.slane %v402, 4
      %v405 = vshll.u32 %v238, 16
      %v407 = vrot.slane %v405, 5
      %v408 = vor.u32 %v404, %v407
      %v409 = vrot.slane %v408, 4
      %v411 = vshll.u32 %v239, 16
      %v413 = vrot.slane %v411, 5
      %v414 = vsel %vm280, %v409, %v413
      %v415 = vshrl.u32 %v239, 16
      %v417 = vrot.slane %v415, 4
      %v418 = vor.u32 %v417, %v413
      %v419 = vrot.slane %v418, 4
      %v421 = vshll.u32 %v240, 16
      %v423 = vrot.slane %v421, 5
      %v424 = vsel %vm280, %v419, %v423
      %v426 = vshrl.u32 %v241, 16
      %v428 = vrot.slane %v426, 4
      %v429 = vshll.u32 %v241, 16
      %v431 = vrot.slane %v429, 5
      %v432 = vor.u32 %v428, %v431
      %v433 = vrot.slane %v432, 4
      %v435 = vshll.u32 %v242, 16
      %v437 = vrot.slane %v435, 5
      %v438 = vsel %vm280, %v433, %v437
      %v439 = vshrl.u32 %v242, 16
      %v441 = vrot.slane %v439, 4
      %v442 = vor.u32 %v441, %v437
      %v443 = vrot.slane %v442, 4
      %v445 = vshll.u32 %v243, 16
      %v447 = vrot.slane %v445, 5
      %v448 = vsel %vm280, %v443, %v447
      %v450 = vshrl.u32 %v244, 16
      %v452 = vrot.slane %v450, 4
      %v453 = vshll.u32 %v244, 16
      %v455 = vrot.slane %v453, 5
      %v456 = vor.u32 %v452, %v455
      %v457 = vrot.slane %v456, 4
      %v459 = vshll.u32 %v245, 16
      %v461 = vrot.slane %v459, 5
      %v462 = vsel %vm280, %v457, %v461
      %v463 = vshrl.u32 %v245, 16
      %v465 = vrot.slane %v463, 4
      %v466 = vor.u32 %v465, %v461
      %v467 = vrot.slane %v466, 4
      %v469 = vshll.u32 %v246, 16
      %v471 = vrot.slane %v469, 5
      %v472 = vsel %vm280, %v467, %v471
      %v474 = vshrl.u32 %v247, 16
      %v476 = vrot.slane %v474, 4
      %v477 = vshll.u32 %v247, 16
      %v479 = vrot.slane %v477, 5
      %v480 = vor.u32 %v476, %v479
      %v481 = vrot.slane %v480, 4
      %v483 = vshll.u32 %v248, 16
      %v485 = vrot.slane %v483, 5
      %v486 = vsel %vm280, %v481, %v485
      %v487 = vshrl.u32 %v248, 16
      %v489 = vrot.slane %v487, 4
      %v490 = vor.u32 %v489, %v485
      %v491 = vrot.slane %v490, 4
      %v493 = vshll.u32 %v249, 16
      %v495 = vrot.slane %v493, 5
      %v496 = vsel %vm280, %v491, %v495
      %v498 = vshrl.u32 %v250, 16
      %v500 = vrot.slane %v498, 4
      %v501 = vshll.u32 %v250, 16
      %v503 = vrot.slane %v501, 5
      %v504 = vor.u32 %v500, %v503
      %v505 = vrot.slane %v504, 4
      %v507 = vshll.u32 %v251, 16
      %v509 = vrot.slane %v507, 5
      %v510 = vsel %vm280, %v505, %v509
      %v511 = vshrl.u32 %v251, 16
      %v513 = vrot.slane %v511, 4
      %v514 = vor.u32 %v513, %v509
      %v515 = vrot.slane %v514, 4
      %v517 = vshll.u32 %v252, 16
      %v519 = vrot.slane %v517, 5
      %v520 = vsel %vm280, %v515, %v519
      %v522 = vshrl.u32 %v253, 16
      %v524 = vrot.slane %v522, 4
      %v525 = vshll.u32 %v253, 16
      %v527 = vrot.slane %v525, 5
      %v528 = vor.u32 %v524, %v527
      %v529 = vrot.slane %v528, 4
      %v531 = vshll.u32 %v254, 16
      %v533 = vrot.slane %v531, 5
      %v534 = vsel %vm280, %v529, %v533
      %v535 = vshrl.u32 %v254, 16
      %v537 = vrot.slane %v535, 4
      %v538 = vor.u32 %v537, %v533
      %v539 = vrot.slane %v538, 4
      %v541 = vshll.u32 %v255, 16
      %v543 = vrot.slane %v541, 5
      %v544 = vsel %vm280, %v539, %v543
      %v546 = vshrl.u32 %v256, 16
      %v548 = vrot.slane %v546, 4
      %v549 = vshll.u32 %v256, 16
      %v551 = vrot.slane %v549, 5
      %v552 = vor.u32 %v548, %v551
      %v553 = vrot.slane %v552, 4
      %v555 = vshll.u32 %v257, 16
      %v557 = vrot.slane %v555, 5
      %v558 = vsel %vm280, %v553, %v557
      %v559 = vshrl.u32 %v257, 16
      %v561 = vrot.slane %v559, 4
      %v562 = vor.u32 %v561, %v557
      %v563 = vrot.slane %v562, 4
      %v565 = vshll.u32 %v258, 16
      %v567 = vrot.slane %v565, 5
      %v568 = vsel %vm280, %v563, %v567
      %v570 = vshrl.u32 %v259, 16
      %v572 = vrot.slane %v570, 4
      %v573 = vshll.u32 %v259, 16
      %v575 = vrot.slane %v573, 5
      %v576 = vor.u32 %v572, %v575
      %v577 = vrot.slane %v576, 4
      %v579 = vshll.u32 %v260, 16
      %v581 = vrot.slane %v579, 5
      %v582 = vsel %vm280, %v577, %v581
      %v583 = vshrl.u32 %v260, 16
      %v585 = vrot.slane %v583, 4
      %v586 = vor.u32 %v585, %v581
      %v587 = vrot.slane %v586, 4
      %v589 = vshll.u32 %v261, 16
      %v591 = vrot.slane %v589, 5
      %v592 = vsel %vm280, %v587, %v591
      %v594 = vshrl.u32 %v262, 16
      %v596 = vrot.slane %v594, 4
      %v597 = vshll.u32 %v262, 16
      %v599 = vrot.slane %v597, 5
      %v600 = vor.u32 %v596, %v599
      %v601 = vrot.slane %v600, 4
      %v603 = vshll.u32 %v263, 16
      %v605 = vrot.slane %v603, 5
      %v606 = vsel %vm280, %v601, %v605
      %v607 = vshrl.u32 %v263, 16
      %v609 = vrot.slane %v607, 4
      %v610 = vor.u32 %v609, %v605
      %v611 = vrot.slane %v610, 4
      %v613 = vshll.u32 %v264, 16
      %v615 = vrot.slane %v613, 5
      %v616 = vsel %vm280, %v611, %v615
      %v618 = vshrl.u32 %v265, 16
      %v620 = vrot.slane %v618, 4
      %v621 = vshll.u32 %v265, 16
      %v623 = vrot.slane %v621, 5
      %v624 = vor.u32 %v620, %v623
      %v625 = vrot.slane %v624, 4
      %v627 = vshll.u32 %v266, 16
      %v629 = vrot.slane %v627, 5
      %v630 = vsel %vm280, %v625, %v629
      %v631 = vshrl.u32 %v266, 16
      %v633 = vrot.slane %v631, 4
      %v634 = vor.u32 %v633, %v629
      %v635 = vrot.slane %v634, 4
      %v637 = vshll.u32 %v267, 16
      %v639 = vrot.slane %v637, 5
      %v640 = vsel %vm280, %v635, %v639
      %v642 = vshrl.u32 %v268, 16
      %v644 = vrot.slane %v642, 4
      %v645 = vshll.u32 %v268, 16
      %v647 = vrot.slane %v645, 5
      %v648 = vor.u32 %v644, %v647
      %v649 = vrot.slane %v648, 4
      %v651 = vshll.u32 %v269, 16
      %v653 = vrot.slane %v651, 5
      %v654 = vsel %vm280, %v649, %v653
      %v655 = vshrl.u32 %v269, 16
      %v657 = vrot.slane %v655, 4
      %v658 = vor.u32 %v657, %v653
      %v659 = vrot.slane %v658, 4
      %v661 = vshll.u32 %v270, 16
      %v663 = vrot.slane %v661, 5
      %v664 = vsel %vm280, %v659, %v663
      %s665 = scalar_lea.vmem %s210, 2
      %v666 = vld [vmem:[%s665] sm:$0x3]
      %v667 = vunpack.c.l.b16 %v294
      %v668 = vunpack.c.l.b16 %v304
      %v669 = vunpack.c.l.b16 %v318
      %v670 = vunpack.c.l.b16 %v328
      %v671 = vunpack.c.l.b16 %v342
      %v672 = vunpack.c.l.b16 %v352
      %v673 = vunpack.c.l.b16 %v366
      %v674 = vunpack.c.l.b16 %v376
      %v675 = vunpack.c.l.b16 %v390
      %v676 = vunpack.c.l.b16 %v400
      %v677 = vunpack.c.l.b16 %v414
      %v678 = vunpack.c.l.b16 %v424
      %v679 = vunpack.c.l.b16 %v438
      %v680 = vunpack.c.l.b16 %v448
      %v681 = vunpack.c.l.b16 %v462
      %v682 = vunpack.c.l.b16 %v472
      %v683 = vunpack.c.l.b16 %v486
      %v684 = vunpack.c.l.b16 %v496
      %v685 = vunpack.c.l.b16 %v510
      %v686 = vunpack.c.l.b16 %v520
      %v687 = vunpack.c.l.b16 %v534
      %v688 = vunpack.c.l.b16 %v544
      %v689 = vunpack.c.l.b16 %v558
      %v690 = vunpack.c.l.b16 %v568
      %v691 = vunpack.c.l.b16 %v582
      %v692 = vunpack.c.l.b16 %v592
      %v693 = vunpack.c.l.b16 %v606
      %v694 = vunpack.c.l.b16 %v616
      %v695 = vunpack.c.l.b16 %v630
      %v696 = vunpack.c.l.b16 %v640
      %v697 = vunpack.c.l.b16 %v654
      %v698 = vunpack.c.l.b16 %v664
      %v699 = vpack.c.b16 %v668, %v667
      %v700 = vpack.c.b16 %v670, %v669
      %v701 = vpack.c.b16 %v672, %v671
      %v702 = vpack.c.b16 %v674, %v673
      %v703 = vpack.c.b16 %v676, %v675
      %v704 = vpack.c.b16 %v678, %v677
      %v705 = vpack.c.b16 %v680, %v679
      %v706 = vpack.c.b16 %v682, %v681
      %v707 = vpack.c.b16 %v684, %v683
      %v708 = vpack.c.b16 %v686, %v685
      %v709 = vpack.c.b16 %v688, %v687
      %v710 = vpack.c.b16 %v690, %v689
      %v711 = vpack.c.b16 %v692, %v691
      %v712 = vpack.c.b16 %v694, %v693
      %v713 = vpack.c.b16 %v696, %v695
      %v714 = vpack.c.b16 %v698, %v697
      %vm715 = vcmask 31744
      %v717 = vsel %vm715, %v699, 0
      %v720 = vsel %vm715, %v700, 0
      %v723 = vsel %vm715, %v701, 0
      %v726 = vsel %vm715, %v702, 0
      %v729 = vsel %vm715, %v703, 0
      %v732 = vsel %vm715, %v704, 0
      %v735 = vsel %vm715, %v705, 0
      %v738 = vsel %vm715, %v706, 0
      %v741 = vsel %vm715, %v707, 0
      %v744 = vsel %vm715, %v708, 0
      %v747 = vsel %vm715, %v709, 0
      %v750 = vsel %vm715, %v710, 0
      %v753 = vsel %vm715, %v711, 0
      %v756 = vsel %vm715, %v712, 0
      %v759 = vsel %vm715, %v713, 0
      %v762 = vsel %vm715, %v714, 0
      %vm764 = vcmask 1041408
      %v766 = vsel %vm764, %v666, 0
      %768 = vmatprep.subr.bf16.mxu0 0
      %769 = vmatpush1.bf16.msra.mxu0 0
      %770 = vmatprep.subr.bf16.mxu0 0
      %771 = vmatpush1.bf16.msra.mxu0 0
      %772 = vmatprep.subr.bf16.mxu0 0
      %773 = vmatpush1.bf16.msra.mxu0 0
      %774 = vmatprep.subr.bf16.mxu0 0
      %775 = vmatpush1.bf16.msra.mxu0 0
      %776 = vmatprep.subr.bf16.mxu0 0
      %777 = vmatpush1.bf16.msra.mxu0 0
      %778 = vmatprep.subr.bf16.mxu0 0
      %779 = vmatpush1.bf16.msra.mxu0 0
      %780 = vmatprep.subr.bf16.mxu0 0
      %781 = vmatpush1.bf16.msra.mxu0 0
      %782 = vmatprep.subr.bf16.mxu0 0
      %783 = vmatpush1.bf16.msra.mxu0 %v766
      %784 = vmatprep.subr.bf16.mxu0 0
      %785 = vmatpush2.bf16.msra.mxu0 0
      %786 = vmatprep.subr.bf16.mxu0 0
      %787 = vmatpush2.bf16.msra.mxu0 0
      %788 = vmatprep.subr.bf16.mxu0 0
      %789 = vmatpush2.bf16.msra.mxu0 0
      %790 = vmatprep.subr.bf16.mxu0 0
      %791 = vmatpush2.bf16.msra.mxu0 0
      %792 = vmatprep.subr.bf16.mxu0 0
      %793 = vmatpush2.bf16.msra.mxu0 0
      %794 = vmatprep.subr.bf16.mxu0 0
      %795 = vmatpush2.bf16.msra.mxu0 0
      %796 = vmatprep.subr.bf16.mxu0 0
      %797 = vmatpush2.bf16.msra.mxu0 0
      %798 = vmatprep.subr.bf16.mxu0 0
      %799 = vmatpush2.bf16.msra.mxu0 0
      %800 = vmatprep.mubr.bf16.mxu0 0
      %801 = vmatmul.mubr.bf16.gmra.mxu0 %v717
      %v802 = vpop.f32.mrf.mxu0
      %v803 = vadd.f32 0.0, %v802
      %v804 = vpop.f32.mrf.mxu0
      %v805 = vpop.f32.mrf.mxu0
      %v806 = vadd.f32 0.0, %v805
      %v807 = vpop.f32.mrf.mxu0
      %808 = vmatprep.mubr.bf16.mxu0 0
      %809 = vmatmul.mubr.bf16.gmra.mxu0 %v720
      %v810 = vpop.f32.mrf.mxu0
      %v811 = vadd.f32 0.0, %v810
      %v812 = vpop.f32.mrf.mxu0
      %v813 = vpop.f32.mrf.mxu0
      %v814 = vadd.f32 0.0, %v813
      %v815 = vpop.f32.mrf.mxu0
      %816 = vmatprep.mubr.bf16.mxu0 0
      %817 = vmatmul.mubr.bf16.gmra.mxu0 %v723
      %v818 = vpop.f32.mrf.mxu0
      %v819 = vadd.f32 0.0, %v818
      %v820 = vpop.f32.mrf.mxu0
      %v821 = vpop.f32.mrf.mxu0
      %v822 = vadd.f32 0.0, %v821
      %v823 = vpop.f32.mrf.mxu0
      %824 = vmatprep.mubr.bf16.mxu0 0
      %825 = vmatmul.mubr.bf16.gmra.mxu0 %v726
      %v826 = vpop.f32.mrf.mxu0
      %v827 = vadd.f32 0.0, %v826
      %v828 = vpop.f32.mrf.mxu0
      %v829 = vpop.f32.mrf.mxu0
      %v830 = vadd.f32 0.0, %v829
      %v831 = vpop.f32.mrf.mxu0
      %832 = vmatprep.mubr.bf16.mxu0 0
      %833 = vmatmul.mubr.bf16.gmra.mxu0 %v729
      %v834 = vpop.f32.mrf.mxu0
      %v835 = vadd.f32 0.0, %v834
      %v836 = vpop.f32.mrf.mxu0
      %v837 = vpop.f32.mrf.mxu0
      %v838 = vadd.f32 0.0, %v837
      %v839 = vpop.f32.mrf.mxu0
      %840 = vmatprep.mubr.bf16.mxu0 0
      %841 = vmatmul.mubr.bf16.gmra.mxu0 %v732
      %v842 = vpop.f32.mrf.mxu0
      %v843 = vadd.f32 0.0, %v842
      %v844 = vpop.f32.mrf.mxu0
      %v845 = vpop.f32.mrf.mxu0
      %v846 = vadd.f32 0.0, %v845
      %v847 = vpop.f32.mrf.mxu0
      %848 = vmatprep.mubr.bf16.mxu0 0
      %849 = vmatmul.mubr.bf16.gmra.mxu0 %v735
      %v850 = vpop.f32.mrf.mxu0
      %v851 = vadd.f32 0.0, %v850
      %v852 = vpop.f32.mrf.mxu0
      %v853 = vpop.f32.mrf.mxu0
      %v854 = vadd.f32 0.0, %v853
      %v855 = vpop.f32.mrf.mxu0
      %856 = vmatprep.mubr.bf16.mxu0 0
      %857 = vmatmul.mubr.bf16.gmra.mxu0 %v738
      %v858 = vpop.f32.mrf.mxu0
      %v859 = vadd.f32 0.0, %v858
      %v860 = vpop.f32.mrf.mxu0
      %v861 = vpop.f32.mrf.mxu0
      %v862 = vadd.f32 0.0, %v861
      %v863 = vpop.f32.mrf.mxu0
      %864 = vmatprep.mubr.bf16.mxu0 0
      %865 = vmatmul.mubr.bf16.gmra.mxu0 %v741
      %v866 = vpop.f32.mrf.mxu0
      %v867 = vadd.f32 0.0, %v866
      %v868 = vpop.f32.mrf.mxu0
      %v869 = vpop.f32.mrf.mxu0
      %v870 = vadd.f32 0.0, %v869
      %v871 = vpop.f32.mrf.mxu0
      %872 = vmatprep.mubr.bf16.mxu0 0
      %873 = vmatmul.mubr.bf16.gmra.mxu0 %v744
      %v874 = vpop.f32.mrf.mxu0
      %v875 = vadd.f32 0.0, %v874
      %v876 = vpop.f32.mrf.mxu0
      %v877 = vpop.f32.mrf.mxu0
      %v878 = vadd.f32 0.0, %v877
      %v879 = vpop.f32.mrf.mxu0
      %880 = vmatprep.mubr.bf16.mxu0 0
      %881 = vmatmul.mubr.bf16.gmra.mxu0 %v747
      %v882 = vpop.f32.mrf.mxu0
      %v883 = vadd.f32 0.0, %v882
      %v884 = vpop.f32.mrf.mxu0
      %v885 = vpop.f32.mrf.mxu0
      %v886 = vadd.f32 0.0, %v885
      %v887 = vpop.f32.mrf.mxu0
      %888 = vmatprep.mubr.bf16.mxu0 0
      %889 = vmatmul.mubr.bf16.gmra.mxu0 %v750
      %v890 = vpop.f32.mrf.mxu0
      %v891 = vadd.f32 0.0, %v890
      %v892 = vpop.f32.mrf.mxu0
      %v893 = vpop.f32.mrf.mxu0
      %v894 = vadd.f32 0.0, %v893
      %v895 = vpop.f32.mrf.mxu0
      %896 = vmatprep.mubr.bf16.mxu0 0
      %897 = vmatmul.mubr.bf16.gmra.mxu0 %v753
      %v898 = vpop.f32.mrf.mxu0
      %v899 = vadd.f32 0.0, %v898
      %v900 = vpop.f32.mrf.mxu0
      %v901 = vpop.f32.mrf.mxu0
      %v902 = vadd.f32 0.0, %v901
      %v903 = vpop.f32.mrf.mxu0
      %904 = vmatprep.mubr.bf16.mxu0 0
      %905 = vmatmul.mubr.bf16.gmra.mxu0 %v756
      %v906 = vpop.f32.mrf.mxu0
      %v907 = vadd.f32 0.0, %v906
      %v908 = vpop.f32.mrf.mxu0
      %v909 = vpop.f32.mrf.mxu0
      %v910 = vadd.f32 0.0, %v909
      %v911 = vpop.f32.mrf.mxu0
      %912 = vmatprep.mubr.bf16.mxu0 0
      %913 = vmatmul.mubr.bf16.gmra.mxu0 %v759
      %v914 = vpop.f32.mrf.mxu0
      %v915 = vadd.f32 0.0, %v914
      %v916 = vpop.f32.mrf.mxu0
      %v917 = vpop.f32.mrf.mxu0
      %v918 = vadd.f32 0.0, %v917
      %v919 = vpop.f32.mrf.mxu0
      %920 = vmatprep.mubr.bf16.mxu0 0
      %921 = vmatmul.mubr.bf16.gmra.mxu0 %v762
      %v922 = vpop.f32.mrf.mxu0
      %v923 = vadd.f32 0.0, %v922
      %v924 = vpop.f32.mrf.mxu0
      %v925 = vpop.f32.mrf.mxu0
      %v926 = vadd.f32 0.0, %v925
      %v927 = vpop.f32.mrf.mxu0
      %928 = vdwg.mxu0
      %v961 = vunpack.c.l.b16 %v223
      %v962 = vunpack.c.l.b16 %v224
      %v963 = vunpack.c.l.b16 %v226
      %v964 = vunpack.c.l.b16 %v227
      %v965 = vunpack.c.l.b16 %v229
      %v966 = vunpack.c.l.b16 %v230
      %v967 = vunpack.c.l.b16 %v232
      %v968 = vunpack.c.l.b16 %v233
      %v969 = vunpack.c.l.b16 %v235
      %v970 = vunpack.c.l.b16 %v236
      %v971 = vunpack.c.l.b16 %v238
      %v972 = vunpack.c.l.b16 %v239
      %v973 = vunpack.c.l.b16 %v241
      %v974 = vunpack.c.l.b16 %v242
      %v975 = vunpack.c.l.b16 %v244
      %v976 = vunpack.c.l.b16 %v245
      %v977 = vunpack.c.l.b16 %v247
      %v978 = vunpack.c.l.b16 %v248
      %v979 = vunpack.c.l.b16 %v250
      %v980 = vunpack.c.l.b16 %v251
      %v981 = vunpack.c.l.b16 %v253
      %v982 = vunpack.c.l.b16 %v254
      %v983 = vunpack.c.l.b16 %v256
      %v984 = vunpack.c.l.b16 %v257
      %v985 = vunpack.c.l.b16 %v259
      %v986 = vunpack.c.l.b16 %v260
      %v987 = vunpack.c.l.b16 %v262
      %v988 = vunpack.c.l.b16 %v263
      %v989 = vunpack.c.l.b16 %v265
      %v990 = vunpack.c.l.b16 %v266
      %v991 = vunpack.c.l.b16 %v268
      %v992 = vunpack.c.l.b16 %v269
      %v993 = vpack.c.b16 %v962, %v961
      %v994 = vpack.c.b16 %v964, %v963
      %v995 = vpack.c.b16 %v966, %v965
      %v996 = vpack.c.b16 %v968, %v967
      %v997 = vpack.c.b16 %v970, %v969
      %v998 = vpack.c.b16 %v972, %v971
      %v999 = vpack.c.b16 %v974, %v973
      %v1000 = vpack.c.b16 %v976, %v975
      %v1001 = vpack.c.b16 %v978, %v977
      %v1002 = vpack.c.b16 %v980, %v979
      %v1003 = vpack.c.b16 %v982, %v981
      %v1004 = vpack.c.b16 %v984, %v983
      %v1005 = vpack.c.b16 %v986, %v985
      %v1006 = vpack.c.b16 %v988, %v987
      %v1007 = vpack.c.b16 %v990, %v989
      %v1008 = vpack.c.b16 %v992, %v991
      %v1010 = vsel %vm715, %v993, 0
      %v1013 = vsel %vm715, %v994, 0
      %v1016 = vsel %vm715, %v995, 0
      %v1019 = vsel %vm715, %v996, 0
      %v1022 = vsel %vm715, %v997, 0
      %v1025 = vsel %vm715, %v998, 0
      %v1028 = vsel %vm715, %v999, 0
      %v1031 = vsel %vm715, %v1000, 0
      %v1034 = vsel %vm715, %v1001, 0
      %v1037 = vsel %vm715, %v1002, 0
      %v1040 = vsel %vm715, %v1003, 0
      %v1043 = vsel %vm715, %v1004, 0
      %v1046 = vsel %vm715, %v1005, 0
      %v1049 = vsel %vm715, %v1006, 0
      %v1052 = vsel %vm715, %v1007, 0
      %v1055 = vsel %vm715, %v1008, 0
      %v1058 = vsel %vm764, %v277, 0
      %1060 = vmatprep.subr.bf16.mxu0 0
      %1061 = vmatpush1.bf16.msra.mxu0 0
      %1062 = vmatprep.subr.bf16.mxu0 0
      %1063 = vmatpush1.bf16.msra.mxu0 0
      %1064 = vmatprep.subr.bf16.mxu0 0
      %1065 = vmatpush1.bf16.msra.mxu0 0
      %1066 = vmatprep.subr.bf16.mxu0 0
      %1067 = vmatpush1.bf16.msra.mxu0 0
      %1068 = vmatprep.subr.bf16.mxu0 0
      %1069 = vmatpush1.bf16.msra.mxu0 0
      %1070 = vmatprep.subr.bf16.mxu0 0
      %1071 = vmatpush1.bf16.msra.mxu0 0
      %1072 = vmatprep.subr.bf16.mxu0 0
      %1073 = vmatpush1.bf16.msra.mxu0 0
      %1074 = vmatprep.subr.bf16.mxu0 0
      %1075 = vmatpush1.bf16.msra.mxu0 %v1058
      %1076 = vmatprep.subr.bf16.mxu0 0
      %1077 = vmatpush2.bf16.msra.mxu0 0
      %1078 = vmatprep.subr.bf16.mxu0 0
      %1079 = vmatpush2.bf16.msra.mxu0 0
      %1080 = vmatprep.subr.bf16.mxu0 0
      %1081 = vmatpush2.bf16.msra.mxu0 0
      %1082 = vmatprep.subr.bf16.mxu0 0
      %1083 = vmatpush2.bf16.msra.mxu0 0
      %1084 = vmatprep.subr.bf16.mxu0 0
      %1085 = vmatpush2.bf16.msra.mxu0 0
      %1086 = vmatprep.subr.bf16.mxu0 0
      %1087 = vmatpush2.bf16.msra.mxu0 0
      %1088 = vmatprep.subr.bf16.mxu0 0
      %1089 = vmatpush2.bf16.msra.mxu0 0
      %1090 = vmatprep.subr.bf16.mxu0 0
      %1091 = vmatpush2.bf16.msra.mxu0 0
      %1092 = vmatprep.mubr.bf16.mxu0 0
      %1093 = vmatmul.mubr.bf16.gmra.mxu0 %v1010
      %v1094 = vpop.f32.mrf.mxu0
      %v1095 = vadd.f32 %v803, %v1094
      %v1096 = vpop.f32.mrf.mxu0
      %v1097 = vpop.f32.mrf.mxu0
      %v1098 = vadd.f32 %v806, %v1097
      %v1099 = vpop.f32.mrf.mxu0
      %1100 = vmatprep.mubr.bf16.mxu0 0
      %1101 = vmatmul.mubr.bf16.gmra.mxu0 %v1013
      %v1102 = vpop.f32.mrf.mxu0
      %v1103 = vadd.f32 %v811, %v1102
      %v1104 = vpop.f32.mrf.mxu0
      %v1105 = vpop.f32.mrf.mxu0
      %v1106 = vadd.f32 %v814, %v1105
      %v1107 = vpop.f32.mrf.mxu0
      %1108 = vmatprep.mubr.bf16.mxu0 0
      %1109 = vmatmul.mubr.bf16.gmra.mxu0 %v1016
      %v1110 = vpop.f32.mrf.mxu0
      %v1111 = vadd.f32 %v819, %v1110
      %v1112 = vpop.f32.mrf.mxu0
      %v1113 = vpop.f32.mrf.mxu0
      %v1114 = vadd.f32 %v822, %v1113
      %v1115 = vpop.f32.mrf.mxu0
      %1116 = vmatprep.mubr.bf16.mxu0 0
      %1117 = vmatmul.mubr.bf16.gmra.mxu0 %v1019
      %v1118 = vpop.f32.mrf.mxu0
      %v1119 = vadd.f32 %v827, %v1118
      %v1120 = vpop.f32.mrf.mxu0
      %v1121 = vpop.f32.mrf.mxu0
      %v1122 = vadd.f32 %v830, %v1121
      %v1123 = vpop.f32.mrf.mxu0
      %1124 = vmatprep.mubr.bf16.mxu0 0
      %1125 = vmatmul.mubr.bf16.gmra.mxu0 %v1022
      %v1126 = vpop.f32.mrf.mxu0
      %v1127 = vadd.f32 %v835, %v1126
      %v1128 = vpop.f32.mrf.mxu0
      %v1129 = vpop.f32.mrf.mxu0
      %v1130 = vadd.f32 %v838, %v1129
      %v1131 = vpop.f32.mrf.mxu0
      %1132 = vmatprep.mubr.bf16.mxu0 0
      %1133 = vmatmul.mubr.bf16.gmra.mxu0 %v1025
      %v1134 = vpop.f32.mrf.mxu0
      %v1135 = vadd.f32 %v843, %v1134
      %v1136 = vpop.f32.mrf.mxu0
      %v1137 = vpop.f32.mrf.mxu0
      %v1138 = vadd.f32 %v846, %v1137
      %v1139 = vpop.f32.mrf.mxu0
      %1140 = vmatprep.mubr.bf16.mxu0 0
      %1141 = vmatmul.mubr.bf16.gmra.mxu0 %v1028
      %v1142 = vpop.f32.mrf.mxu0
      %v1143 = vadd.f32 %v851, %v1142
      %v1144 = vpop.f32.mrf.mxu0
      %v1145 = vpop.f32.mrf.mxu0
      %v1146 = vadd.f32 %v854, %v1145
      %v1147 = vpop.f32.mrf.mxu0
      %1148 = vmatprep.mubr.bf16.mxu0 0
      %1149 = vmatmul.mubr.bf16.gmra.mxu0 %v1031
      %v1150 = vpop.f32.mrf.mxu0
      %v1151 = vadd.f32 %v859, %v1150
      %v1152 = vpop.f32.mrf.mxu0
      %v1153 = vpop.f32.mrf.mxu0
      %v1154 = vadd.f32 %v862, %v1153
      %v1155 = vpop.f32.mrf.mxu0
      %1156 = vmatprep.mubr.bf16.mxu0 0
      %1157 = vmatmul.mubr.bf16.gmra.mxu0 %v1034
      %v1158 = vpop.f32.mrf.mxu0
      %v1159 = vadd.f32 %v867, %v1158
      %v1160 = vpop.f32.mrf.mxu0
      %v1161 = vpop.f32.mrf.mxu0
      %v1162 = vadd.f32 %v870, %v1161
      %v1163 = vpop.f32.mrf.mxu0
      %1164 = vmatprep.mubr.bf16.mxu0 0
      %1165 = vmatmul.mubr.bf16.gmra.mxu0 %v1037
      %v1166 = vpop.f32.mrf.mxu0
      %v1167 = vadd.f32 %v875, %v1166
      %v1168 = vpop.f32.mrf.mxu0
      %v1169 = vpop.f32.mrf.mxu0
      %v1170 = vadd.f32 %v878, %v1169
      %v1171 = vpop.f32.mrf.mxu0
      %1172 = vmatprep.mubr.bf16.mxu0 0
      %1173 = vmatmul.mubr.bf16.gmra.mxu0 %v1040
      %v1174 = vpop.f32.mrf.mxu0
      %v1175 = vadd.f32 %v883, %v1174
      %v1176 = vpop.f32.mrf.mxu0
      %v1177 = vpop.f32.mrf.mxu0
      %v1178 = vadd.f32 %v886, %v1177
      %v1179 = vpop.f32.mrf.mxu0
      %1180 = vmatprep.mubr.bf16.mxu0 0
      %1181 = vmatmul.mubr.bf16.gmra.mxu0 %v1043
      %v1182 = vpop.f32.mrf.mxu0
      %v1183 = vadd.f32 %v891, %v1182
      %v1184 = vpop.f32.mrf.mxu0
      %v1185 = vpop.f32.mrf.mxu0
      %v1186 = vadd.f32 %v894, %v1185
      %v1187 = vpop.f32.mrf.mxu0
      %1188 = vmatprep.mubr.bf16.mxu0 0
      %1189 = vmatmul.mubr.bf16.gmra.mxu0 %v1046
      %v1190 = vpop.f32.mrf.mxu0
      %v1191 = vadd.f32 %v899, %v1190
      %v1192 = vpop.f32.mrf.mxu0
      %v1193 = vpop.f32.mrf.mxu0
      %v1194 = vadd.f32 %v902, %v1193
      %v1195 = vpop.f32.mrf.mxu0
      %1196 = vmatprep.mubr.bf16.mxu0 0
      %1197 = vmatmul.mubr.bf16.gmra.mxu0 %v1049
      %v1198 = vpop.f32.mrf.mxu0
      %v1199 = vadd.f32 %v907, %v1198
      %v1200 = vpop.f32.mrf.mxu0
      %v1201 = vpop.f32.mrf.mxu0
      %v1202 = vadd.f32 %v910, %v1201
      %v1203 = vpop.f32.mrf.mxu0
      %1204 = vmatprep.mubr.bf16.mxu0 0
      %1205 = vmatmul.mubr.bf16.gmra.mxu0 %v1052
      %v1206 = vpop.f32.mrf.mxu0
      %v1207 = vadd.f32 %v915, %v1206
      %v1208 = vpop.f32.mrf.mxu0
      %v1209 = vpop.f32.mrf.mxu0
      %v1210 = vadd.f32 %v918, %v1209
      %v1211 = vpop.f32.mrf.mxu0
      %1212 = vmatprep.mubr.bf16.mxu0 0
      %1213 = vmatmul.mubr.bf16.gmra.mxu0 %v1055
      %v1214 = vpop.f32.mrf.mxu0
      %v1215 = vadd.f32 %v923, %v1214
      %v1216 = vpop.f32.mrf.mxu0
      %v1217 = vpop.f32.mrf.mxu0
      %v1218 = vadd.f32 %v926, %v1217
      %v1219 = vpop.f32.mrf.mxu0
      %1220 = vdwg.mxu0
      %vm1237 = vcmask 1042432
      %vm1238 = vcmask 1046532
      %vm1239 = vmor %vm1237, %vm1238
      %v1240 = vrot.slane %v223, 5
      %v1241 = vrot.slane %v1240, 4
      %v1242 = vrot.slane %v224, 5
      %v1243 = vsel %vm1239, %v1241, %v1242
      %v1244 = vrot.slane %v1242, 4
      %v1245 = vrot.slane %v225, 5
      %v1246 = vsel %vm1239, %v1244, %v1245
      %v1247 = vrot.slane %v226, 5
      %v1248 = vrot.slane %v1247, 4
      %v1249 = vrot.slane %v227, 5
      %v1250 = vsel %vm1239, %v1248, %v1249
      %v1251 = vrot.slane %v1249, 4
      %v1252 = vrot.slane %v228, 5
      %v1253 = vsel %vm1239, %v1251, %v1252
      %v1254 = vrot.slane %v229, 5
      %v1255 = vrot.slane %v1254, 4
      %v1256 = vrot.slane %v230, 5
      %v1257 = vsel %vm1239, %v1255, %v1256
      %v1258 = vrot.slane %v1256, 4
      %v1259 = vrot.slane %v231, 5
      %v1260 = vsel %vm1239, %v1258, %v1259
      %v1261 = vrot.slane %v232, 5
      %v1262 = vrot.slane %v1261, 4
      %v1263 = vrot.slane %v233, 5
      %v1264 = vsel %vm1239, %v1262, %v1263
      %v1265 = vrot.slane %v1263, 4
      %v1266 = vrot.slane %v234, 5
      %v1267 = vsel %vm1239, %v1265, %v1266
      %v1268 = vrot.slane %v235, 5
      %v1269 = vrot.slane %v1268, 4
      %v1270 = vrot.slane %v236, 5
      %v1271 = vsel %vm1239, %v1269, %v1270
      %v1272 = vrot.slane %v1270, 4
      %v1273 = vrot.slane %v237, 5
      %v1274 = vsel %vm1239, %v1272, %v1273
      %v1275 = vrot.slane %v238, 5
      %v1276 = vrot.slane %v1275, 4
      %v1277 = vrot.slane %v239, 5
      %v1278 = vsel %vm1239, %v1276, %v1277
      %v1279 = vrot.slane %v1277, 4
      %v1280 = vrot.slane %v240, 5
      %v1281 = vsel %vm1239, %v1279, %v1280
      %v1282 = vrot.slane %v241, 5
      %v1283 = vrot.slane %v1282, 4
      %v1284 = vrot.slane %v242, 5
      %v1285 = vsel %vm1239, %v1283, %v1284
      %v1286 = vrot.slane %v1284, 4
      %v1287 = vrot.slane %v243, 5
      %v1288 = vsel %vm1239, %v1286, %v1287
      %v1289 = vrot.slane %v244, 5
      %v1290 = vrot.slane %v1289, 4
      %v1291 = vrot.slane %v245, 5
      %v1292 = vsel %vm1239, %v1290, %v1291
      %v1293 = vrot.slane %v1291, 4
      %v1294 = vrot.slane %v246, 5
      %v1295 = vsel %vm1239, %v1293, %v1294
      %v1296 = vrot.slane %v247, 5
      %v1297 = vrot.slane %v1296, 4
      %v1298 = vrot.slane %v248, 5
      %v1299 = vsel %vm1239, %v1297, %v1298
      %v1300 = vrot.slane %v1298, 4
      %v1301 = vrot.slane %v249, 5
      %v1302 = vsel %vm1239, %v1300, %v1301
      %v1303 = vrot.slane %v250, 5
      %v1304 = vrot.slane %v1303, 4
      %v1305 = vrot.slane %v251, 5
      %v1306 = vsel %vm1239, %v1304, %v1305
      %v1307 = vrot.slane %v1305, 4
      %v1308 = vrot.slane %v252, 5
      %v1309 = vsel %vm1239, %v1307, %v1308
      %v1310 = vrot.slane %v253, 5
      %v1311 = vrot.slane %v1310, 4
      %v1312 = vrot.slane %v254, 5
      %v1313 = vsel %vm1239, %v1311, %v1312
      %v1314 = vrot.slane %v1312, 4
      %v1315 = vrot.slane %v255, 5
      %v1316 = vsel %vm1239, %v1314, %v1315
      %v1317 = vrot.slane %v256, 5
      %v1318 = vrot.slane %v1317, 4
      %v1319 = vrot.slane %v257, 5
      %v1320 = vsel %vm1239, %v1318, %v1319
      %v1321 = vrot.slane %v1319, 4
      %v1322 = vrot.slane %v258, 5
      %v1323 = vsel %vm1239, %v1321, %v1322
      %v1324 = vrot.slane %v259, 5
      %v1325 = vrot.slane %v1324, 4
      %v1326 = vrot.slane %v260, 5
      %v1327 = vsel %vm1239, %v1325, %v1326
      %v1328 = vrot.slane %v1326, 4
      %v1329 = vrot.slane %v261, 5
      %v1330 = vsel %vm1239, %v1328, %v1329
      %v1331 = vrot.slane %v262, 5
      %v1332 = vrot.slane %v1331, 4
      %v1333 = vrot.slane %v263, 5
      %v1334 = vsel %vm1239, %v1332, %v1333
      %v1335 = vrot.slane %v1333, 4
      %v1336 = vrot.slane %v264, 5
      %v1337 = vsel %vm1239, %v1335, %v1336
      %v1338 = vrot.slane %v265, 5
      %v1339 = vrot.slane %v1338, 4
      %v1340 = vrot.slane %v266, 5
      %v1341 = vsel %vm1239, %v1339, %v1340
      %v1342 = vrot.slane %v1340, 4
      %v1343 = vrot.slane %v267, 5
      %v1344 = vsel %vm1239, %v1342, %v1343
      %v1345 = vrot.slane %v268, 5
      %v1346 = vrot.slane %v1345, 4
      %v1347 = vrot.slane %v269, 5
      %v1348 = vsel %vm1239, %v1346, %v1347
      %v1349 = vrot.slane %v1347, 4
      %v1350 = vrot.slane %v270, 5
      %v1351 = vsel %vm1239, %v1349, %v1350
      %s1352 = scalar_lea.vmem %s210, 4
      %v1353 = vld [vmem:[%s1352] sm:$0x3]
      %v1354 = vunpack.c.l.b16 %v1243
      %v1355 = vunpack.c.l.b16 %v1246
      %v1356 = vunpack.c.l.b16 %v1250
      %v1357 = vunpack.c.l.b16 %v1253
      %v1358 = vunpack.c.l.b16 %v1257
      %v1359 = vunpack.c.l.b16 %v1260
      %v1360 = vunpack.c.l.b16 %v1264
      %v1361 = vunpack.c.l.b16 %v1267
      %v1362 = vunpack.c.l.b16 %v1271
      %v1363 = vunpack.c.l.b16 %v1274
      %v1364 = vunpack.c.l.b16 %v1278
      %v1365 = vunpack.c.l.b16 %v1281
      %v1366 = vunpack.c.l.b16 %v1285
      %v1367 = vunpack.c.l.b16 %v1288
      %v1368 = vunpack.c.l.b16 %v1292
      %v1369 = vunpack.c.l.b16 %v1295
      %v1370 = vunpack.c.l.b16 %v1299
      %v1371 = vunpack.c.l.b16 %v1302
      %v1372 = vunpack.c.l.b16 %v1306
      %v1373 = vunpack.c.l.b16 %v1309
      %v1374 = vunpack.c.l.b16 %v1313
      %v1375 = vunpack.c.l.b16 %v1316
      %v1376 = vunpack.c.l.b16 %v1320
      %v1377 = vunpack.c.l.b16 %v1323
      %v1378 = vunpack.c.l.b16 %v1327
      %v1379 = vunpack.c.l.b16 %v1330
      %v1380 = vunpack.c.l.b16 %v1334
      %v1381 = vunpack.c.l.b16 %v1337
      %v1382 = vunpack.c.l.b16 %v1341
      %v1383 = vunpack.c.l.b16 %v1344
      %v1384 = vunpack.c.l.b16 %v1348
      %v1385 = vunpack.c.l.b16 %v1351
      %v1386 = vpack.c.b16 %v1355, %v1354
      %v1387 = vpack.c.b16 %v1357, %v1356
      %v1388 = vpack.c.b16 %v1359, %v1358
      %v1389 = vpack.c.b16 %v1361, %v1360
      %v1390 = vpack.c.b16 %v1363, %v1362
      %v1391 = vpack.c.b16 %v1365, %v1364
      %v1392 = vpack.c.b16 %v1367, %v1366
      %v1393 = vpack.c.b16 %v1369, %v1368
      %v1394 = vpack.c.b16 %v1371, %v1370
      %v1395 = vpack.c.b16 %v1373, %v1372
      %v1396 = vpack.c.b16 %v1375, %v1374
      %v1397 = vpack.c.b16 %v1377, %v1376
      %v1398 = vpack.c.b16 %v1379, %v1378
      %v1399 = vpack.c.b16 %v1381, %v1380
      %v1400 = vpack.c.b16 %v1383, %v1382
      %v1401 = vpack.c.b16 %v1385, %v1384
      %v1403 = vsel %vm715, %v1386, 0
      %v1406 = vsel %vm715, %v1387, 0
      %v1409 = vsel %vm715, %v1388, 0
      %v1412 = vsel %vm715, %v1389, 0
      %v1415 = vsel %vm715, %v1390, 0
      %v1418 = vsel %vm715, %v1391, 0
      %v1421 = vsel %vm715, %v1392, 0
      %v1424 = vsel %vm715, %v1393, 0
      %v1427 = vsel %vm715, %v1394, 0
      %v1430 = vsel %vm715, %v1395, 0
      %v1433 = vsel %vm715, %v1396, 0
      %v1436 = vsel %vm715, %v1397, 0
      %v1439 = vsel %vm715, %v1398, 0
      %v1442 = vsel %vm715, %v1399, 0
      %v1445 = vsel %vm715, %v1400, 0
      %v1448 = vsel %vm715, %v1401, 0
      %v1451 = vsel %vm764, %v1353, 0
      %1453 = vmatprep.subr.bf16.mxu0 0
      %1454 = vmatpush1.bf16.msra.mxu0 0
      %1455 = vmatprep.subr.bf16.mxu0 0
      %1456 = vmatpush1.bf16.msra.mxu0 0
      %1457 = vmatprep.subr.bf16.mxu0 0
      %1458 = vmatpush1.bf16.msra.mxu0 0
      %1459 = vmatprep.subr.bf16.mxu0 0
      %1460 = vmatpush1.bf16.msra.mxu0 0
      %1461 = vmatprep.subr.bf16.mxu0 0
      %1462 = vmatpush1.bf16.msra.mxu0 0
      %1463 = vmatprep.subr.bf16.mxu0 0
      %1464 = vmatpush1.bf16.msra.mxu0 0
      %1465 = vmatprep.subr.bf16.mxu0 0
      %1466 = vmatpush1.bf16.msra.mxu0 0
      %1467 = vmatprep.subr.bf16.mxu0 0
      %1468 = vmatpush1.bf16.msra.mxu0 %v1451
      %1469 = vmatprep.subr.bf16.mxu0 0
      %1470 = vmatpush2.bf16.msra.mxu0 0
      %1471 = vmatprep.subr.bf16.mxu0 0
      %1472 = vmatpush2.bf16.msra.mxu0 0
      %1473 = vmatprep.subr.bf16.mxu0 0
      %1474 = vmatpush2.bf16.msra.mxu0 0
      %1475 = vmatprep.subr.bf16.mxu0 0
      %1476 = vmatpush2.bf16.msra.mxu0 0
      %1477 = vmatprep.subr.bf16.mxu0 0
      %1478 = vmatpush2.bf16.msra.mxu0 0
      %1479 = vmatprep.subr.bf16.mxu0 0
      %1480 = vmatpush2.bf16.msra.mxu0 0
      %1481 = vmatprep.subr.bf16.mxu0 0
      %1482 = vmatpush2.bf16.msra.mxu0 0
      %1483 = vmatprep.subr.bf16.mxu0 0
      %1484 = vmatpush2.bf16.msra.mxu0 0
      %1485 = vmatprep.mubr.bf16.mxu0 0
      %1486 = vmatmul.mubr.bf16.gmra.mxu0 %v1403
      %v1487 = vpop.f32.mrf.mxu0
      %v1488 = vadd.f32 0.0, %v1487
      %v1489 = vpop.f32.mrf.mxu0
      %v1490 = vpop.f32.mrf.mxu0
      %v1491 = vadd.f32 0.0, %v1490
      %v1492 = vpop.f32.mrf.mxu0
      %1493 = vmatprep.mubr.bf16.mxu0 0
      %1494 = vmatmul.mubr.bf16.gmra.mxu0 %v1406
      %v1495 = vpop.f32.mrf.mxu0
      %v1496 = vadd.f32 0.0, %v1495
      %v1497 = vpop.f32.mrf.mxu0
      %v1498 = vpop.f32.mrf.mxu0
      %v1499 = vadd.f32 0.0, %v1498
      %v1500 = vpop.f32.mrf.mxu0
      %1501 = vmatprep.mubr.bf16.mxu0 0
      %1502 = vmatmul.mubr.bf16.gmra.mxu0 %v1409
      %v1503 = vpop.f32.mrf.mxu0
      %v1504 = vadd.f32 0.0, %v1503
      %v1505 = vpop.f32.mrf.mxu0
      %v1506 = vpop.f32.mrf.mxu0
      %v1507 = vadd.f32 0.0, %v1506
      %v1508 = vpop.f32.mrf.mxu0
      %1509 = vmatprep.mubr.bf16.mxu0 0
      %1510 = vmatmul.mubr.bf16.gmra.mxu0 %v1412
      %v1511 = vpop.f32.mrf.mxu0
      %v1512 = vadd.f32 0.0, %v1511
      %v1513 = vpop.f32.mrf.mxu0
      %v1514 = vpop.f32.mrf.mxu0
      %v1515 = vadd.f32 0.0, %v1514
      %v1516 = vpop.f32.mrf.mxu0
      %1517 = vmatprep.mubr.bf16.mxu0 0
      %1518 = vmatmul.mubr.bf16.gmra.mxu0 %v1415
      %v1519 = vpop.f32.mrf.mxu0
      %v1520 = vadd.f32 0.0, %v1519
      %v1521 = vpop.f32.mrf.mxu0
      %v1522 = vpop.f32.mrf.mxu0
      %v1523 = vadd.f32 0.0, %v1522
      %v1524 = vpop.f32.mrf.mxu0
      %1525 = vmatprep.mubr.bf16.mxu0 0
      %1526 = vmatmul.mubr.bf16.gmra.mxu0 %v1418
      %v1527 = vpop.f32.mrf.mxu0
      %v1528 = vadd.f32 0.0, %v1527
      %v1529 = vpop.f32.mrf.mxu0
      %v1530 = vpop.f32.mrf.mxu0
      %v1531 = vadd.f32 0.0, %v1530
      %v1532 = vpop.f32.mrf.mxu0
      %1533 = vmatprep.mubr.bf16.mxu0 0
      %1534 = vmatmul.mubr.bf16.gmra.mxu0 %v1421
      %v1535 = vpop.f32.mrf.mxu0
      %v1536 = vadd.f32 0.0, %v1535
      %v1537 = vpop.f32.mrf.mxu0
      %v1538 = vpop.f32.mrf.mxu0
      %v1539 = vadd.f32 0.0, %v1538
      %v1540 = vpop.f32.mrf.mxu0
      %1541 = vmatprep.mubr.bf16.mxu0 0
      %1542 = vmatmul.mubr.bf16.gmra.mxu0 %v1424
      %v1543 = vpop.f32.mrf.mxu0
      %v1544 = vadd.f32 0.0, %v1543
      %v1545 = vpop.f32.mrf.mxu0
      %v1546 = vpop.f32.mrf.mxu0
      %v1547 = vadd.f32 0.0, %v1546
      %v1548 = vpop.f32.mrf.mxu0
      %1549 = vmatprep.mubr.bf16.mxu0 0
      %1550 = vmatmul.mubr.bf16.gmra.mxu0 %v1427
      %v1551 = vpop.f32.mrf.mxu0
      %v1552 = vadd.f32 0.0, %v1551
      %v1553 = vpop.f32.mrf.mxu0
      %v1554 = vpop.f32.mrf.mxu0
      %v1555 = vadd.f32 0.0, %v1554
      %v1556 = vpop.f32.mrf.mxu0
      %1557 = vmatprep.mubr.bf16.mxu0 0
      %1558 = vmatmul.mubr.bf16.gmra.mxu0 %v1430
      %v1559 = vpop.f32.mrf.mxu0
      %v1560 = vadd.f32 0.0, %v1559
      %v1561 = vpop.f32.mrf.mxu0
      %v1562 = vpop.f32.mrf.mxu0
      %v1563 = vadd.f32 0.0, %v1562
      %v1564 = vpop.f32.mrf.mxu0
      %1565 = vmatprep.mubr.bf16.mxu0 0
      %1566 = vmatmul.mubr.bf16.gmra.mxu0 %v1433
      %v1567 = vpop.f32.mrf.mxu0
      %v1568 = vadd.f32 0.0, %v1567
      %v1569 = vpop.f32.mrf.mxu0
      %v1570 = vpop.f32.mrf.mxu0
      %v1571 = vadd.f32 0.0, %v1570
      %v1572 = vpop.f32.mrf.mxu0
      %1573 = vmatprep.mubr.bf16.mxu0 0
      %1574 = vmatmul.mubr.bf16.gmra.mxu0 %v1436
      %v1575 = vpop.f32.mrf.mxu0
      %v1576 = vadd.f32 0.0, %v1575
      %v1577 = vpop.f32.mrf.mxu0
      %v1578 = vpop.f32.mrf.mxu0
      %v1579 = vadd.f32 0.0, %v1578
      %v1580 = vpop.f32.mrf.mxu0
      %1581 = vmatprep.mubr.bf16.mxu0 0
      %1582 = vmatmul.mubr.bf16.gmra.mxu0 %v1439
      %v1583 = vpop.f32.mrf.mxu0
      %v1584 = vadd.f32 0.0, %v1583
      %v1585 = vpop.f32.mrf.mxu0
      %v1586 = vpop.f32.mrf.mxu0
      %v1587 = vadd.f32 0.0, %v1586
      %v1588 = vpop.f32.mrf.mxu0
      %1589 = vmatprep.mubr.bf16.mxu0 0
      %1590 = vmatmul.mubr.bf16.gmra.mxu0 %v1442
      %v1591 = vpop.f32.mrf.mxu0
      %v1592 = vadd.f32 0.0, %v1591
      %v1593 = vpop.f32.mrf.mxu0
      %v1594 = vpop.f32.mrf.mxu0
      %v1595 = vadd.f32 0.0, %v1594
      %v1596 = vpop.f32.mrf.mxu0
      %1597 = vmatprep.mubr.bf16.mxu0 0
      %1598 = vmatmul.mubr.bf16.gmra.mxu0 %v1445
      %v1599 = vpop.f32.mrf.mxu0
      %v1600 = vadd.f32 0.0, %v1599
      %v1601 = vpop.f32.mrf.mxu0
      %v1602 = vpop.f32.mrf.mxu0
      %v1603 = vadd.f32 0.0, %v1602
      %v1604 = vpop.f32.mrf.mxu0
      %1605 = vmatprep.mubr.bf16.mxu0 0
      %1606 = vmatmul.mubr.bf16.gmra.mxu0 %v1448
      %v1607 = vpop.f32.mrf.mxu0
      %v1608 = vadd.f32 0.0, %v1607
      %v1609 = vpop.f32.mrf.mxu0
      %v1610 = vpop.f32.mrf.mxu0
      %v1611 = vadd.f32 0.0, %v1610
      %v1612 = vpop.f32.mrf.mxu0
      %1613 = vdwg.mxu0
      %v1614 = vadd.f32 %v1095, %v1488
      %v1615 = vadd.f32 %v1098, %v1491
      %v1616 = vadd.f32 %v1103, %v1496
      %v1617 = vadd.f32 %v1106, %v1499
      %v1618 = vadd.f32 %v1111, %v1504
      %v1619 = vadd.f32 %v1114, %v1507
      %v1620 = vadd.f32 %v1119, %v1512
      %v1621 = vadd.f32 %v1122, %v1515
      %v1622 = vadd.f32 %v1127, %v1520
      %v1623 = vadd.f32 %v1130, %v1523
      %v1624 = vadd.f32 %v1135, %v1528
      %v1625 = vadd.f32 %v1138, %v1531
      %v1626 = vadd.f32 %v1143, %v1536
      %v1627 = vadd.f32 %v1146, %v1539
      %v1628 = vadd.f32 %v1151, %v1544
      %v1629 = vadd.f32 %v1154, %v1547
      %v1630 = vadd.f32 %v1159, %v1552
      %v1631 = vadd.f32 %v1162, %v1555
      %v1632 = vadd.f32 %v1167, %v1560
      %v1633 = vadd.f32 %v1170, %v1563
      %v1634 = vadd.f32 %v1175, %v1568
      %v1635 = vadd.f32 %v1178, %v1571
      %v1636 = vadd.f32 %v1183, %v1576
      %v1637 = vadd.f32 %v1186, %v1579
      %v1638 = vadd.f32 %v1191, %v1584
      %v1639 = vadd.f32 %v1194, %v1587
      %v1640 = vadd.f32 %v1199, %v1592
      %v1641 = vadd.f32 %v1202, %v1595
      %v1642 = vadd.f32 %v1207, %v1600
      %v1643 = vadd.f32 %v1210, %v1603
      %v1644 = vadd.f32 %v1215, %v1608
      %v1645 = vadd.f32 %v1218, %v1611
      %s1646 = scalar_lea.vmem %s210, 6
      %v1647 = vld [vmem:[%s1646] sm:$0x3]
      %v1650 = vunpack.c.l.b16 %v271
      %v1651 = vunpack.c.l.b16 %v272
      %v1652 = vpack.c.b16 %v1651, %v1650
      %v1654 = vsel %vm715, %v1652, 0
      %v1657 = vsel %vm764, %v1647, 0
      %1659 = vmatprep.subr.bf16.mxu0 0
      %1660 = vmatpush1.bf16.msra.mxu0 0
      %1661 = vmatprep.subr.bf16.mxu0 0
      %1662 = vmatpush1.bf16.msra.mxu0 0
      %1663 = vmatprep.subr.bf16.mxu0 0
      %1664 = vmatpush1.bf16.msra.mxu0 0
      %1665 = vmatprep.subr.bf16.mxu0 0
      %1666 = vmatpush1.bf16.msra.mxu0 0
      %1667 = vmatprep.subr.bf16.mxu0 0
      %1668 = vmatpush1.bf16.msra.mxu0 0
      %1669 = vmatprep.subr.bf16.mxu0 0
      %1670 = vmatpush1.bf16.msra.mxu0 0
      %1671 = vmatprep.subr.bf16.mxu0 0
      %1672 = vmatpush1.bf16.msra.mxu0 0
      %1673 = vmatprep.subr.bf16.mxu0 0
      %1674 = vmatpush1.bf16.msra.mxu0 %v1657
      %1675 = vmatprep.subr.bf16.mxu0 0
      %1676 = vmatpush2.bf16.msra.mxu0 0
      %1677 = vmatprep.subr.bf16.mxu0 0
      %1678 = vmatpush2.bf16.msra.mxu0 0
      %1679 = vmatprep.subr.bf16.mxu0 0
      %1680 = vmatpush2.bf16.msra.mxu0 0
      %1681 = vmatprep.subr.bf16.mxu0 0
      %1682 = vmatpush2.bf16.msra.mxu0 0
      %1683 = vmatprep.subr.bf16.mxu0 0
      %1684 = vmatpush2.bf16.msra.mxu0 0
      %1685 = vmatprep.subr.bf16.mxu0 0
      %1686 = vmatpush2.bf16.msra.mxu0 0
      %1687 = vmatprep.subr.bf16.mxu0 0
      %1688 = vmatpush2.bf16.msra.mxu0 0
      %1689 = vmatprep.subr.bf16.mxu0 0
      %1690 = vmatpush2.bf16.msra.mxu0 0
      %1691 = vmatprep.mubr.bf16.mxu0 0
      %1692 = vmatmul.mubr.bf16.gmra.mxu0 %v1013
      %v1693 = vpop.f32.mrf.mxu0
      %v1694 = vadd.f32 0.0, %v1693
      %v1695 = vpop.f32.mrf.mxu0
      %v1696 = vpop.f32.mrf.mxu0
      %v1697 = vadd.f32 0.0, %v1696
      %v1698 = vpop.f32.mrf.mxu0
      %1699 = vmatprep.mubr.bf16.mxu0 0
      %1700 = vmatmul.mubr.bf16.gmra.mxu0 %v1016
      %v1701 = vpop.f32.mrf.mxu0
      %v1702 = vadd.f32 0.0, %v1701
      %v1703 = vpop.f32.mrf.mxu0
      %v1704 = vpop.f32.mrf.mxu0
      %v1705 = vadd.f32 0.0, %v1704
      %v1706 = vpop.f32.mrf.mxu0
      %1707 = vmatprep.mubr.bf16.mxu0 0
      %1708 = vmatmul.mubr.bf16.gmra.mxu0 %v1019
      %v1709 = vpop.f32.mrf.mxu0
      %v1710 = vadd.f32 0.0, %v1709
      %v1711 = vpop.f32.mrf.mxu0
      %v1712 = vpop.f32.mrf.mxu0
      %v1713 = vadd.f32 0.0, %v1712
      %v1714 = vpop.f32.mrf.mxu0
      %1715 = vmatprep.mubr.bf16.mxu0 0
      %1716 = vmatmul.mubr.bf16.gmra.mxu0 %v1022
      %v1717 = vpop.f32.mrf.mxu0
      %v1718 = vadd.f32 0.0, %v1717
      %v1719 = vpop.f32.mrf.mxu0
      %v1720 = vpop.f32.mrf.mxu0
      %v1721 = vadd.f32 0.0, %v1720
      %v1722 = vpop.f32.mrf.mxu0
      %1723 = vmatprep.mubr.bf16.mxu0 0
      %1724 = vmatmul.mubr.bf16.gmra.mxu0 %v1025
      %v1725 = vpop.f32.mrf.mxu0
      %v1726 = vadd.f32 0.0, %v1725
      %v1727 = vpop.f32.mrf.mxu0
      %v1728 = vpop.f32.mrf.mxu0
      %v1729 = vadd.f32 0.0, %v1728
      %v1730 = vpop.f32.mrf.mxu0
      %1731 = vmatprep.mubr.bf16.mxu0 0
      %1732 = vmatmul.mubr.bf16.gmra.mxu0 %v1028
      %v1733 = vpop.f32.mrf.mxu0
      %v1734 = vadd.f32 0.0, %v1733
      %v1735 = vpop.f32.mrf.mxu0
      %v1736 = vpop.f32.mrf.mxu0
      %v1737 = vadd.f32 0.0, %v1736
      %v1738 = vpop.f32.mrf.mxu0
      %1739 = vmatprep.mubr.bf16.mxu0 0
      %1740 = vmatmul.mubr.bf16.gmra.mxu0 %v1031
      %v1741 = vpop.f32.mrf.mxu0
      %v1742 = vadd.f32 0.0, %v1741
      %v1743 = vpop.f32.mrf.mxu0
      %v1744 = vpop.f32.mrf.mxu0
      %v1745 = vadd.f32 0.0, %v1744
      %v1746 = vpop.f32.mrf.mxu0
      %1747 = vmatprep.mubr.bf16.mxu0 0
      %1748 = vmatmul.mubr.bf16.gmra.mxu0 %v1034
      %v1749 = vpop.f32.mrf.mxu0
      %v1750 = vadd.f32 0.0, %v1749
      %v1751 = vpop.f32.mrf.mxu0
      %v1752 = vpop.f32.mrf.mxu0
      %v1753 = vadd.f32 0.0, %v1752
      %v1754 = vpop.f32.mrf.mxu0
      %1755 = vmatprep.mubr.bf16.mxu0 0
      %1756 = vmatmul.mubr.bf16.gmra.mxu0 %v1037
      %v1757 = vpop.f32.mrf.mxu0
      %v1758 = vadd.f32 0.0, %v1757
      %v1759 = vpop.f32.mrf.mxu0
      %v1760 = vpop.f32.mrf.mxu0
      %v1761 = vadd.f32 0.0, %v1760
      %v1762 = vpop.f32.mrf.mxu0
      %1763 = vmatprep.mubr.bf16.mxu0 0
      %1764 = vmatmul.mubr.bf16.gmra.mxu0 %v1040
      %v1765 = vpop.f32.mrf.mxu0
      %v1766 = vadd.f32 0.0, %v1765
      %v1767 = vpop.f32.mrf.mxu0
      %v1768 = vpop.f32.mrf.mxu0
      %v1769 = vadd.f32 0.0, %v1768
      %v1770 = vpop.f32.mrf.mxu0
      %1771 = vmatprep.mubr.bf16.mxu0 0
      %1772 = vmatmul.mubr.bf16.gmra.mxu0 %v1043
      %v1773 = vpop.f32.mrf.mxu0
      %v1774 = vadd.f32 0.0, %v1773
      %v1775 = vpop.f32.mrf.mxu0
      %v1776 = vpop.f32.mrf.mxu0
      %v1777 = vadd.f32 0.0, %v1776
      %v1778 = vpop.f32.mrf.mxu0
      %1779 = vmatprep.mubr.bf16.mxu0 0
      %1780 = vmatmul.mubr.bf16.gmra.mxu0 %v1046
      %v1781 = vpop.f32.mrf.mxu0
      %v1782 = vadd.f32 0.0, %v1781
      %v1783 = vpop.f32.mrf.mxu0
      %v1784 = vpop.f32.mrf.mxu0
      %v1785 = vadd.f32 0.0, %v1784
      %v1786 = vpop.f32.mrf.mxu0
      %1787 = vmatprep.mubr.bf16.mxu0 0
      %1788 = vmatmul.mubr.bf16.gmra.mxu0 %v1049
      %v1789 = vpop.f32.mrf.mxu0
      %v1790 = vadd.f32 0.0, %v1789
      %v1791 = vpop.f32.mrf.mxu0
      %v1792 = vpop.f32.mrf.mxu0
      %v1793 = vadd.f32 0.0, %v1792
      %v1794 = vpop.f32.mrf.mxu0
      %1795 = vmatprep.mubr.bf16.mxu0 0
      %1796 = vmatmul.mubr.bf16.gmra.mxu0 %v1052
      %v1797 = vpop.f32.mrf.mxu0
      %v1798 = vadd.f32 0.0, %v1797
      %v1799 = vpop.f32.mrf.mxu0
      %v1800 = vpop.f32.mrf.mxu0
      %v1801 = vadd.f32 0.0, %v1800
      %v1802 = vpop.f32.mrf.mxu0
      %1803 = vmatprep.mubr.bf16.mxu0 0
      %1804 = vmatmul.mubr.bf16.gmra.mxu0 %v1055
      %v1805 = vpop.f32.mrf.mxu0
      %v1806 = vadd.f32 0.0, %v1805
      %v1807 = vpop.f32.mrf.mxu0
      %v1808 = vpop.f32.mrf.mxu0
      %v1809 = vadd.f32 0.0, %v1808
      %v1810 = vpop.f32.mrf.mxu0
      %1811 = vmatprep.mubr.bf16.mxu0 0
      %1812 = vmatmul.mubr.bf16.gmra.mxu0 %v1654
      %v1813 = vpop.f32.mrf.mxu0
      %v1814 = vadd.f32 0.0, %v1813
      %v1815 = vpop.f32.mrf.mxu0
      %v1816 = vpop.f32.mrf.mxu0
      %v1817 = vadd.f32 0.0, %v1816
      %v1818 = vpop.f32.mrf.mxu0
      %1819 = vdwg.mxu0
      %v1820 = vadd.f32 %v1614, %v1694
      %v1821 = vadd.f32 %v1615, %v1697
      %v1822 = vadd.f32 %v1616, %v1702
      %v1823 = vadd.f32 %v1617, %v1705
      %v1824 = vadd.f32 %v1618, %v1710
      %v1825 = vadd.f32 %v1619, %v1713
      %v1826 = vadd.f32 %v1620, %v1718
      %v1827 = vadd.f32 %v1621, %v1721
      %v1828 = vadd.f32 %v1622, %v1726
      %v1829 = vadd.f32 %v1623, %v1729
      %v1830 = vadd.f32 %v1624, %v1734
      %v1831 = vadd.f32 %v1625, %v1737
      %v1832 = vadd.f32 %v1626, %v1742
      %v1833 = vadd.f32 %v1627, %v1745
      %v1834 = vadd.f32 %v1628, %v1750
      %v1835 = vadd.f32 %v1629, %v1753
      %v1836 = vadd.f32 %v1630, %v1758
      %v1837 = vadd.f32 %v1631, %v1761
      %v1838 = vadd.f32 %v1632, %v1766
      %v1839 = vadd.f32 %v1633, %v1769
      %v1840 = vadd.f32 %v1634, %v1774
      %v1841 = vadd.f32 %v1635, %v1777
      %v1842 = vadd.f32 %v1636, %v1782
      %v1843 = vadd.f32 %v1637, %v1785
      %v1844 = vadd.f32 %v1638, %v1790
      %v1845 = vadd.f32 %v1639, %v1793
      %v1846 = vadd.f32 %v1640, %v1798
      %v1847 = vadd.f32 %v1641, %v1801
      %v1848 = vadd.f32 %v1642, %v1806
      %v1849 = vadd.f32 %v1643, %v1809
      %v1850 = vadd.f32 %v1644, %v1814
      %v1851 = vadd.f32 %v1645, %v1817
      %v1853 = vshrl.u32 %v271, 16
      %v1855 = vrot.slane %v1853, 4
      %v1856 = vshll.u32 %v271, 16
      %v1858 = vrot.slane %v1856, 5
      %v1859 = vor.u32 %v1855, %v1858
      %v1860 = vrot.slane %v1859, 4
      %v1862 = vshll.u32 %v272, 16
      %v1864 = vrot.slane %v1862, 5
      %v1865 = vsel %vm280, %v1860, %v1864
      %v1866 = vshrl.u32 %v272, 16
      %v1868 = vrot.slane %v1866, 4
      %v1869 = vor.u32 %v1868, %v1864
      %v1870 = vrot.slane %v1869, 4
      %v1872 = vshll.u32 %v273, 16
      %v1874 = vrot.slane %v1872, 5
      %v1875 = vsel %vm280, %v1870, %v1874
      %s1876 = scalar_lea.vmem %s210, 8
      %v1877 = vld [vmem:[%s1876] sm:$0x3]
      %v1878 = vunpack.c.l.b16 %v1865
      %v1879 = vunpack.c.l.b16 %v1875
      %v1880 = vpack.c.b16 %v1879, %v1878
      %v1882 = vsel %vm715, %v1880, 0
      %v1885 = vsel %vm764, %v1877, 0
      %1887 = vmatprep.subr.bf16.mxu0 0
      %1888 = vmatpush1.bf16.msra.mxu0 0
      %1889 = vmatprep.subr.bf16.mxu0 0
      %1890 = vmatpush1.bf16.msra.mxu0 0
      %1891 = vmatprep.subr.bf16.mxu0 0
      %1892 = vmatpush1.bf16.msra.mxu0 0
      %1893 = vmatprep.subr.bf16.mxu0 0
      %1894 = vmatpush1.bf16.msra.mxu0 0
      %1895 = vmatprep.subr.bf16.mxu0 0
      %1896 = vmatpush1.bf16.msra.mxu0 0
      %1897 = vmatprep.subr.bf16.mxu0 0
      %1898 = vmatpush1.bf16.msra.mxu0 0
      %1899 = vmatprep.subr.bf16.mxu0 0
      %1900 = vmatpush1.bf16.msra.mxu0 0
      %1901 = vmatprep.subr.bf16.mxu0 0
      %1902 = vmatpush1.bf16.msra.mxu0 %v1885
      %1903 = vmatprep.subr.bf16.mxu0 0
      %1904 = vmatpush2.bf16.msra.mxu0 0
      %1905 = vmatprep.subr.bf16.mxu0 0
      %1906 = vmatpush2.bf16.msra.mxu0 0
      %1907 = vmatprep.subr.bf16.mxu0 0
      %1908 = vmatpush2.bf16.msra.mxu0 0
      %1909 = vmatprep.subr.bf16.mxu0 0
      %1910 = vmatpush2.bf16.msra.mxu0 0
      %1911 = vmatprep.subr.bf16.mxu0 0
      %1912 = vmatpush2.bf16.msra.mxu0 0
      %1913 = vmatprep.subr.bf16.mxu0 0
      %1914 = vmatpush2.bf16.msra.mxu0 0
      %1915 = vmatprep.subr.bf16.mxu0 0
      %1916 = vmatpush2.bf16.msra.mxu0 0
      %1917 = vmatprep.subr.bf16.mxu0 0
      %1918 = vmatpush2.bf16.msra.mxu0 0
      %1919 = vmatprep.mubr.bf16.mxu0 0
      %1920 = vmatmul.mubr.bf16.gmra.mxu0 %v720
      %v1921 = vpop.f32.mrf.mxu0
      %v1922 = vadd.f32 0.0, %v1921
      %v1923 = vpop.f32.mrf.mxu0
      %v1924 = vpop.f32.mrf.mxu0
      %v1925 = vadd.f32 0.0, %v1924
      %v1926 = vpop.f32.mrf.mxu0
      %1927 = vmatprep.mubr.bf16.mxu0 0
      %1928 = vmatmul.mubr.bf16.gmra.mxu0 %v723
      %v1929 = vpop.f32.mrf.mxu0
      %v1930 = vadd.f32 0.0, %v1929
      %v1931 = vpop.f32.mrf.mxu0
      %v1932 = vpop.f32.mrf.mxu0
      %v1933 = vadd.f32 0.0, %v1932
      %v1934 = vpop.f32.mrf.mxu0
      %1935 = vmatprep.mubr.bf16.mxu0 0
      %1936 = vmatmul.mubr.bf16.gmra.mxu0 %v726
      %v1937 = vpop.f32.mrf.mxu0
      %v1938 = vadd.f32 0.0, %v1937
      %v1939 = vpop.f32.mrf.mxu0
      %v1940 = vpop.f32.mrf.mxu0
      %v1941 = vadd.f32 0.0, %v1940
      %v1942 = vpop.f32.mrf.mxu0
      %1943 = vmatprep.mubr.bf16.mxu0 0
      %1944 = vmatmul.mubr.bf16.gmra.mxu0 %v729
      %v1945 = vpop.f32.mrf.mxu0
      %v1946 = vadd.f32 0.0, %v1945
      %v1947 = vpop.f32.mrf.mxu0
      %v1948 = vpop.f32.mrf.mxu0
      %v1949 = vadd.f32 0.0, %v1948
      %v1950 = vpop.f32.mrf.mxu0
      %1951 = vmatprep.mubr.bf16.mxu0 0
      %1952 = vmatmul.mubr.bf16.gmra.mxu0 %v732
      %v1953 = vpop.f32.mrf.mxu0
      %v1954 = vadd.f32 0.0, %v1953
      %v1955 = vpop.f32.mrf.mxu0
      %v1956 = vpop.f32.mrf.mxu0
      %v1957 = vadd.f32 0.0, %v1956
      %v1958 = vpop.f32.mrf.mxu0
      %1959 = vmatprep.mubr.bf16.mxu0 0
      %1960 = vmatmul.mubr.bf16.gmra.mxu0 %v735
      %v1961 = vpop.f32.mrf.mxu0
      %v1962 = vadd.f32 0.0, %v1961
      %v1963 = vpop.f32.mrf.mxu0
      %v1964 = vpop.f32.mrf.mxu0
      %v1965 = vadd.f32 0.0, %v1964
      %v1966 = vpop.f32.mrf.mxu0
      %1967 = vmatprep.mubr.bf16.mxu0 0
      %1968 = vmatmul.mubr.bf16.gmra.mxu0 %v738
      %v1969 = vpop.f32.mrf.mxu0
      %v1970 = vadd.f32 0.0, %v1969
      %v1971 = vpop.f32.mrf.mxu0
      %v1972 = vpop.f32.mrf.mxu0
      %v1973 = vadd.f32 0.0, %v1972
      %v1974 = vpop.f32.mrf.mxu0
      %1975 = vmatprep.mubr.bf16.mxu0 0
      %1976 = vmatmul.mubr.bf16.gmra.mxu0 %v741
      %v1977 = vpop.f32.mrf.mxu0
      %v1978 = vadd.f32 0.0, %v1977
      %v1979 = vpop.f32.mrf.mxu0
      %v1980 = vpop.f32.mrf.mxu0
      %v1981 = vadd.f32 0.0, %v1980
      %v1982 = vpop.f32.mrf.mxu0
      %1983 = vmatprep.mubr.bf16.mxu0 0
      %1984 = vmatmul.mubr.bf16.gmra.mxu0 %v744
      %v1985 = vpop.f32.mrf.mxu0
      %v1986 = vadd.f32 0.0, %v1985
      %v1987 = vpop.f32.mrf.mxu0
      %v1988 = vpop.f32.mrf.mxu0
      %v1989 = vadd.f32 0.0, %v1988
      %v1990 = vpop.f32.mrf.mxu0
      %1991 = vmatprep.mubr.bf16.mxu0 0
      %1992 = vmatmul.mubr.bf16.gmra.mxu0 %v747
      %v1993 = vpop.f32.mrf.mxu0
      %v1994 = vadd.f32 0.0, %v1993
      %v1995 = vpop.f32.mrf.mxu0
      %v1996 = vpop.f32.mrf.mxu0
      %v1997 = vadd.f32 0.0, %v1996
      %v1998 = vpop.f32.mrf.mxu0
      %1999 = vmatprep.mubr.bf16.mxu0 0
      %2000 = vmatmul.mubr.bf16.gmra.mxu0 %v750
      %v2001 = vpop.f32.mrf.mxu0
      %v2002 = vadd.f32 0.0, %v2001
      %v2003 = vpop.f32.mrf.mxu0
      %v2004 = vpop.f32.mrf.mxu0
      %v2005 = vadd.f32 0.0, %v2004
      %v2006 = vpop.f32.mrf.mxu0
      %2007 = vmatprep.mubr.bf16.mxu0 0
      %2008 = vmatmul.mubr.bf16.gmra.mxu0 %v753
      %v2009 = vpop.f32.mrf.mxu0
      %v2010 = vadd.f32 0.0, %v2009
      %v2011 = vpop.f32.mrf.mxu0
      %v2012 = vpop.f32.mrf.mxu0
      %v2013 = vadd.f32 0.0, %v2012
      %v2014 = vpop.f32.mrf.mxu0
      %2015 = vmatprep.mubr.bf16.mxu0 0
      %2016 = vmatmul.mubr.bf16.gmra.mxu0 %v756
      %v2017 = vpop.f32.mrf.mxu0
      %v2018 = vadd.f32 0.0, %v2017
      %v2019 = vpop.f32.mrf.mxu0
      %v2020 = vpop.f32.mrf.mxu0
      %v2021 = vadd.f32 0.0, %v2020
      %v2022 = vpop.f32.mrf.mxu0
      %2023 = vmatprep.mubr.bf16.mxu0 0
      %2024 = vmatmul.mubr.bf16.gmra.mxu0 %v759
      %v2025 = vpop.f32.mrf.mxu0
      %v2026 = vadd.f32 0.0, %v2025
      %v2027 = vpop.f32.mrf.mxu0
      %v2028 = vpop.f32.mrf.mxu0
      %v2029 = vadd.f32 0.0, %v2028
      %v2030 = vpop.f32.mrf.mxu0
      %2031 = vmatprep.mubr.bf16.mxu0 0
      %2032 = vmatmul.mubr.bf16.gmra.mxu0 %v762
      %v2033 = vpop.f32.mrf.mxu0
      %v2034 = vadd.f32 0.0, %v2033
      %v2035 = vpop.f32.mrf.mxu0
      %v2036 = vpop.f32.mrf.mxu0
      %v2037 = vadd.f32 0.0, %v2036
      %v2038 = vpop.f32.mrf.mxu0
      %2039 = vmatprep.mubr.bf16.mxu0 0
      %2040 = vmatmul.mubr.bf16.gmra.mxu0 %v1882
      %v2041 = vpop.f32.mrf.mxu0
      %v2042 = vadd.f32 0.0, %v2041
      %v2043 = vpop.f32.mrf.mxu0
      %v2044 = vpop.f32.mrf.mxu0
      %v2045 = vadd.f32 0.0, %v2044
      %v2046 = vpop.f32.mrf.mxu0
      %2047 = vdwg.mxu0
      %v2048 = vadd.f32 %v1820, %v1922
      %v2049 = vadd.f32 %v1821, %v1925
      %v2050 = vadd.f32 %v1822, %v1930
      %v2051 = vadd.f32 %v1823, %v1933
      %v2052 = vadd.f32 %v1824, %v1938
      %v2053 = vadd.f32 %v1825, %v1941
      %v2054 = vadd.f32 %v1826, %v1946
      %v2055 = vadd.f32 %v1827, %v1949
      %v2056 = vadd.f32 %v1828, %v1954
      %v2057 = vadd.f32 %v1829, %v1957
      %v2058 = vadd.f32 %v1830, %v1962
      %v2059 = vadd.f32 %v1831, %v1965
      %v2060 = vadd.f32 %v1832, %v1970
      %v2061 = vadd.f32 %v1833, %v1973
      %v2062 = vadd.f32 %v1834, %v1978
      %v2063 = vadd.f32 %v1835, %v1981
      %v2064 = vadd.f32 %v1836, %v1986
      %v2065 = vadd.f32 %v1837, %v1989
      %v2066 = vadd.f32 %v1838, %v1994
      %v2067 = vadd.f32 %v1839, %v1997
      %v2068 = vadd.f32 %v1840, %v2002
      %v2069 = vadd.f32 %v1841, %v2005
      %v2070 = vadd.f32 %v1842, %v2010
      %v2071 = vadd.f32 %v1843, %v2013
      %v2072 = vadd.f32 %v1844, %v2018
      %v2073 = vadd.f32 %v1845, %v2021
      %v2074 = vadd.f32 %v1846, %v2026
      %v2075 = vadd.f32 %v1847, %v2029
      %v2076 = vadd.f32 %v1848, %v2034
      %v2077 = vadd.f32 %v1849, %v2037
      %v2078 = vadd.f32 %v1850, %v2042
      %v2079 = vadd.f32 %v1851, %v2045
      %v2081 = vrot.slane %v271, 5
      %v2082 = vrot.slane %v2081, 4
      %v2083 = vrot.slane %v272, 5
      %v2084 = vsel %vm1239, %v2082, %v2083
      %v2085 = vrot.slane %v2083, 4
      %v2086 = vrot.slane %v273, 5
      %v2087 = vsel %vm1239, %v2085, %v2086
      %s2088 = scalar_lea.vmem %s210, 10
      %v2089 = vld [vmem:[%s2088] sm:$0x3]
      %v2090 = vunpack.c.l.b16 %v2084
      %v2091 = vunpack.c.l.b16 %v2087
      %v2092 = vpack.c.b16 %v2091, %v2090
      %v2094 = vsel %vm715, %v2092, 0
      %v2097 = vsel %vm764, %v2089, 0
      %2099 = vmatprep.subr.bf16.mxu0 0
      %2100 = vmatpush1.bf16.msra.mxu0 0
      %2101 = vmatprep.subr.bf16.mxu0 0
      %2102 = vmatpush1.bf16.msra.mxu0 0
      %2103 = vmatprep.subr.bf16.mxu0 0
      %2104 = vmatpush1.bf16.msra.mxu0 0
      %2105 = vmatprep.subr.bf16.mxu0 0
      %2106 = vmatpush1.bf16.msra.mxu0 0
      %2107 = vmatprep.subr.bf16.mxu0 0
      %2108 = vmatpush1.bf16.msra.mxu0 0
      %2109 = vmatprep.subr.bf16.mxu0 0
      %2110 = vmatpush1.bf16.msra.mxu0 0
      %2111 = vmatprep.subr.bf16.mxu0 0
      %2112 = vmatpush1.bf16.msra.mxu0 0
      %2113 = vmatprep.subr.bf16.mxu0 0
      %2114 = vmatpush1.bf16.msra.mxu0 %v2097
      %2115 = vmatprep.subr.bf16.mxu0 0
      %2116 = vmatpush2.bf16.msra.mxu0 0
      %2117 = vmatprep.subr.bf16.mxu0 0
      %2118 = vmatpush2.bf16.msra.mxu0 0
      %2119 = vmatprep.subr.bf16.mxu0 0
      %2120 = vmatpush2.bf16.msra.mxu0 0
      %2121 = vmatprep.subr.bf16.mxu0 0
      %2122 = vmatpush2.bf16.msra.mxu0 0
      %2123 = vmatprep.subr.bf16.mxu0 0
      %2124 = vmatpush2.bf16.msra.mxu0 0
      %2125 = vmatprep.subr.bf16.mxu0 0
      %2126 = vmatpush2.bf16.msra.mxu0 0
      %2127 = vmatprep.subr.bf16.mxu0 0
      %2128 = vmatpush2.bf16.msra.mxu0 0
      %2129 = vmatprep.subr.bf16.mxu0 0
      %2130 = vmatpush2.bf16.msra.mxu0 0
      %2131 = vmatprep.mubr.bf16.mxu0 0
      %2132 = vmatmul.mubr.bf16.gmra.mxu0 %v1406
      %v2133 = vpop.f32.mrf.mxu0
      %v2134 = vadd.f32 0.0, %v2133
      %v2135 = vpop.f32.mrf.mxu0
      %v2136 = vpop.f32.mrf.mxu0
      %v2137 = vadd.f32 0.0, %v2136
      %v2138 = vpop.f32.mrf.mxu0
      %2139 = vmatprep.mubr.bf16.mxu0 0
      %2140 = vmatmul.mubr.bf16.gmra.mxu0 %v1409
      %v2141 = vpop.f32.mrf.mxu0
      %v2142 = vadd.f32 0.0, %v2141
      %v2143 = vpop.f32.mrf.mxu0
      %v2144 = vpop.f32.mrf.mxu0
      %v2145 = vadd.f32 0.0, %v2144
      %v2146 = vpop.f32.mrf.mxu0
      %2147 = vmatprep.mubr.bf16.mxu0 0
      %2148 = vmatmul.mubr.bf16.gmra.mxu0 %v1412
      %v2149 = vpop.f32.mrf.mxu0
      %v2150 = vadd.f32 0.0, %v2149
      %v2151 = vpop.f32.mrf.mxu0
      %v2152 = vpop.f32.mrf.mxu0
      %v2153 = vadd.f32 0.0, %v2152
      %v2154 = vpop.f32.mrf.mxu0
      %2155 = vmatprep.mubr.bf16.mxu0 0
      %2156 = vmatmul.mubr.bf16.gmra.mxu0 %v1415
      %v2157 = vpop.f32.mrf.mxu0
      %v2158 = vadd.f32 0.0, %v2157
      %v2159 = vpop.f32.mrf.mxu0
      %v2160 = vpop.f32.mrf.mxu0
      %v2161 = vadd.f32 0.0, %v2160
      %v2162 = vpop.f32.mrf.mxu0
      %2163 = vmatprep.mubr.bf16.mxu0 0
      %2164 = vmatmul.mubr.bf16.gmra.mxu0 %v1418
      %v2165 = vpop.f32.mrf.mxu0
      %v2166 = vadd.f32 0.0, %v2165
      %v2167 = vpop.f32.mrf.mxu0
      %v2168 = vpop.f32.mrf.mxu0
      %v2169 = vadd.f32 0.0, %v2168
      %v2170 = vpop.f32.mrf.mxu0
      %2171 = vmatprep.mubr.bf16.mxu0 0
      %2172 = vmatmul.mubr.bf16.gmra.mxu0 %v1421
      %v2173 = vpop.f32.mrf.mxu0
      %v2174 = vadd.f32 0.0, %v2173
      %v2175 = vpop.f32.mrf.mxu0
      %v2176 = vpop.f32.mrf.mxu0
      %v2177 = vadd.f32 0.0, %v2176
      %v2178 = vpop.f32.mrf.mxu0
      %2179 = vmatprep.mubr.bf16.mxu0 0
      %2180 = vmatmul.mubr.bf16.gmra.mxu0 %v1424
      %v2181 = vpop.f32.mrf.mxu0
      %v2182 = vadd.f32 0.0, %v2181
      %v2183 = vpop.f32.mrf.mxu0
      %v2184 = vpop.f32.mrf.mxu0
      %v2185 = vadd.f32 0.0, %v2184
      %v2186 = vpop.f32.mrf.mxu0
      %2187 = vmatprep.mubr.bf16.mxu0 0
      %2188 = vmatmul.mubr.bf16.gmra.mxu0 %v1427
      %v2189 = vpop.f32.mrf.mxu0
      %v2190 = vadd.f32 0.0, %v2189
      %v2191 = vpop.f32.mrf.mxu0
      %v2192 = vpop.f32.mrf.mxu0
      %v2193 = vadd.f32 0.0, %v2192
      %v2194 = vpop.f32.mrf.mxu0
      %2195 = vmatprep.mubr.bf16.mxu0 0
      %2196 = vmatmul.mubr.bf16.gmra.mxu0 %v1430
      %v2197 = vpop.f32.mrf.mxu0
      %v2198 = vadd.f32 0.0, %v2197
      %v2199 = vpop.f32.mrf.mxu0
      %v2200 = vpop.f32.mrf.mxu0
      %v2201 = vadd.f32 0.0, %v2200
      %v2202 = vpop.f32.mrf.mxu0
      %2203 = vmatprep.mubr.bf16.mxu0 0
      %2204 = vmatmul.mubr.bf16.gmra.mxu0 %v1433
      %v2205 = vpop.f32.mrf.mxu0
      %v2206 = vadd.f32 0.0, %v2205
      %v2207 = vpop.f32.mrf.mxu0
      %v2208 = vpop.f32.mrf.mxu0
      %v2209 = vadd.f32 0.0, %v2208
      %v2210 = vpop.f32.mrf.mxu0
      %2211 = vmatprep.mubr.bf16.mxu0 0
      %2212 = vmatmul.mubr.bf16.gmra.mxu0 %v1436
      %v2213 = vpop.f32.mrf.mxu0
      %v2214 = vadd.f32 0.0, %v2213
      %v2215 = vpop.f32.mrf.mxu0
      %v2216 = vpop.f32.mrf.mxu0
      %v2217 = vadd.f32 0.0, %v2216
      %v2218 = vpop.f32.mrf.mxu0
      %2219 = vmatprep.mubr.bf16.mxu0 0
      %2220 = vmatmul.mubr.bf16.gmra.mxu0 %v1439
      %v2221 = vpop.f32.mrf.mxu0
      %v2222 = vadd.f32 0.0, %v2221
      %v2223 = vpop.f32.mrf.mxu0
      %v2224 = vpop.f32.mrf.mxu0
      %v2225 = vadd.f32 0.0, %v2224
      %v2226 = vpop.f32.mrf.mxu0
      %2227 = vmatprep.mubr.bf16.mxu0 0
      %2228 = vmatmul.mubr.bf16.gmra.mxu0 %v1442
      %v2229 = vpop.f32.mrf.mxu0
      %v2230 = vadd.f32 0.0, %v2229
      %v2231 = vpop.f32.mrf.mxu0
      %v2232 = vpop.f32.mrf.mxu0
      %v2233 = vadd.f32 0.0, %v2232
      %v2234 = vpop.f32.mrf.mxu0
      %2235 = vmatprep.mubr.bf16.mxu0 0
      %2236 = vmatmul.mubr.bf16.gmra.mxu0 %v1445
      %v2237 = vpop.f32.mrf.mxu0
      %v2238 = vadd.f32 0.0, %v2237
      %v2239 = vpop.f32.mrf.mxu0
      %v2240 = vpop.f32.mrf.mxu0
      %v2241 = vadd.f32 0.0, %v2240
      %v2242 = vpop.f32.mrf.mxu0
      %2243 = vmatprep.mubr.bf16.mxu0 0
      %2244 = vmatmul.mubr.bf16.gmra.mxu0 %v1448
      %v2245 = vpop.f32.mrf.mxu0
      %v2246 = vadd.f32 0.0, %v2245
      %v2247 = vpop.f32.mrf.mxu0
      %v2248 = vpop.f32.mrf.mxu0
      %v2249 = vadd.f32 0.0, %v2248
      %v2250 = vpop.f32.mrf.mxu0
      %2251 = vmatprep.mubr.bf16.mxu0 0
      %2252 = vmatmul.mubr.bf16.gmra.mxu0 %v2094
      %v2253 = vpop.f32.mrf.mxu0
      %v2254 = vadd.f32 0.0, %v2253
      %v2255 = vpop.f32.mrf.mxu0
      %v2256 = vpop.f32.mrf.mxu0
      %v2257 = vadd.f32 0.0, %v2256
      %v2258 = vpop.f32.mrf.mxu0
      %2259 = vdwg.mxu0
      %v2260 = vadd.f32 %v2048, %v2134
      %v2261 = vadd.f32 %v2049, %v2137
      %v2262 = vadd.f32 %v2050, %v2142
      %v2263 = vadd.f32 %v2051, %v2145
      %v2264 = vadd.f32 %v2052, %v2150
      %v2265 = vadd.f32 %v2053, %v2153
      %v2266 = vadd.f32 %v2054, %v2158
      %v2267 = vadd.f32 %v2055, %v2161
      %v2268 = vadd.f32 %v2056, %v2166
      %v2269 = vadd.f32 %v2057, %v2169
      %v2270 = vadd.f32 %v2058, %v2174
      %v2271 = vadd.f32 %v2059, %v2177
      %v2272 = vadd.f32 %v2060, %v2182
      %v2273 = vadd.f32 %v2061, %v2185
      %v2274 = vadd.f32 %v2062, %v2190
      %v2275 = vadd.f32 %v2063, %v2193
      %v2276 = vadd.f32 %v2064, %v2198
      %v2277 = vadd.f32 %v2065, %v2201
      %v2278 = vadd.f32 %v2066, %v2206
      %v2279 = vadd.f32 %v2067, %v2209
      %v2280 = vadd.f32 %v2068, %v2214
      %v2281 = vadd.f32 %v2069, %v2217
      %v2282 = vadd.f32 %v2070, %v2222
      %v2283 = vadd.f32 %v2071, %v2225
      %v2284 = vadd.f32 %v2072, %v2230
      %v2285 = vadd.f32 %v2073, %v2233
      %v2286 = vadd.f32 %v2074, %v2238
      %v2287 = vadd.f32 %v2075, %v2241
      %v2288 = vadd.f32 %v2076, %v2246
      %v2289 = vadd.f32 %v2077, %v2249
      %v2290 = vadd.f32 %v2078, %v2254
      %v2291 = vadd.f32 %v2079, %v2257
      %s2292 = scalar_lea.vmem %s210, 12
      %v2293 = vld [vmem:[%s2292] sm:$0x3]
      %v2296 = vunpack.c.l.b16 %v274
      %v2297 = vunpack.c.l.b16 %v275
      %v2298 = vpack.c.b16 %v2297, %v2296
      %v2300 = vsel %vm715, %v2298, 0
      %v2303 = vsel %vm764, %v2293, 0
      %2305 = vmatprep.subr.bf16.mxu0 0
      %2306 = vmatpush1.bf16.msra.mxu0 0
      %2307 = vmatprep.subr.bf16.mxu0 0
      %2308 = vmatpush1.bf16.msra.mxu0 0
      %2309 = vmatprep.subr.bf16.mxu0 0
      %2310 = vmatpush1.bf16.msra.mxu0 0
      %2311 = vmatprep.subr.bf16.mxu0 0
      %2312 = vmatpush1.bf16.msra.mxu0 0
      %2313 = vmatprep.subr.bf16.mxu0 0
      %2314 = vmatpush1.bf16.msra.mxu0 0
      %2315 = vmatprep.subr.bf16.mxu0 0
      %2316 = vmatpush1.bf16.msra.mxu0 0
      %2317 = vmatprep.subr.bf16.mxu0 0
      %2318 = vmatpush1.bf16.msra.mxu0 0
      %2319 = vmatprep.subr.bf16.mxu0 0
      %2320 = vmatpush1.bf16.msra.mxu0 %v2303
      %2321 = vmatprep.subr.bf16.mxu0 0
      %2322 = vmatpush2.bf16.msra.mxu0 0
      %2323 = vmatprep.subr.bf16.mxu0 0
      %2324 = vmatpush2.bf16.msra.mxu0 0
      %2325 = vmatprep.subr.bf16.mxu0 0
      %2326 = vmatpush2.bf16.msra.mxu0 0
      %2327 = vmatprep.subr.bf16.mxu0 0
      %2328 = vmatpush2.bf16.msra.mxu0 0
      %2329 = vmatprep.subr.bf16.mxu0 0
      %2330 = vmatpush2.bf16.msra.mxu0 0
      %2331 = vmatprep.subr.bf16.mxu0 0
      %2332 = vmatpush2.bf16.msra.mxu0 0
      %2333 = vmatprep.subr.bf16.mxu0 0
      %2334 = vmatpush2.bf16.msra.mxu0 0
      %2335 = vmatprep.subr.bf16.mxu0 0
      %2336 = vmatpush2.bf16.msra.mxu0 0
      %2337 = vmatprep.mubr.bf16.mxu0 0
      %2338 = vmatmul.mubr.bf16.gmra.mxu0 %v1016
      %v2339 = vpop.f32.mrf.mxu0
      %v2340 = vadd.f32 0.0, %v2339
      %v2341 = vpop.f32.mrf.mxu0
      %v2342 = vpop.f32.mrf.mxu0
      %v2343 = vadd.f32 0.0, %v2342
      %v2344 = vpop.f32.mrf.mxu0
      %2345 = vmatprep.mubr.bf16.mxu0 0
      %2346 = vmatmul.mubr.bf16.gmra.mxu0 %v1019
      %v2347 = vpop.f32.mrf.mxu0
      %v2348 = vadd.f32 0.0, %v2347
      %v2349 = vpop.f32.mrf.mxu0
      %v2350 = vpop.f32.mrf.mxu0
      %v2351 = vadd.f32 0.0, %v2350
      %v2352 = vpop.f32.mrf.mxu0
      %2353 = vmatprep.mubr.bf16.mxu0 0
      %2354 = vmatmul.mubr.bf16.gmra.mxu0 %v1022
      %v2355 = vpop.f32.mrf.mxu0
      %v2356 = vadd.f32 0.0, %v2355
      %v2357 = vpop.f32.mrf.mxu0
      %v2358 = vpop.f32.mrf.mxu0
      %v2359 = vadd.f32 0.0, %v2358
      %v2360 = vpop.f32.mrf.mxu0
      %2361 = vmatprep.mubr.bf16.mxu0 0
      %2362 = vmatmul.mubr.bf16.gmra.mxu0 %v1025
      %v2363 = vpop.f32.mrf.mxu0
      %v2364 = vadd.f32 0.0, %v2363
      %v2365 = vpop.f32.mrf.mxu0
      %v2366 = vpop.f32.mrf.mxu0
      %v2367 = vadd.f32 0.0, %v2366
      %v2368 = vpop.f32.mrf.mxu0
      %2369 = vmatprep.mubr.bf16.mxu0 0
      %2370 = vmatmul.mubr.bf16.gmra.mxu0 %v1028
      %v2371 = vpop.f32.mrf.mxu0
      %v2372 = vadd.f32 0.0, %v2371
      %v2373 = vpop.f32.mrf.mxu0
      %v2374 = vpop.f32.mrf.mxu0
      %v2375 = vadd.f32 0.0, %v2374
      %v2376 = vpop.f32.mrf.mxu0
      %2377 = vmatprep.mubr.bf16.mxu0 0
      %2378 = vmatmul.mubr.bf16.gmra.mxu0 %v1031
      %v2379 = vpop.f32.mrf.mxu0
      %v2380 = vadd.f32 0.0, %v2379
      %v2381 = vpop.f32.mrf.mxu0
      %v2382 = vpop.f32.mrf.mxu0
      %v2383 = vadd.f32 0.0, %v2382
      %v2384 = vpop.f32.mrf.mxu0
      %2385 = vmatprep.mubr.bf16.mxu0 0
      %2386 = vmatmul.mubr.bf16.gmra.mxu0 %v1034
      %v2387 = vpop.f32.mrf.mxu0
      %v2388 = vadd.f32 0.0, %v2387
      %v2389 = vpop.f32.mrf.mxu0
      %v2390 = vpop.f32.mrf.mxu0
      %v2391 = vadd.f32 0.0, %v2390
      %v2392 = vpop.f32.mrf.mxu0
      %2393 = vmatprep.mubr.bf16.mxu0 0
      %2394 = vmatmul.mubr.bf16.gmra.mxu0 %v1037
      %v2395 = vpop.f32.mrf.mxu0
      %v2396 = vadd.f32 0.0, %v2395
      %v2397 = vpop.f32.mrf.mxu0
      %v2398 = vpop.f32.mrf.mxu0
      %v2399 = vadd.f32 0.0, %v2398
      %v2400 = vpop.f32.mrf.mxu0
      %2401 = vmatprep.mubr.bf16.mxu0 0
      %2402 = vmatmul.mubr.bf16.gmra.mxu0 %v1040
      %v2403 = vpop.f32.mrf.mxu0
      %v2404 = vadd.f32 0.0, %v2403
      %v2405 = vpop.f32.mrf.mxu0
      %v2406 = vpop.f32.mrf.mxu0
      %v2407 = vadd.f32 0.0, %v2406
      %v2408 = vpop.f32.mrf.mxu0
      %2409 = vmatprep.mubr.bf16.mxu0 0
      %2410 = vmatmul.mubr.bf16.gmra.mxu0 %v1043
      %v2411 = vpop.f32.mrf.mxu0
      %v2412 = vadd.f32 0.0, %v2411
      %v2413 = vpop.f32.mrf.mxu0
      %v2414 = vpop.f32.mrf.mxu0
      %v2415 = vadd.f32 0.0, %v2414
      %v2416 = vpop.f32.mrf.mxu0
      %2417 = vmatprep.mubr.bf16.mxu0 0
      %2418 = vmatmul.mubr.bf16.gmra.mxu0 %v1046
      %v2419 = vpop.f32.mrf.mxu0
      %v2420 = vadd.f32 0.0, %v2419
      %v2421 = vpop.f32.mrf.mxu0
      %v2422 = vpop.f32.mrf.mxu0
      %v2423 = vadd.f32 0.0, %v2422
      %v2424 = vpop.f32.mrf.mxu0
      %2425 = vmatprep.mubr.bf16.mxu0 0
      %2426 = vmatmul.mubr.bf16.gmra.mxu0 %v1049
      %v2427 = vpop.f32.mrf.mxu0
      %v2428 = vadd.f32 0.0, %v2427
      %v2429 = vpop.f32.mrf.mxu0
      %v2430 = vpop.f32.mrf.mxu0
      %v2431 = vadd.f32 0.0, %v2430
      %v2432 = vpop.f32.mrf.mxu0
      %2433 = vmatprep.mubr.bf16.mxu0 0
      %2434 = vmatmul.mubr.bf16.gmra.mxu0 %v1052
      %v2435 = vpop.f32.mrf.mxu0
      %v2436 = vadd.f32 0.0, %v2435
      %v2437 = vpop.f32.mrf.mxu0
      %v2438 = vpop.f32.mrf.mxu0
      %v2439 = vadd.f32 0.0, %v2438
      %v2440 = vpop.f32.mrf.mxu0
      %2441 = vmatprep.mubr.bf16.mxu0 0
      %2442 = vmatmul.mubr.bf16.gmra.mxu0 %v1055
      %v2443 = vpop.f32.mrf.mxu0
      %v2444 = vadd.f32 0.0, %v2443
      %v2445 = vpop.f32.mrf.mxu0
      %v2446 = vpop.f32.mrf.mxu0
      %v2447 = vadd.f32 0.0, %v2446
      %v2448 = vpop.f32.mrf.mxu0
      %2449 = vmatprep.mubr.bf16.mxu0 0
      %2450 = vmatmul.mubr.bf16.gmra.mxu0 %v1654
      %v2451 = vpop.f32.mrf.mxu0
      %v2452 = vadd.f32 0.0, %v2451
      %v2453 = vpop.f32.mrf.mxu0
      %v2454 = vpop.f32.mrf.mxu0
      %v2455 = vadd.f32 0.0, %v2454
      %v2456 = vpop.f32.mrf.mxu0
      %2457 = vmatprep.mubr.bf16.mxu0 0
      %2458 = vmatmul.mubr.bf16.gmra.mxu0 %v2300
      %v2459 = vpop.f32.mrf.mxu0
      %v2460 = vadd.f32 0.0, %v2459
      %v2461 = vpop.f32.mrf.mxu0
      %v2462 = vpop.f32.mrf.mxu0
      %v2463 = vadd.f32 0.0, %v2462
      %v2464 = vpop.f32.mrf.mxu0
      %2465 = vdwg.mxu0
      %v2466 = vadd.f32 %v2260, %v2340
      %v2467 = vadd.f32 %v2261, %v2343
      %v2468 = vadd.f32 %v2262, %v2348
      %v2469 = vadd.f32 %v2263, %v2351
      %v2470 = vadd.f32 %v2264, %v2356
      %v2471 = vadd.f32 %v2265, %v2359
      %v2472 = vadd.f32 %v2266, %v2364
      %v2473 = vadd.f32 %v2267, %v2367
      %v2474 = vadd.f32 %v2268, %v2372
      %v2475 = vadd.f32 %v2269, %v2375
      %v2476 = vadd.f32 %v2270, %v2380
      %v2477 = vadd.f32 %v2271, %v2383
      %v2478 = vadd.f32 %v2272, %v2388
      %v2479 = vadd.f32 %v2273, %v2391
      %v2480 = vadd.f32 %v2274, %v2396
      %v2481 = vadd.f32 %v2275, %v2399
      %v2482 = vadd.f32 %v2276, %v2404
      %v2483 = vadd.f32 %v2277, %v2407
      %v2484 = vadd.f32 %v2278, %v2412
      %v2485 = vadd.f32 %v2279, %v2415
      %v2486 = vadd.f32 %v2280, %v2420
      %v2487 = vadd.f32 %v2281, %v2423
      %v2488 = vadd.f32 %v2282, %v2428
      %v2489 = vadd.f32 %v2283, %v2431
      %v2490 = vadd.f32 %v2284, %v2436
      %v2491 = vadd.f32 %v2285, %v2439
      %v2492 = vadd.f32 %v2286, %v2444
      %v2493 = vadd.f32 %v2287, %v2447
      %v2494 = vadd.f32 %v2288, %v2452
      %v2495 = vadd.f32 %v2289, %v2455
      %v2496 = vadd.f32 %v2290, %v2460
      %v2497 = vadd.f32 %v2291, %v2463
      %v2499 = vshrl.u32 %v274, 16
      %v2501 = vrot.slane %v2499, 4
      %v2502 = vshll.u32 %v274, 16
      %v2504 = vrot.slane %v2502, 5
      %v2505 = vor.u32 %v2501, %v2504
      %v2506 = vrot.slane %v2505, 4
      %v2508 = vshll.u32 %v275, 16
      %v2510 = vrot.slane %v2508, 5
      %v2511 = vsel %vm280, %v2506, %v2510
      %v2512 = vshrl.u32 %v275, 16
      %v2514 = vrot.slane %v2512, 4
      %v2515 = vor.u32 %v2514, %v2510
      %v2516 = vrot.slane %v2515, 4
      %v2518 = vshll.u32 %v276, 16
      %v2520 = vrot.slane %v2518, 5
      %v2521 = vsel %vm280, %v2516, %v2520
      %s2522 = scalar_lea.vmem %s210, 14
      %v2523 = vld [vmem:[%s2522] sm:$0x3]
      %v2524 = vunpack.c.l.b16 %v2511
      %v2525 = vunpack.c.l.b16 %v2521
      %v2526 = vpack.c.b16 %v2525, %v2524
      %v2528 = vsel %vm715, %v2526, 0
      %v2531 = vsel %vm764, %v2523, 0
      %2533 = vmatprep.subr.bf16.mxu0 0
      %2534 = vmatpush1.bf16.msra.mxu0 0
      %2535 = vmatprep.subr.bf16.mxu0 0
      %2536 = vmatpush1.bf16.msra.mxu0 0
      %2537 = vmatprep.subr.bf16.mxu0 0
      %2538 = vmatpush1.bf16.msra.mxu0 0
      %2539 = vmatprep.subr.bf16.mxu0 0
      %2540 = vmatpush1.bf16.msra.mxu0 0
      %2541 = vmatprep.subr.bf16.mxu0 0
      %2542 = vmatpush1.bf16.msra.mxu0 0
      %2543 = vmatprep.subr.bf16.mxu0 0
      %2544 = vmatpush1.bf16.msra.mxu0 0
      %2545 = vmatprep.subr.bf16.mxu0 0
      %2546 = vmatpush1.bf16.msra.mxu0 0
      %2547 = vmatprep.subr.bf16.mxu0 0
      %2548 = vmatpush1.bf16.msra.mxu0 %v2531
      %2549 = vmatprep.subr.bf16.mxu0 0
      %2550 = vmatpush2.bf16.msra.mxu0 0
      %2551 = vmatprep.subr.bf16.mxu0 0
      %2552 = vmatpush2.bf16.msra.mxu0 0
      %2553 = vmatprep.subr.bf16.mxu0 0
      %2554 = vmatpush2.bf16.msra.mxu0 0
      %2555 = vmatprep.subr.bf16.mxu0 0
      %2556 = vmatpush2.bf16.msra.mxu0 0
      %2557 = vmatprep.subr.bf16.mxu0 0
      %2558 = vmatpush2.bf16.msra.mxu0 0
      %2559 = vmatprep.subr.bf16.mxu0 0
      %2560 = vmatpush2.bf16.msra.mxu0 0
      %2561 = vmatprep.subr.bf16.mxu0 0
      %2562 = vmatpush2.bf16.msra.mxu0 0
      %2563 = vmatprep.subr.bf16.mxu0 0
      %2564 = vmatpush2.bf16.msra.mxu0 0
      %2565 = vmatprep.mubr.bf16.mxu0 0
      %2566 = vmatmul.mubr.bf16.gmra.mxu0 %v723
      %v2567 = vpop.f32.mrf.mxu0
      %v2568 = vadd.f32 0.0, %v2567
      %v2569 = vpop.f32.mrf.mxu0
      %v2570 = vpop.f32.mrf.mxu0
      %v2571 = vadd.f32 0.0, %v2570
      %v2572 = vpop.f32.mrf.mxu0
      %2573 = vmatprep.mubr.bf16.mxu0 0
      %2574 = vmatmul.mubr.bf16.gmra.mxu0 %v726
      %v2575 = vpop.f32.mrf.mxu0
      %v2576 = vadd.f32 0.0, %v2575
      %v2577 = vpop.f32.mrf.mxu0
      %v2578 = vpop.f32.mrf.mxu0
      %v2579 = vadd.f32 0.0, %v2578
      %v2580 = vpop.f32.mrf.mxu0
      %2581 = vmatprep.mubr.bf16.mxu0 0
      %2582 = vmatmul.mubr.bf16.gmra.mxu0 %v729
      %v2583 = vpop.f32.mrf.mxu0
      %v2584 = vadd.f32 0.0, %v2583
      %v2585 = vpop.f32.mrf.mxu0
      %v2586 = vpop.f32.mrf.mxu0
      %v2587 = vadd.f32 0.0, %v2586
      %v2588 = vpop.f32.mrf.mxu0
      %2589 = vmatprep.mubr.bf16.mxu0 0
      %2590 = vmatmul.mubr.bf16.gmra.mxu0 %v732
      %v2591 = vpop.f32.mrf.mxu0
      %v2592 = vadd.f32 0.0, %v2591
      %v2593 = vpop.f32.mrf.mxu0
      %v2594 = vpop.f32.mrf.mxu0
      %v2595 = vadd.f32 0.0, %v2594
      %v2596 = vpop.f32.mrf.mxu0
      %2597 = vmatprep.mubr.bf16.mxu0 0
      %2598 = vmatmul.mubr.bf16.gmra.mxu0 %v735
      %v2599 = vpop.f32.mrf.mxu0
      %v2600 = vadd.f32 0.0, %v2599
      %v2601 = vpop.f32.mrf.mxu0
      %v2602 = vpop.f32.mrf.mxu0
      %v2603 = vadd.f32 0.0, %v2602
      %v2604 = vpop.f32.mrf.mxu0
      %2605 = vmatprep.mubr.bf16.mxu0 0
      %2606 = vmatmul.mubr.bf16.gmra.mxu0 %v738
      %v2607 = vpop.f32.mrf.mxu0
      %v2608 = vadd.f32 0.0, %v2607
      %v2609 = vpop.f32.mrf.mxu0
      %v2610 = vpop.f32.mrf.mxu0
      %v2611 = vadd.f32 0.0, %v2610
      %v2612 = vpop.f32.mrf.mxu0
      %2613 = vmatprep.mubr.bf16.mxu0 0
      %2614 = vmatmul.mubr.bf16.gmra.mxu0 %v741
      %v2615 = vpop.f32.mrf.mxu0
      %v2616 = vadd.f32 0.0, %v2615
      %v2617 = vpop.f32.mrf.mxu0
      %v2618 = vpop.f32.mrf.mxu0
      %v2619 = vadd.f32 0.0, %v2618
      %v2620 = vpop.f32.mrf.mxu0
      %2621 = vmatprep.mubr.bf16.mxu0 0
      %2622 = vmatmul.mubr.bf16.gmra.mxu0 %v744
      %v2623 = vpop.f32.mrf.mxu0
      %v2624 = vadd.f32 0.0, %v2623
      %v2625 = vpop.f32.mrf.mxu0
      %v2626 = vpop.f32.mrf.mxu0
      %v2627 = vadd.f32 0.0, %v2626
      %v2628 = vpop.f32.mrf.mxu0
      %2629 = vmatprep.mubr.bf16.mxu0 0
      %2630 = vmatmul.mubr.bf16.gmra.mxu0 %v747
      %v2631 = vpop.f32.mrf.mxu0
      %v2632 = vadd.f32 0.0, %v2631
      %v2633 = vpop.f32.mrf.mxu0
      %v2634 = vpop.f32.mrf.mxu0
      %v2635 = vadd.f32 0.0, %v2634
      %v2636 = vpop.f32.mrf.mxu0
      %2637 = vmatprep.mubr.bf16.mxu0 0
      %2638 = vmatmul.mubr.bf16.gmra.mxu0 %v750
      %v2639 = vpop.f32.mrf.mxu0
      %v2640 = vadd.f32 0.0, %v2639
      %v2641 = vpop.f32.mrf.mxu0
      %v2642 = vpop.f32.mrf.mxu0
      %v2643 = vadd.f32 0.0, %v2642
      %v2644 = vpop.f32.mrf.mxu0
      %2645 = vmatprep.mubr.bf16.mxu0 0
      %2646 = vmatmul.mubr.bf16.gmra.mxu0 %v753
      %v2647 = vpop.f32.mrf.mxu0
      %v2648 = vadd.f32 0.0, %v2647
      %v2649 = vpop.f32.mrf.mxu0
      %v2650 = vpop.f32.mrf.mxu0
      %v2651 = vadd.f32 0.0, %v2650
      %v2652 = vpop.f32.mrf.mxu0
      %2653 = vmatprep.mubr.bf16.mxu0 0
      %2654 = vmatmul.mubr.bf16.gmra.mxu0 %v756
      %v2655 = vpop.f32.mrf.mxu0
      %v2656 = vadd.f32 0.0, %v2655
      %v2657 = vpop.f32.mrf.mxu0
      %v2658 = vpop.f32.mrf.mxu0
      %v2659 = vadd.f32 0.0, %v2658
      %v2660 = vpop.f32.mrf.mxu0
      %2661 = vmatprep.mubr.bf16.mxu0 0
      %2662 = vmatmul.mubr.bf16.gmra.mxu0 %v759
      %v2663 = vpop.f32.mrf.mxu0
      %v2664 = vadd.f32 0.0, %v2663
      %v2665 = vpop.f32.mrf.mxu0
      %v2666 = vpop.f32.mrf.mxu0
      %v2667 = vadd.f32 0.0, %v2666
      %v2668 = vpop.f32.mrf.mxu0
      %2669 = vmatprep.mubr.bf16.mxu0 0
      %2670 = vmatmul.mubr.bf16.gmra.mxu0 %v762
      %v2671 = vpop.f32.mrf.mxu0
      %v2672 = vadd.f32 0.0, %v2671
      %v2673 = vpop.f32.mrf.mxu0
      %v2674 = vpop.f32.mrf.mxu0
      %v2675 = vadd.f32 0.0, %v2674
      %v2676 = vpop.f32.mrf.mxu0
      %2677 = vmatprep.mubr.bf16.mxu0 0
      %2678 = vmatmul.mubr.bf16.gmra.mxu0 %v1882
      %v2679 = vpop.f32.mrf.mxu0
      %v2680 = vadd.f32 0.0, %v2679
      %v2681 = vpop.f32.mrf.mxu0
      %v2682 = vpop.f32.mrf.mxu0
      %v2683 = vadd.f32 0.0, %v2682
      %v2684 = vpop.f32.mrf.mxu0
      %2685 = vmatprep.mubr.bf16.mxu0 0
      %2686 = vmatmul.mubr.bf16.gmra.mxu0 %v2528
      %v2687 = vpop.f32.mrf.mxu0
      %v2688 = vadd.f32 0.0, %v2687
      %v2689 = vpop.f32.mrf.mxu0
      %v2690 = vpop.f32.mrf.mxu0
      %v2691 = vadd.f32 0.0, %v2690
      %v2692 = vpop.f32.mrf.mxu0
      %2693 = vdwg.mxu0
      %v2694 = vadd.f32 %v2466, %v2568
      %v2695 = vadd.f32 %v2467, %v2571
      %v2696 = vadd.f32 %v2468, %v2576
      %v2697 = vadd.f32 %v2469, %v2579
      %v2698 = vadd.f32 %v2470, %v2584
      %v2699 = vadd.f32 %v2471, %v2587
      %v2700 = vadd.f32 %v2472, %v2592
      %v2701 = vadd.f32 %v2473, %v2595
      %v2702 = vadd.f32 %v2474, %v2600
      %v2703 = vadd.f32 %v2475, %v2603
      %v2704 = vadd.f32 %v2476, %v2608
      %v2705 = vadd.f32 %v2477, %v2611
      %v2706 = vadd.f32 %v2478, %v2616
      %v2707 = vadd.f32 %v2479, %v2619
      %v2708 = vadd.f32 %v2480, %v2624
      %v2709 = vadd.f32 %v2481, %v2627
      %v2710 = vadd.f32 %v2482, %v2632
      %v2711 = vadd.f32 %v2483, %v2635
      %v2712 = vadd.f32 %v2484, %v2640
      %v2713 = vadd.f32 %v2485, %v2643
      %v2714 = vadd.f32 %v2486, %v2648
      %v2715 = vadd.f32 %v2487, %v2651
      %v2716 = vadd.f32 %v2488, %v2656
      %v2717 = vadd.f32 %v2489, %v2659
      %v2718 = vadd.f32 %v2490, %v2664
      %v2719 = vadd.f32 %v2491, %v2667
      %v2720 = vadd.f32 %v2492, %v2672
      %v2721 = vadd.f32 %v2493, %v2675
      %v2722 = vadd.f32 %v2494, %v2680
      %v2723 = vadd.f32 %v2495, %v2683
      %v2724 = vadd.f32 %v2496, %v2688
      %v2725 = vadd.f32 %v2497, %v2691
      %v2727 = vrot.slane %v274, 5
      %v2728 = vrot.slane %v2727, 4
      %v2729 = vrot.slane %v275, 5
      %v2730 = vsel %vm1239, %v2728, %v2729
      %v2731 = vrot.slane %v2729, 4
      %v2732 = vrot.slane %v276, 5
      %v2733 = vsel %vm1239, %v2731, %v2732
      %s2734 = scalar_lea.vmem %s210, 16
      %v2735 = vld [vmem:[%s2734] sm:$0x3]
      %v2736 = vunpack.c.l.b16 %v2730
      %v2737 = vunpack.c.l.b16 %v2733
      %v2738 = vpack.c.b16 %v2737, %v2736
      %v2740 = vsel %vm715, %v2738, 0
      %v2743 = vsel %vm764, %v2735, 0
      %2745 = vmatprep.subr.bf16.mxu0 0
      %2746 = vmatpush1.bf16.msra.mxu0 0
      %2747 = vmatprep.subr.bf16.mxu0 0
      %2748 = vmatpush1.bf16.msra.mxu0 0
      %2749 = vmatprep.subr.bf16.mxu0 0
      %2750 = vmatpush1.bf16.msra.mxu0 0
      %2751 = vmatprep.subr.bf16.mxu0 0
      %2752 = vmatpush1.bf16.msra.mxu0 0
      %2753 = vmatprep.subr.bf16.mxu0 0
      %2754 = vmatpush1.bf16.msra.mxu0 0
      %2755 = vmatprep.subr.bf16.mxu0 0
      %2756 = vmatpush1.bf16.msra.mxu0 0
      %2757 = vmatprep.subr.bf16.mxu0 0
      %2758 = vmatpush1.bf16.msra.mxu0 0
      %2759 = vmatprep.subr.bf16.mxu0 0
      %2760 = vmatpush1.bf16.msra.mxu0 %v2743
      %2761 = vmatprep.subr.bf16.mxu0 0
      %2762 = vmatpush2.bf16.msra.mxu0 0
      %2763 = vmatprep.subr.bf16.mxu0 0
      %2764 = vmatpush2.bf16.msra.mxu0 0
      %2765 = vmatprep.subr.bf16.mxu0 0
      %2766 = vmatpush2.bf16.msra.mxu0 0
      %2767 = vmatprep.subr.bf16.mxu0 0
      %2768 = vmatpush2.bf16.msra.mxu0 0
      %2769 = vmatprep.subr.bf16.mxu0 0
      %2770 = vmatpush2.bf16.msra.mxu0 0
      %2771 = vmatprep.subr.bf16.mxu0 0
      %2772 = vmatpush2.bf16.msra.mxu0 0
      %2773 = vmatprep.subr.bf16.mxu0 0
      %2774 = vmatpush2.bf16.msra.mxu0 0
      %2775 = vmatprep.subr.bf16.mxu0 0
      %2776 = vmatpush2.bf16.msra.mxu0 0
      %2777 = vmatprep.mubr.bf16.mxu0 0
      %2778 = vmatmul.mubr.bf16.gmra.mxu0 %v1409
      %v2779 = vpop.f32.mrf.mxu0
      %v2780 = vadd.f32 0.0, %v2779
      %v2781 = vpop.f32.mrf.mxu0
      %v2782 = vpop.f32.mrf.mxu0
      %v2783 = vadd.f32 0.0, %v2782
      %v2784 = vpop.f32.mrf.mxu0
      %2785 = vmatprep.mubr.bf16.mxu0 0
      %2786 = vmatmul.mubr.bf16.gmra.mxu0 %v1412
      %v2787 = vpop.f32.mrf.mxu0
      %v2788 = vadd.f32 0.0, %v2787
      %v2789 = vpop.f32.mrf.mxu0
      %v2790 = vpop.f32.mrf.mxu0
      %v2791 = vadd.f32 0.0, %v2790
      %v2792 = vpop.f32.mrf.mxu0
      %2793 = vmatprep.mubr.bf16.mxu0 0
      %2794 = vmatmul.mubr.bf16.gmra.mxu0 %v1415
      %v2795 = vpop.f32.mrf.mxu0
      %v2796 = vadd.f32 0.0, %v2795
      %v2797 = vpop.f32.mrf.mxu0
      %v2798 = vpop.f32.mrf.mxu0
      %v2799 = vadd.f32 0.0, %v2798
      %v2800 = vpop.f32.mrf.mxu0
      %2801 = vmatprep.mubr.bf16.mxu0 0
      %2802 = vmatmul.mubr.bf16.gmra.mxu0 %v1418
      %v2803 = vpop.f32.mrf.mxu0
      %v2804 = vadd.f32 0.0, %v2803
      %v2805 = vpop.f32.mrf.mxu0
      %v2806 = vpop.f32.mrf.mxu0
      %v2807 = vadd.f32 0.0, %v2806
      %v2808 = vpop.f32.mrf.mxu0
      %2809 = vmatprep.mubr.bf16.mxu0 0
      %2810 = vmatmul.mubr.bf16.gmra.mxu0 %v1421
      %v2811 = vpop.f32.mrf.mxu0
      %v2812 = vadd.f32 0.0, %v2811
      %v2813 = vpop.f32.mrf.mxu0
      %v2814 = vpop.f32.mrf.mxu0
      %v2815 = vadd.f32 0.0, %v2814
      %v2816 = vpop.f32.mrf.mxu0
      %2817 = vmatprep.mubr.bf16.mxu0 0
      %2818 = vmatmul.mubr.bf16.gmra.mxu0 %v1424
      %v2819 = vpop.f32.mrf.mxu0
      %v2820 = vadd.f32 0.0, %v2819
      %v2821 = vpop.f32.mrf.mxu0
      %v2822 = vpop.f32.mrf.mxu0
      %v2823 = vadd.f32 0.0, %v2822
      %v2824 = vpop.f32.mrf.mxu0
      %2825 = vmatprep.mubr.bf16.mxu0 0
      %2826 = vmatmul.mubr.bf16.gmra.mxu0 %v1427
      %v2827 = vpop.f32.mrf.mxu0
      %v2828 = vadd.f32 0.0, %v2827
      %v2829 = vpop.f32.mrf.mxu0
      %v2830 = vpop.f32.mrf.mxu0
      %v2831 = vadd.f32 0.0, %v2830
      %v2832 = vpop.f32.mrf.mxu0
      %2833 = vmatprep.mubr.bf16.mxu0 0
      %2834 = vmatmul.mubr.bf16.gmra.mxu0 %v1430
      %v2835 = vpop.f32.mrf.mxu0
      %v2836 = vadd.f32 0.0, %v2835
      %v2837 = vpop.f32.mrf.mxu0
      %v2838 = vpop.f32.mrf.mxu0
      %v2839 = vadd.f32 0.0, %v2838
      %v2840 = vpop.f32.mrf.mxu0
      %2841 = vmatprep.mubr.bf16.mxu0 0
      %2842 = vmatmul.mubr.bf16.gmra.mxu0 %v1433
      %v2843 = vpop.f32.mrf.mxu0
      %v2844 = vadd.f32 0.0, %v2843
      %v2845 = vpop.f32.mrf.mxu0
      %v2846 = vpop.f32.mrf.mxu0
      %v2847 = vadd.f32 0.0, %v2846
      %v2848 = vpop.f32.mrf.mxu0
      %2849 = vmatprep.mubr.bf16.mxu0 0
      %2850 = vmatmul.mubr.bf16.gmra.mxu0 %v1436
      %v2851 = vpop.f32.mrf.mxu0
      %v2852 = vadd.f32 0.0, %v2851
      %v2853 = vpop.f32.mrf.mxu0
      %v2854 = vpop.f32.mrf.mxu0
      %v2855 = vadd.f32 0.0, %v2854
      %v2856 = vpop.f32.mrf.mxu0
      %2857 = vmatprep.mubr.bf16.mxu0 0
      %2858 = vmatmul.mubr.bf16.gmra.mxu0 %v1439
      %v2859 = vpop.f32.mrf.mxu0
      %v2860 = vadd.f32 0.0, %v2859
      %v2861 = vpop.f32.mrf.mxu0
      %v2862 = vpop.f32.mrf.mxu0
      %v2863 = vadd.f32 0.0, %v2862
      %v2864 = vpop.f32.mrf.mxu0
      %2865 = vmatprep.mubr.bf16.mxu0 0
      %2866 = vmatmul.mubr.bf16.gmra.mxu0 %v1442
      %v2867 = vpop.f32.mrf.mxu0
      %v2868 = vadd.f32 0.0, %v2867
      %v2869 = vpop.f32.mrf.mxu0
      %v2870 = vpop.f32.mrf.mxu0
      %v2871 = vadd.f32 0.0, %v2870
      %v2872 = vpop.f32.mrf.mxu0
      %2873 = vmatprep.mubr.bf16.mxu0 0
      %2874 = vmatmul.mubr.bf16.gmra.mxu0 %v1445
      %v2875 = vpop.f32.mrf.mxu0
      %v2876 = vadd.f32 0.0, %v2875
      %v2877 = vpop.f32.mrf.mxu0
      %v2878 = vpop.f32.mrf.mxu0
      %v2879 = vadd.f32 0.0, %v2878
      %v2880 = vpop.f32.mrf.mxu0
      %2881 = vmatprep.mubr.bf16.mxu0 0
      %2882 = vmatmul.mubr.bf16.gmra.mxu0 %v1448
      %v2883 = vpop.f32.mrf.mxu0
      %v2884 = vadd.f32 0.0, %v2883
      %v2885 = vpop.f32.mrf.mxu0
      %v2886 = vpop.f32.mrf.mxu0
      %v2887 = vadd.f32 0.0, %v2886
      %v2888 = vpop.f32.mrf.mxu0
      %2889 = vmatprep.mubr.bf16.mxu0 0
      %2890 = vmatmul.mubr.bf16.gmra.mxu0 %v2094
      %v2891 = vpop.f32.mrf.mxu0
      %v2892 = vadd.f32 0.0, %v2891
      %v2893 = vpop.f32.mrf.mxu0
      %v2894 = vpop.f32.mrf.mxu0
      %v2895 = vadd.f32 0.0, %v2894
      %v2896 = vpop.f32.mrf.mxu0
      %2897 = vmatprep.mubr.bf16.mxu0 0
      %2898 = vmatmul.mubr.bf16.gmra.mxu0 %v2740
      %v2899 = vpop.f32.mrf.mxu0
      %v2900 = vadd.f32 0.0, %v2899
      %v2901 = vpop.f32.mrf.mxu0
      %v2902 = vpop.f32.mrf.mxu0
      %v2903 = vadd.f32 0.0, %v2902
      %v2904 = vpop.f32.mrf.mxu0
      %2905 = vdwg.mxu0
      %v2906 = vadd.f32 %v2694, %v2780
      %v2907 = vadd.f32 %v2695, %v2783
      %v2908 = vadd.f32 %v2696, %v2788
      %v2909 = vadd.f32 %v2697, %v2791
      %v2910 = vadd.f32 %v2698, %v2796
      %v2911 = vadd.f32 %v2699, %v2799
      %v2912 = vadd.f32 %v2700, %v2804
      %v2913 = vadd.f32 %v2701, %v2807
      %v2914 = vadd.f32 %v2702, %v2812
      %v2915 = vadd.f32 %v2703, %v2815
      %v2916 = vadd.f32 %v2704, %v2820
      %v2917 = vadd.f32 %v2705, %v2823
      %v2918 = vadd.f32 %v2706, %v2828
      %v2919 = vadd.f32 %v2707, %v2831
      %v2920 = vadd.f32 %v2708, %v2836
      %v2921 = vadd.f32 %v2709, %v2839
      %v2922 = vadd.f32 %v2710, %v2844
      %v2923 = vadd.f32 %v2711, %v2847
      %v2924 = vadd.f32 %v2712, %v2852
      %v2925 = vadd.f32 %v2713, %v2855
      %v2926 = vadd.f32 %v2714, %v2860
      %v2927 = vadd.f32 %v2715, %v2863
      %v2928 = vadd.f32 %v2716, %v2868
      %v2929 = vadd.f32 %v2717, %v2871
      %v2930 = vadd.f32 %v2718, %v2876
      %v2931 = vadd.f32 %v2719, %v2879
      %v2932 = vadd.f32 %v2720, %v2884
      %v2933 = vadd.f32 %v2721, %v2887
      %v2934 = vadd.f32 %v2722, %v2892
      %v2935 = vadd.f32 %v2723, %v2895
      %v2936 = vadd.f32 %v2724, %v2900
      %v2937 = vadd.f32 %v2725, %v2903
      %v2938 = vld [vmem:[%s213] sm:$0x1]
      %v2940 = vlaneseq
      %v2941 = vshrl.u32 %v2940, 7
      %v2942 = vsub.s32 0, %v2941
      %v2943 = vrot.slane %v2938, %v2942
      %v2945 = vadd.f32 %v2906, %v2943
      %v2946 = vadd.f32 %v2907, %v2943
      %v2947 = vadd.f32 %v2908, %v2943
      %v2948 = vadd.f32 %v2909, %v2943
      %v2949 = vadd.f32 %v2910, %v2943
      %v2950 = vadd.f32 %v2911, %v2943
      %v2951 = vadd.f32 %v2912, %v2943
      %v2952 = vadd.f32 %v2913, %v2943
      %v2953 = vadd.f32 %v2914, %v2943
      %v2954 = vadd.f32 %v2915, %v2943
      %v2955 = vadd.f32 %v2916, %v2943
      %v2956 = vadd.f32 %v2917, %v2943
      %v2957 = vadd.f32 %v2918, %v2943
      %v2958 = vadd.f32 %v2919, %v2943
      %v2959 = vadd.f32 %v2920, %v2943
      %v2960 = vadd.f32 %v2921, %v2943
      %v2961 = vadd.f32 %v2922, %v2943
      %v2962 = vadd.f32 %v2923, %v2943
      %v2963 = vadd.f32 %v2924, %v2943
      %v2964 = vadd.f32 %v2925, %v2943
      %v2965 = vadd.f32 %v2926, %v2943
      %v2966 = vadd.f32 %v2927, %v2943
      %v2967 = vadd.f32 %v2928, %v2943
      %v2968 = vadd.f32 %v2929, %v2943
      %v2969 = vadd.f32 %v2930, %v2943
      %v2970 = vadd.f32 %v2931, %v2943
      %v2971 = vadd.f32 %v2932, %v2943
      %v2972 = vadd.f32 %v2933, %v2943
      %v2973 = vadd.f32 %v2934, %v2943
      %v2974 = vadd.f32 %v2935, %v2943
      %v2975 = vadd.f32 %v2936, %v2943
      %v2976 = vadd.f32 %v2937, %v2943
      %v2977 = vmax.f32 %v2945, 0.0
      %v2978 = vmax.f32 %v2946, 0.0
      %v2979 = vmax.f32 %v2947, 0.0
      %v2980 = vmax.f32 %v2948, 0.0
      %v2981 = vmax.f32 %v2949, 0.0
      %v2982 = vmax.f32 %v2950, 0.0
      %v2983 = vmax.f32 %v2951, 0.0
      %v2984 = vmax.f32 %v2952, 0.0
      %v2985 = vmax.f32 %v2953, 0.0
      %v2986 = vmax.f32 %v2954, 0.0
      %v2987 = vmax.f32 %v2955, 0.0
      %v2988 = vmax.f32 %v2956, 0.0
      %v2989 = vmax.f32 %v2957, 0.0
      %v2990 = vmax.f32 %v2958, 0.0
      %v2991 = vmax.f32 %v2959, 0.0
      %v2992 = vmax.f32 %v2960, 0.0
      %v2993 = vmax.f32 %v2961, 0.0
      %v2994 = vmax.f32 %v2962, 0.0
      %v2995 = vmax.f32 %v2963, 0.0
      %v2996 = vmax.f32 %v2964, 0.0
      %v2997 = vmax.f32 %v2965, 0.0
      %v2998 = vmax.f32 %v2966, 0.0
      %v2999 = vmax.f32 %v2967, 0.0
      %v3000 = vmax.f32 %v2968, 0.0
      %v3001 = vmax.f32 %v2969, 0.0
      %v3002 = vmax.f32 %v2970, 0.0
      %v3003 = vmax.f32 %v2971, 0.0
      %v3004 = vmax.f32 %v2972, 0.0
      %v3005 = vmax.f32 %v2973, 0.0
      %v3006 = vmax.f32 %v2974, 0.0
      %v3007 = vmax.f32 %v2975, 0.0
      %v3008 = vmax.f32 %v2976, 0.0
      %v3009 = vpack.c.bf16 %v2978, %v2977
      %v3010 = vpack.c.bf16 %v2980, %v2979
      %v3011 = vpack.c.bf16 %v2982, %v2981
      %v3012 = vpack.c.bf16 %v2984, %v2983
      %v3013 = vpack.c.bf16 %v2986, %v2985
      %v3014 = vpack.c.bf16 %v2988, %v2987
      %v3015 = vpack.c.bf16 %v2990, %v2989
      %v3016 = vpack.c.bf16 %v2992, %v2991
      %v3017 = vpack.c.bf16 %v2994, %v2993
      %v3018 = vpack.c.bf16 %v2996, %v2995
      %v3019 = vpack.c.bf16 %v2998, %v2997
      %v3020 = vpack.c.bf16 %v3000, %v2999
      %v3021 = vpack.c.bf16 %v3002, %v3001
      %v3022 = vpack.c.bf16 %v3004, %v3003
      %v3023 = vpack.c.bf16 %v3006, %v3005
      %v3024 = vpack.c.bf16 %v3008, %v3007
      %v3041 = vunpack.c.l.b16 %v3009
      %v3042 = vunpack.c.h.b16 %v3009
      %v3043 = vunpack.c.l.b16 %v3010
      %v3044 = vunpack.c.h.b16 %v3010
      %v3045 = vunpack.c.l.b16 %v3011
      %v3046 = vunpack.c.h.b16 %v3011
      %v3047 = vunpack.c.l.b16 %v3012
      %v3048 = vunpack.c.h.b16 %v3012
      %v3049 = vunpack.c.l.b16 %v3013
      %v3050 = vunpack.c.h.b16 %v3013
      %v3051 = vunpack.c.l.b16 %v3014
      %v3052 = vunpack.c.h.b16 %v3014
      %v3053 = vunpack.c.l.b16 %v3015
      %v3054 = vunpack.c.h.b16 %v3015
      %v3055 = vunpack.c.l.b16 %v3016
      %v3056 = vunpack.c.h.b16 %v3016
      %v3057 = vunpack.c.l.b16 %v3017
      %v3058 = vunpack.c.h.b16 %v3017
      %v3059 = vunpack.c.l.b16 %v3018
      %v3060 = vunpack.c.h.b16 %v3018
      %v3061 = vunpack.c.l.b16 %v3019
      %v3062 = vunpack.c.h.b16 %v3019
      %v3063 = vunpack.c.l.b16 %v3020
      %v3064 = vunpack.c.h.b16 %v3020
      %v3065 = vunpack.c.l.b16 %v3021
      %v3066 = vunpack.c.h.b16 %v3021
      %v3067 = vunpack.c.l.b16 %v3022
      %v3068 = vunpack.c.h.b16 %v3022
      %v3069 = vunpack.c.l.b16 %v3023
      %v3070 = vunpack.c.h.b16 %v3023
      %v3071 = vunpack.c.l.b16 %v3024
      %v3072 = vunpack.c.h.b16 %v3024
      %v3073 = vpack.c.b16 %v3041, %v3041
      %v3074 = vpack.c.b16 %v3042, %v3042
      %v3075 = vpack.c.b16 %v3043, %v3043
      %v3076 = vpack.c.b16 %v3044, %v3044
      %v3077 = vpack.c.b16 %v3045, %v3045
      %v3078 = vpack.c.b16 %v3046, %v3046
      %v3079 = vpack.c.b16 %v3047, %v3047
      %v3080 = vpack.c.b16 %v3048, %v3048
      %v3081 = vpack.c.b16 %v3049, %v3049
      %v3082 = vpack.c.b16 %v3050, %v3050
      %v3083 = vpack.c.b16 %v3051, %v3051
      %v3084 = vpack.c.b16 %v3052, %v3052
      %v3085 = vpack.c.b16 %v3053, %v3053
      %v3086 = vpack.c.b16 %v3054, %v3054
      %v3087 = vpack.c.b16 %v3055, %v3055
      %v3088 = vpack.c.b16 %v3056, %v3056
      %v3089 = vpack.c.b16 %v3057, %v3057
      %v3090 = vpack.c.b16 %v3058, %v3058
      %v3091 = vpack.c.b16 %v3059, %v3059
      %v3092 = vpack.c.b16 %v3060, %v3060
      %v3093 = vpack.c.b16 %v3061, %v3061
      %v3094 = vpack.c.b16 %v3062, %v3062
      %v3095 = vpack.c.b16 %v3063, %v3063
      %v3096 = vpack.c.b16 %v3064, %v3064
      %v3097 = vpack.c.b16 %v3065, %v3065
      %v3098 = vpack.c.b16 %v3066, %v3066
      %v3099 = vpack.c.b16 %v3067, %v3067
      %v3100 = vpack.c.b16 %v3068, %v3068
      %v3101 = vpack.c.b16 %v3069, %v3069
      %v3102 = vpack.c.b16 %v3070, %v3070
      %v3103 = vpack.c.b16 %v3071, %v3071
      %v3104 = vpack.c.b16 %v3072, %v3072
      %vm3137 = vcmask 60416
      %3138 = vst.msk [vmem:[%s221] sm:$0xf] %vm3137, %v3073
      %3139 = vst.msk [vmem:[%s221 + $0x4] sm:$0xf] %vm3137, %v3074
      %3140 = vst.msk [vmem:[%s221 + $0x8] sm:$0xf] %vm3137, %v3075
      %3141 = vst.msk [vmem:[%s221 + $0xc] sm:$0xf] %vm3137, %v3076
      %3142 = vst.msk [vmem:[%s221 + $0x10] sm:$0xf] %vm3137, %v3077
      %3143 = vst.msk [vmem:[%s221 + $0x14] sm:$0xf] %vm3137, %v3078
      %3144 = vst.msk [vmem:[%s221 + $0x18] sm:$0xf] %vm3137, %v3079
      %3145 = vst.msk [vmem:[%s221 + $0x1c] sm:$0xf] %vm3137, %v3080
      %3146 = vst.msk [vmem:[%s221 + $0x20] sm:$0xf] %vm3137, %v3081
      %3147 = vst.msk [vmem:[%s221 + $0x24] sm:$0xf] %vm3137, %v3082
      %3148 = vst.msk [vmem:[%s221 + $0x28] sm:$0xf] %vm3137, %v3083
      %3149 = vst.msk [vmem:[%s221 + $0x2c] sm:$0xf] %vm3137, %v3084
      %3150 = vst.msk [vmem:[%s221 + $0x30] sm:$0xf] %vm3137, %v3085
      %3151 = vst.msk [vmem:[%s221 + $0x34] sm:$0xf] %vm3137, %v3086
      %3152 = vst.msk [vmem:[%s221 + $0x38] sm:$0xf] %vm3137, %v3087
      %3153 = vst.msk [vmem:[%s221 + $0x3c] sm:$0xf] %vm3137, %v3088
      %3154 = vst.msk [vmem:[%s221 + $0x40] sm:$0xf] %vm3137, %v3089
      %3155 = vst.msk [vmem:[%s221 + $0x44] sm:$0xf] %vm3137, %v3090
      %3156 = vst.msk [vmem:[%s221 + $0x48] sm:$0xf] %vm3137, %v3091
      %3157 = vst.msk [vmem:[%s221 + $0x4c] sm:$0xf] %vm3137, %v3092
      %3158 = vst.msk [vmem:[%s221 + $0x50] sm:$0xf] %vm3137, %v3093
      %3159 = vst.msk [vmem:[%s221 + $0x54] sm:$0xf] %vm3137, %v3094
      %3160 = vst.msk [vmem:[%s221 + $0x58] sm:$0xf] %vm3137, %v3095
      %3161 = vst.msk [vmem:[%s221 + $0x5c] sm:$0xf] %vm3137, %v3096
      %3162 = vst.msk [vmem:[%s221 + $0x60] sm:$0xf] %vm3137, %v3097
      %3163 = vst.msk [vmem:[%s221 + $0x64] sm:$0xf] %vm3137, %v3098
      %3164 = vst.msk [vmem:[%s221 + $0x68] sm:$0xf] %vm3137, %v3099
      %3165 = vst.msk [vmem:[%s221 + $0x6c] sm:$0xf] %vm3137, %v3100
      %3166 = vst.msk [vmem:[%s221 + $0x70] sm:$0xf] %vm3137, %v3101
      %3167 = vst.msk [vmem:[%s221 + $0x74] sm:$0xf] %vm3137, %v3102
      %3168 = vst.msk [vmem:[%s221 + $0x78] sm:$0xf] %vm3137, %v3103
      %3169 = vst.msk [vmem:[%s221 + $0x7c] sm:$0xf] %vm3137, %v3104
      %p3170 = scmp.lt.s32.totalorder %s18, 1
      %s3171 = scalar_select %p3170, %s18, 1
      %p3172 = scmp.lt.s32.totalorder %s19, 0
      %s3173 = scalar_select %p3172, %s19, 0
      %s3174 = smul.addr %s3171, 32
      %s3175 = sadd.s32 %s3173, %s3174
      %s3176 = smul.addr %s3175, 4
      %s3177 = scalar_lea.vmem %s3, %s3176
      // Predicated region
      $region33: #{double_conv.2} parent=31 // pred_check
        %p3178 = pneg %p124
      $region34: #{double_conv.2} parent=31 // pred_check_branch
        %3180 = sbr.rel (%p3178) target = $region36
      $region35: #{double_conv.2} parent=31 // pred_region
        _
      $region36: #{double_conv.2} parent=31 // pred_fallthru
        _
    $region32: #{double_conv.2} parent=5 // pred_fallthru
      _
    %p3181 = scmp.le.s32.totalorder 2, %s9
    // Predicated region
    $region37: #{double_conv.2} parent=5 // pred_check
      %p3182 = pneg %p3181
    $region38: #{double_conv.2} parent=5 // pred_check_branch
      %3184 = sbr.rel (%p3182) target = $region40
    $region39: #{double_conv.2} parent=5 // pred_region
      %s3185 = ssub.s32 %s9, 2
      // Predicated region
      $region41: #{double_conv.2} parent=39 // pred_check
        %p3186 = pneg %p130
      $region42: #{double_conv.2} parent=39 // pred_check_branch
        %3188 = sbr.rel (%p3186) target = $region44
      $region43: #{double_conv.2} parent=39 // pred_region
        %p3189 = scmp.lt.s32.totalorder %s20, 1
        %s3190 = scalar_select %p3189, %s20, 1
        %p3191 = scmp.lt.s32.totalorder %s21, 0
        %s3192 = scalar_select %p3191, %s21, 0
        %s3193 = smul.addr %s3190, 32
        %s3194 = sadd.s32 %s3192, %s3193
        %s3195 = smul.addr %s3194, 4
        %s3196 = scalar_lea.vmem %s3, %s3195
      $region44: #{double_conv.2} parent=39 // pred_fallthru
        _
    $region40: #{double_conv.2} parent=5 // pred_fallthru
      _
  $region6: #{double_conv.2} parent=0 // loop_footer
    %s13 = sadd.s32 1, %s9
  $region7: #{double_conv.2} parent=0 // loop_footer_branch
    %8 = sbr.rel target = $region3
  $region8: #{double_conv.2} parent=0 // loop_exit
    _

// kernel: double_conv.3
$region0: #{double_conv.3}
  #allocation0 [shape = 'u32[]', space=smem, size = 0x4, offset = 0x4, fixed_abs, tag = 'smem constant byte address 0x4 - core index']
  #allocation1 [shape = 'u32[144,128]{1,0:T(1,128)}', space=vmem, size = 0x12000, scoped, tag = 'internal scratch']
  %s0 = inlined_call_operand.vmem [shape: bf16[2,18,18,8], index: 0, kind: input, shape index: {}]
  %s1 = inlined_call_operand.vmem [shape: bf16[9,8,8], index: 1, kind: input, shape index: {}]
  %s2 = inlined_call_operand.vmem [shape: f32[1,8], index: 2, kind: input, shape index: {}]
  %s3 = inlined_call_operand.vmem [shape: f32[2,16,16,8], index: 3, kind: output, shape index: {}]
  %s4 = sld [smem:[#allocation0]]
  $region45: #{double_conv.3} parent=0
    _
  %s6 = ssub.s32 1, %s4
  %s7 = scalar_select 0, %s6, %s4
  loop: start=0, step=1, limit=4
  $region2: #{double_conv.3} parent=0 // loop_pre_header
    _
  $region3: #{double_conv.3} parent=0 // loop_header
    %s9 = sphi 0, %s13
    %p10 = scmp.ge.s32.totalorder %s9, 4
    %s16 = sphi 0, %s28
    %s17 = sphi 0, %s24
    %s18 = sphi 0, %s16
    %s19 = sphi 0, %s17
    %s20 = sphi 0, %s18
    %s21 = sphi 0, %s19
    %s31 = sphi 0, %s33
    %s34 = sphi 0, %s31
    %s35 = sphi 0, %s34
    %s51 = sphi 0, %s35
    %s57 = sphi 0, %s59
    %s60 = sphi 0, %s57
    %s61 = sphi 0, %s60
    %s77 = sphi 0, %s61
    %s83 = sphi 0, %s85
    %s86 = sphi 0, %s83
    %s87 = sphi 0, %s86
    %s103 = sphi 0, %s87
    %s111 = sphi 0, %s113
    %s114 = sphi 0, %s111
    %s115 = sphi 0, %s114
    %s131 = sphi 0, %s115
  $region4: #{double_conv.3} parent=0 // loop_header_branch
    %12 = sbr.rel (%p10) target = $region8
  $region5: #{double_conv.3} parent=0 // loop_body
    %s14 = ssub.s32 %s9, 1
    %s15 = ssub.s32 %s9, 2
    %s22 = sadd.s32 1, %s17
    %p23 = scmp.ge.s32.totalorder %s22, 1
    %s24 = scalar_select %p23, 0, %s22
    %s25 = sadd.s32 1, %s16
    %s26 = scalar_select %p23, %s25, %s16
    %p27 = scmp.ge.s32.totalorder %s26, 2
    %s28 = scalar_select %p27, 0, %s26
    %s29 = ssub.s32 %s16, %s28
    %p30 = scmp.eq.s32.totalorder %s29, 0
    %s32 = sadd.s32 %s31, 1
    %s33 = scalar_select %p30, %s31, %s32
    %p36 = pneg %p30
    %p37 = scmp.eq.s32.totalorder %s9, 1
    %p38 = por %p36, %p37
    %p39 = scmp.ne.s32.totalorder %s31, %s34
    %p40 = scmp.eq.s32.totalorder %s9, 0
    %p41 = por %p39, %p40
    %p42 = scmp.ne.s32.totalorder %s31, %s34
    %p43 = scmp.eq.s32.totalorder %s14, 1
    %p44 = por %p42, %p43
    %p45 = scmp.ne.s32.totalorder %s34, %s35
    %p46 = scmp.eq.s32.totalorder %s14, 0
    %p47 = por %p45, %p46
    %p48 = scmp.ne.s32.totalorder %s34, %s35
    %p49 = scmp.eq.s32.totalorder %s15, 1
    %p50 = por %p48, %p49
    %p52 = scmp.ne.s32.totalorder %s35, %s51
    %p53 = scmp.eq.s32.totalorder %s15, 0
    %p54 = por %p52, %p53
    %s55 = ssub.s32 %s17, %s24
    %p56 = scmp.eq.s32.totalorder %s55, 0
    %s58 = sadd.s32 %s57, 1
    %s59 = scalar_select %p56, %s57, %s58
    %p62 = pneg %p56
    %p63 = scmp.eq.s32.totalorder %s9, 1
    %p64 = por %p62, %p63
    %p65 = scmp.ne.s32.totalorder %s57, %s60
    %p66 = scmp.eq.s32.totalorder %s9, 0
    %p67 = por %p65, %p66
    %p68 = scmp.ne.s32.totalorder %s57, %s60
    %p69 = scmp.eq.s32.totalorder %s14, 1
    %p70 = por %p68, %p69
    %p71 = scmp.ne.s32.totalorder %s60, %s61
    %p72 = scmp.eq.s32.totalorder %s14, 0
    %p73 = por %p71, %p72
    %p74 = scmp.ne.s32.totalorder %s60, %s61
    %p75 = scmp.eq.s32.totalorder %s15, 1
    %p76 = por %p74, %p75
    %p78 = scmp.ne.s32.totalorder %s61, %s77
    %p79 = scmp.eq.s32.totalorder %s15, 0
    %p80 = por %p78, %p79
    %s81 = ssub.s32 %s17, %s24
    %p82 = scmp.eq.s32.totalorder %s81, 0
    %s84 = sadd.s32 %s83, 1
    %s85 = scalar_select %p82, %s83, %s84
    %p88 = pneg %p82
    %p89 = scmp.eq.s32.totalorder %s9, 1
    %p90 = por %p88, %p89
    %p91 = scmp.ne.s32.totalorder %s83, %s86
    %p92 = scmp.eq.s32.totalorder %s9, 0
    %p93 = por %p91, %p92
    %p94 = scmp.ne.s32.totalorder %s83, %s86
    %p95 = scmp.eq.s32.totalorder %s14, 1
    %p96 = por %p94, %p95
    %p97 = scmp.ne.s32.totalorder %s86, %s87
    %p98 = scmp.eq.s32.totalorder %s14, 0
    %p99 = por %p97, %p98
    %p100 = scmp.ne.s32.totalorder %s86, %s87
    %p101 = scmp.eq.s32.totalorder %s15, 1
    %p102 = por %p100, %p101
    %p104 = scmp.ne.s32.totalorder %s87, %s103
    %p105 = scmp.eq.s32.totalorder %s15, 0
    %p106 = por %p104, %p105
    %s107 = ssub.s32 %s16, %s28
    %s108 = ssub.s32 %s17, %s24
    %s109 = sor.u32 %s107, %s108
    %p110 = scmp.eq.s32.totalorder %s109, 0
    %s112 = sadd.s32 %s111, 1
    %s113 = scalar_select %p110, %s111, %s112
    %p116 = pneg %p110
    %p117 = scmp.eq.s32.totalorder %s9, 1
    %p118 = por %p116, %p117
    %p119 = scmp.ne.s32.totalorder %s111, %s114
    %p120 = scmp.eq.s32.totalorder %s9, 0
    %p121 = por %p119, %p120
    %p122 = scmp.ne.s32.totalorder %s111, %s114
    %p123 = scmp.eq.s32.totalorder %s14, 1
    %p124 = por %p122, %p123
    %p125 = scmp.ne.s32.totalorder %s114, %s115
    %p126 = scmp.eq.s32.totalorder %s14, 0
    %p127 = por %p125, %p126
    %p128 = scmp.ne.s32.totalorder %s114, %s115
    %p129 = scmp.eq.s32.totalorder %s15, 1
    %p130 = por %p128, %p129
    %p132 = scmp.ne.s32.totalorder %s115, %s131
    %p133 = scmp.eq.s32.totalorder %s15, 0
    %p134 = por %p132, %p133
    %p135 = scmp.le.s32.totalorder 1, %s9
    %p136 = scmp.lt.s32.totalorder %s9, 3
    %p137 = pnand %p135, %p136
    %p138 = pneg %p137
    // Predicated region
    $region9: #{double_conv.3} parent=5 // pred_check
      _
    $region10: #{double_conv.3} parent=5 // pred_check_branch
      %140 = sbr.rel (%p137) target = $region12
    $region11: #{double_conv.3} parent=5 // pred_region
      %s141 = ssub.s32 %s9, 1
      // Predicated region
      $region13: #{double_conv.3} parent=11 // pred_check
        %p142 = pneg %p73
      $region14: #{double_conv.3} parent=11 // pred_check_branch
        %144 = sbr.rel (%p142) target = $region16
      $region15: #{double_conv.3} parent=11 // pred_region
        %p145 = scmp.lt.s32.totalorder %s19, 0
        %s146 = scalar_select %p145, %s19, 0
        %s147 = smul.addr %s146, 4
        %s148 = scalar_lea.vmem %s1, %s147
      $region16: #{double_conv.3} parent=11 // pred_fallthru
        _
      // Predicated region
      $region17: #{double_conv.3} parent=11 // pred_check
        %p149 = pneg %p99
      $region18: #{double_conv.3} parent=11 // pred_check_branch
        %151 = sbr.rel (%p149) target = $region20
      $region19: #{double_conv.3} parent=11 // pred_region
        %p152 = scmp.lt.s32.totalorder %s19, 0
        %s153 = scalar_select %p152, %s19, 0
        %s154 = scalar_lea.vmem %s2, %s153
      $region20: #{double_conv.3} parent=11 // pred_fallthru
        _
    $region12: #{double_conv.3} parent=5 // pred_fallthru
      _
    %p155 = scmp.lt.s32.totalorder %s9, 2
    // Predicated region
    $region21: #{double_conv.3} parent=5 // pred_check
      %p156 = pneg %p155
    $region22: #{double_conv.3} parent=5 // pred_check_branch
      %158 = sbr.rel (%p156) target = $region24
    $region23: #{double_conv.3} parent=5 // pred_region
      // Predicated region
      $region25: #{double_conv.3} parent=23 // pred_check
        %p159 = pneg %p41
      $region26: #{double_conv.3} parent=23 // pred_check_branch
        %161 = sbr.rel (%p159) target = $region28
      $region27: #{double_conv.3} parent=23 // pred_region
        %p162 = scmp.lt.s32.totalorder %s16, 1
        %s163 = scalar_select %p162, %s16, 1
        %s164 = smul.addr %s163, 54
        %s165 = smul.addr %s164, 4
        %s166 = scalar_lea.vmem %s0, %s165
      $region28: #{double_conv.3} parent=23 // pred_fallthru
        _
    $region24: #{double_conv.3} parent=5 // pred_fallthru
      _
    %p167 = scmp.le.s32.totalorder 1, %s9
    %p168 = scmp.lt.s32.totalorder %s9, 3
    %p169 = pnand %p167, %p168
    %p170 = pneg %p169
    // Predicated region
    $region29: #{double_conv.3} parent=5 // pred_check
      _
    $region30: #{double_conv.3} parent=5 // pred_check_branch
      %172 = sbr.rel (%p169) target = $region32
    $region31: #{double_conv.3} parent=5 // pred_region
      %s173 = ssub.s32 %s9, 1
      %p174 = scmp.lt.s32.totalorder %s18, 1
      %s175 = scalar_select %p174, %s18, 1
      %s176 = smul.addr %s175, 54
      %s177 = smul.addr %s176, 4
      %s178 = scalar_lea.vmem %s0, %s177
      %p179 = pneg %p47
      %p180 = pneg %p44
      %p181 = scmp.lt.s32.totalorder %s19, 0
      %s182 = scalar_select %p181, %s19, 0
      %s183 = smul.addr %s182, 4
      %s184 = scalar_lea.vmem %s1, %s183
      %p185 = pneg %p73
      %p186 = pneg %p70
      %p187 = scmp.lt.s32.totalorder %s19, 0
      %s188 = scalar_select %p187, %s19, 0
      %s189 = scalar_lea.vmem %s2, %s188
      %p190 = pneg %p99
      %p191 = pneg %p96
      %p192 = pneg %p127
      %p193 = pneg %p124
      %p194 = scmp.lt.s32.totalorder %s18, 1
      %s195 = scalar_select %p194, %s18, 1
      %p196 = scmp.lt.s32.totalorder %s19, 0
      %s197 = scalar_select %p196, %s19, 0
      %s198 = smul.addr %s195, 32
      %s199 = sadd.s32 %s197, %s198
      %s200 = smul.addr %s199, 8
      %s201 = scalar_lea.vmem %s3, %s200
      %p202 = scmp.lt.s32.totalorder %s18, 1
      %s203 = scalar_select %p202, %s18, 1
      %s204 = smul.addr %s203, 54
      %s205 = smul.addr %s204, 4
      %s206 = scalar_lea.vmem %s0, %s205
      %p207 = scmp.lt.s32.totalorder %s19, 0
      %s208 = scalar_select %p207, %s19, 0
      %s209 = smul.addr %s208, 4
      %s210 = scalar_lea.vmem %s1, %s209
      %p211 = scmp.lt.s32.totalorder %s19, 0
      %s212 = scalar_select %p211, %s19, 0
      %s213 = scalar_lea.vmem %s2, %s212
      %p214 = scmp.lt.s32.totalorder %s18, 1
      %s215 = scalar_select %p214, %s18, 1
      %p216 = scmp.lt.s32.totalorder %s19, 0
      %s217 = scalar_select %p216, %s19, 0
      %s218 = smul.addr %s215, 32
      %s219 = sadd.s32 %s217, %s218
      %s220 = smul.addr %s219, 8
      %s221 = scalar_lea.vmem %s3, %s220
      %v223 = vld [vmem:[%s206] sm:$0xf]
      %v224 = vld [vmem:[%s206 + $0x4] sm:$0xf]
      %v225 = vld [vmem:[%s206 + $0x8] sm:$0x1]
      %v226 = vld [vmem:[%s206 + $0xc] sm:$0xf]
      %v227 = vld [vmem:[%s206 + $0x10] sm:$0xf]
      %v228 = vld [vmem:[%s206 + $0x14] sm:$0x1]
      %v229 = vld [vmem:[%s206 + $0x18] sm:$0xf]
      %v230 = vld [vmem:[%s206 + $0x1c] sm:$0xf]
      %v231 = vld [vmem:[%s206 + $0x20] sm:$0x1]
      %v232 = vld [vmem:[%s206 + $0x24] sm:$0xf]
      %v233 = vld [vmem:[%s206 + $0x28] sm:$0xf]
      %v234 = vld [vmem:[%s206 + $0x2c] sm:$0x1]
      %v235 = vld [vmem:[%s206 + $0x30] sm:$0xf]
      %v236 = vld [vmem:[%s206 + $0x34] sm:$0xf]
      %v237 = vld [vmem:[%s206 + $0x38] sm:$0x1]
      %v238 = vld [vmem:[%s206 + $0x3c] sm:$0xf]
      %v239 = vld [vmem:[%s206 + $0x40] sm:$0xf]
      %v240 = vld [vmem:[%s206 + $0x44] sm:$0x1]
      %v241 = vld [vmem:[%s206 + $0x48] sm:$0xf]
      %v242 = vld [vmem:[%s206 + $0x4c] sm:$0xf]
      %v243 = vld [vmem:[%s206 + $0x50] sm:$0x1]
      %v244 = vld [vmem:[%s206 + $0x54] sm:$0xf]
      %v245 = vld [vmem:[%s206 + $0x58] sm:$0xf]
      %v246 = vld [vmem:[%s206 + $0x5c] sm:$0x1]
      %v247 = vld [vmem:[%s206 + $0x60] sm:$0xf]
      %v248 = vld [vmem:[%s206 + $0x64] sm:$0xf]
      %v249 = vld [vmem:[%s206 + $0x68] sm:$0x1]
      %v250 = vld [vmem:[%s206 + $0x6c] sm:$0xf]
      %v251 = vld [vmem:[%s206 + $0x70] sm:$0xf]
      %v252 = vld [vmem:[%s206 + $0x74] sm:$0x1]
      %v253 = vld [vmem:[%s206 + $0x78] sm:$0xf]
      %v254 = vld [vmem:[%s206 + $0x7c] sm:$0xf]
      %v255 = vld [vmem:[%s206 + $0x80] sm:$0x1]
      %v256 = vld [vmem:[%s206 + $0x84] sm:$0xf]
      %v257 = vld [vmem:[%s206 + $0x88] sm:$0xf]
      %v258 = vld [vmem:[%s206 + $0x8c] sm:$0x1]
      %v259 = vld [vmem:[%s206 + $0x90] sm:$0xf]
      %v260 = vld [vmem:[%s206 + $0x94] sm:$0xf]
      %v261 = vld [vmem:[%s206 + $0x98] sm:$0x1]
      %v262 = vld [vmem:[%s206 + $0x9c] sm:$0xf]
      %v263 = vld [vmem:[%s206 + $0xa0] sm:$0xf]
      %v264 = vld [vmem:[%s206 + $0xa4] sm:$0x1]
      %v265 = vld [vmem:[%s206 + $0xa8] sm:$0xf]
      %v266 = vld [vmem:[%s206 + $0xac] sm:$0xf]
      %v267 = vld [vmem:[%s206 + $0xb0] sm:$0x1]
      %v268 = vld [vmem:[%s206 + $0xb4] sm:$0xf]
      %v269 = vld [vmem:[%s206 + $0xb8] sm:$0xf]
      %v270 = vld [vmem:[%s206 + $0xbc] sm:$0x1]
      %v271 = vld [vmem:[%s206 + $0xc0] sm:$0xf]
      %v272 = vld [vmem:[%s206 + $0xc4] sm:$0xf]
      %v273 = vld [vmem:[%s206 + $0xc8] sm:$0x1]
      %v274 = vld [vmem:[%s206 + $0xcc] sm:$0xf]
      %v275 = vld [vmem:[%s206 + $0xd0] sm:$0xf]
      %v276 = vld [vmem:[%s206 + $0xd4] sm:$0x1]
      %v277 = vld [vmem:[%s210] sm:$0xf]
      %vm278 = vsmask.f32 3328
      %vm279 = vsmask.f32 7440
      %vm280 = vmor %vm278, %vm279
      %v282 = vshrl.u32 %v223, 16
      %v284 = vrot.slane %v282, 4
      %v285 = vshll.u32 %v223, 16
      %v287 = vrot.slane %v285, 5
      %v288 = vor.u32 %v284, %v287
      %v289 = vrot.slane %v288, 4
      %v291 = vshll.u32 %v224, 16
      %v293 = vrot.slane %v291, 5
      %v294 = vsel %vm280, %v289, %v293
      %v295 = vshrl.u32 %v224, 16
      %v297 = vrot.slane %v295, 4
      %v298 = vor.u32 %v297, %v293
      %v299 = vrot.slane %v298, 4
      %v301 = vshll.u32 %v225, 16
      %v303 = vrot.slane %v301, 5
      %v304 = vsel %vm280, %v299, %v303
      %v306 = vshrl.u32 %v226, 16
      %v308 = vrot.slane %v306, 4
      %v309 = vshll.u32 %v226, 16
      %v311 = vrot.slane %v309, 5
      %v312 = vor.u32 %v308, %v311
      %v313 = vrot.slane %v312, 4
      %v315 = vshll.u32 %v227, 16
      %v317 = vrot.slane %v315, 5
      %v318 = vsel %vm280, %v313, %v317
      %v319 = vshrl.u32 %v227, 16
      %v321 = vrot.slane %v319, 4
      %v322 = vor.u32 %v321, %v317
      %v323 = vrot.slane %v322, 4
      %v325 = vshll.u32 %v228, 16
      %v327 = vrot.slane %v325, 5
      %v328 = vsel %vm280, %v323, %v327
      %v330 = vshrl.u32 %v229, 16
      %v332 = vrot.slane %v330, 4
      %v333 = vshll.u32 %v229, 16
      %v335 = vrot.slane %v333, 5
      %v336 = vor.u32 %v332, %v335
      %v337 = vrot.slane %v336, 4
      %v339 = vshll.u32 %v230, 16
      %v341 = vrot.slane %v339, 5
      %v342 = vsel %vm280, %v337, %v341
      %v343 = vshrl.u32 %v230, 16
      %v345 = vrot.slane %v343, 4
      %v346 = vor.u32 %v345, %v341
      %v347 = vrot.slane %v346, 4
      %v349 = vshll.u32 %v231, 16
      %v351 = vrot.slane %v349, 5
      %v352 = vsel %vm280, %v347, %v351
      %v354 = vshrl.u32 %v232, 16
      %v356 = vrot.slane %v354, 4
      %v357 = vshll.u32 %v232, 16
      %v359 = vrot.slane %v357, 5
      %v360 = vor.u32 %v356, %v359
      %v361 = vrot.slane %v360, 4
      %v363 = vshll.u32 %v233, 16
      %v365 = vrot.slane %v363, 5
      %v366 = vsel %vm280, %v361, %v365
      %v367 = vshrl.u32 %v233, 16
      %v369 = vrot.slane %v367, 4
      %v370 = vor.u32 %v369, %v365
      %v371 = vrot.slane %v370, 4
      %v373 = vshll.u32 %v234, 16
      %v375 = vrot.slane %v373, 5
      %v376 = vsel %vm280, %v371, %v375
      %v378 = vshrl.u32 %v235, 16
      %v380 = vrot.slane %v378, 4
      %v381 = vshll.u32 %v235, 16
      %v383 = vrot.slane %v381, 5
      %v384 = vor.u32 %v380, %v383
      %v385 = vrot.slane %v384, 4
      %v387 = vshll.u32 %v236, 16
      %v389 = vrot.slane %v387, 5
      %v390 = vsel %vm280, %v385, %v389
      %v391 = vshrl.u32 %v236, 16
      %v393 = vrot.slane %v391, 4
      %v394 = vor.u32 %v393, %v389
      %v395 = vrot.slane %v394, 4
      %v397 = vshll.u32 %v237, 16
      %v399 = vrot.slane %v397, 5
      %v400 = vsel %vm280, %v395, %v399
      %v402 = vshrl.u32 %v238, 16
      %v404 = vrot.slane %v402, 4
      %v405 = vshll.u32 %v238, 16
      %v407 = vrot.slane %v405, 5
      %v408 = vor.u32 %v404, %v407
      %v409 = vrot.slane %v408, 4
      %v411 = vshll.u32 %v239, 16
      %v413 = vrot.slane %v411, 5
      %v414 = vsel %vm280, %v409, %v413
      %v415 = vshrl.u32 %v239, 16
      %v417 = vrot.slane %v415, 4
      %v418 = vor.u32 %v417, %v413
      %v419 = vrot.slane %v418, 4
      %v421 = vshll.u32 %v240, 16
      %v423 = vrot.slane %v421, 5
      %v424 = vsel %vm280, %v419, %v423
      %v426 = vshrl.u32 %v241, 16
      %v428 = vrot.slane %v426, 4
      %v429 = vshll.u32 %v241, 16
      %v431 = vrot.slane %v429, 5
      %v432 = vor.u32 %v428, %v431
      %v433 = vrot.slane %v432, 4
      %v435 = vshll.u32 %v242, 16
      %v437 = vrot.slane %v435, 5
      %v438 = vsel %vm280, %v433, %v437
      %v439 = vshrl.u32 %v242, 16
      %v441 = vrot.slane %v439, 4
      %v442 = vor.u32 %v441, %v437
      %v443 = vrot.slane %v442, 4
      %v445 = vshll.u32 %v243, 16
      %v447 = vrot.slane %v445, 5
      %v448 = vsel %vm280, %v443, %v447
      %v450 = vshrl.u32 %v244, 16
      %v452 = vrot.slane %v450, 4
      %v453 = vshll.u32 %v244, 16
      %v455 = vrot.slane %v453, 5
      %v456 = vor.u32 %v452, %v455
      %v457 = vrot.slane %v456, 4
      %v459 = vshll.u32 %v245, 16
      %v461 = vrot.slane %v459, 5
      %v462 = vsel %vm280, %v457, %v461
      %v463 = vshrl.u32 %v245, 16
      %v465 = vrot.slane %v463, 4
      %v466 = vor.u32 %v465, %v461
      %v467 = vrot.slane %v466, 4
      %v469 = vshll.u32 %v246, 16
      %v471 = vrot.slane %v469, 5
      %v472 = vsel %vm280, %v467, %v471
      %v474 = vshrl.u32 %v247, 16
      %v476 = vrot.slane %v474, 4
      %v477 = vshll.u32 %v247, 16
      %v479 = vrot.slane %v477, 5
      %v480 = vor.u32 %v476, %v479
      %v481 = vrot.slane %v480, 4
      %v483 = vshll.u32 %v248, 16
      %v485 = vrot.slane %v483, 5
      %v486 = vsel %vm280, %v481, %v485
      %v487 = vshrl.u32 %v248, 16
      %v489 = vrot.slane %v487, 4
      %v490 = vor.u32 %v489, %v485
      %v491 = vrot.slane %v490, 4
      %v493 = vshll.u32 %v249, 16
      %v495 = vrot.slane %v493, 5
      %v496 = vsel %vm280, %v491, %v495
      %v498 = vshrl.u32 %v250, 16
      %v500 = vrot.slane %v498, 4
      %v501 = vshll.u32 %v250, 16
      %v503 = vrot.slane %v501, 5
      %v504 = vor.u32 %v500, %v503
      %v505 = vrot.slane %v504, 4
      %v507 = vshll.u32 %v251, 16
      %v509 = vrot.slane %v507, 5
      %v510 = vsel %vm280, %v505, %v509
      %v511 = vshrl.u32 %v251, 16
      %v513 = vrot.slane %v511, 4
      %v514 = vor.u32 %v513, %v509
      %v515 = vrot.slane %v514, 4
      %v517 = vshll.u32 %v252, 16
      %v519 = vrot.slane %v517, 5
      %v520 = vsel %vm280, %v515, %v519
      %v522 = vshrl.u32 %v253, 16
      %v524 = vrot.slane %v522, 4
      %v525 = vshll.u32 %v253, 16
      %v527 = vrot.slane %v525, 5
      %v528 = vor.u32 %v524, %v527
      %v529 = vrot.slane %v528, 4
      %v531 = vshll.u32 %v254, 16
      %v533 = vrot.slane %v531, 5
      %v534 = vsel %vm280, %v529, %v533
      %v535 = vshrl.u32 %v254, 16
      %v537 = vrot.slane %v535, 4
      %v538 = vor.u32 %v537, %v533
      %v539 = vrot.slane %v538, 4
      %v541 = vshll.u32 %v255, 16
      %v543 = vrot.slane %v541, 5
      %v544 = vsel %vm280, %v539, %v543
      %v546 = vshrl.u32 %v256, 16
      %v548 = vrot.slane %v546, 4
      %v549 = vshll.u32 %v256, 16
      %v551 = vrot.slane %v549, 5
      %v552 = vor.u32 %v548, %v551
      %v553 = vrot.slane %v552, 4
      %v555 = vshll.u32 %v257, 16
      %v557 = vrot.slane %v555, 5
      %v558 = vsel %vm280, %v553, %v557
      %v559 = vshrl.u32 %v257, 16
      %v561 = vrot.slane %v559, 4
      %v562 = vor.u32 %v561, %v557
      %v563 = vrot.slane %v562, 4
      %v565 = vshll.u32 %v258, 16
      %v567 = vrot.slane %v565, 5
      %v568 = vsel %vm280, %v563, %v567
      %v570 = vshrl.u32 %v259, 16
      %v572 = vrot.slane %v570, 4
      %v573 = vshll.u32 %v259, 16
      %v575 = vrot.slane %v573, 5
      %v576 = vor.u32 %v572, %v575
      %v577 = vrot.slane %v576, 4
      %v579 = vshll.u32 %v260, 16
      %v581 = vrot.slane %v579, 5
      %v582 = vsel %vm280, %v577, %v581
      %v583 = vshrl.u32 %v260, 16
      %v585 = vrot.slane %v583, 4
      %v586 = vor.u32 %v585, %v581
      %v587 = vrot.slane %v586, 4
      %v589 = vshll.u32 %v261, 16
      %v591 = vrot.slane %v589, 5
      %v592 = vsel %vm280, %v587, %v591
      %v594 = vshrl.u32 %v262, 16
      %v596 = vrot.slane %v594, 4
      %v597 = vshll.u32 %v262, 16
      %v599 = vrot.slane %v597, 5
      %v600 = vor.u32 %v596, %v599
      %v601 = vrot.slane %v600, 4
      %v603 = vshll.u32 %v263, 16
      %v605 = vrot.slane %v603, 5
      %v606 = vsel %vm280, %v601, %v605
      %v607 = vshrl.u32 %v263, 16
      %v609 = vrot.slane %v607, 4
      %v610 = vor.u32 %v609, %v605
      %v611 = vrot.slane %v610, 4
      %v613 = vshll.u32 %v264, 16
      %v615 = vrot.slane %v613, 5
      %v616 = vsel %vm280, %v611, %v615
      %v618 = vshrl.u32 %v265, 16
      %v620 = vrot.slane %v618, 4
      %v621 = vshll.u32 %v265, 16
      %v623 = vrot.slane %v621, 5
      %v624 = vor.u32 %v620, %v623
      %v625 = vrot.slane %v624, 4
      %v627 = vshll.u32 %v266, 16
      %v629 = vrot.slane %v627, 5
      %v630 = vsel %vm280, %v625, %v629
      %v631 = vshrl.u32 %v266, 16
      %v633 = vrot.slane %v631, 4
      %v634 = vor.u32 %v633, %v629
      %v635 = vrot.slane %v634, 4
      %v637 = vshll.u32 %v267, 16
      %v639 = vrot.slane %v637, 5
      %v640 = vsel %vm280, %v635, %v639
      %v642 = vshrl.u32 %v268, 16
      %v644 = vrot.slane %v642, 4
      %v645 = vshll.u32 %v268, 16
      %v647 = vrot.slane %v645, 5
      %v648 = vor.u32 %v644, %v647
      %v649 = vrot.slane %v648, 4
      %v651 = vshll.u32 %v269, 16
      %v653 = vrot.slane %v651, 5
      %v654 = vsel %vm280, %v649, %v653
      %v655 = vshrl.u32 %v269, 16
      %v657 = vrot.slane %v655, 4
      %v658 = vor.u32 %v657, %v653
      %v659 = vrot.slane %v658, 4
      %v661 = vshll.u32 %v270, 16
      %v663 = vrot.slane %v661, 5
      %v664 = vsel %vm280, %v659, %v663
      %s665 = scalar_lea.vmem %s210, 4
      %v666 = vld [vmem:[%s665] sm:$0xf]
      %v667 = vunpack.c.l.b16 %v294
      %v668 = vunpack.c.l.b16 %v304
      %v669 = vunpack.c.l.b16 %v318
      %v670 = vunpack.c.l.b16 %v328
      %v671 = vunpack.c.l.b16 %v342
      %v672 = vunpack.c.l.b16 %v352
      %v673 = vunpack.c.l.b16 %v366
      %v674 = vunpack.c.l.b16 %v376
      %v675 = vunpack.c.l.b16 %v390
      %v676 = vunpack.c.l.b16 %v400
      %v677 = vunpack.c.l.b16 %v414
      %v678 = vunpack.c.l.b16 %v424
      %v679 = vunpack.c.l.b16 %v438
      %v680 = vunpack.c.l.b16 %v448
      %v681 = vunpack.c.l.b16 %v462
      %v682 = vunpack.c.l.b16 %v472
      %v683 = vunpack.c.l.b16 %v486
      %v684 = vunpack.c.l.b16 %v496
      %v685 = vunpack.c.l.b16 %v510
      %v686 = vunpack.c.l.b16 %v520
      %v687 = vunpack.c.l.b16 %v534
      %v688 = vunpack.c.l.b16 %v544
      %v689 = vunpack.c.l.b16 %v558
      %v690 = vunpack.c.l.b16 %v568
      %v691 = vunpack.c.l.b16 %v582
      %v692 = vunpack.c.l.b16 %v592
      %v693 = vunpack.c.l.b16 %v606
      %v694 = vunpack.c.l.b16 %v616
      %v695 = vunpack.c.l.b16 %v630
      %v696 = vunpack.c.l.b16 %v640
      %v697 = vunpack.c.l.b16 %v654
      %v698 = vunpack.c.l.b16 %v664
      %v699 = vpack.c.b16 %v668, %v667
      %v700 = vpack.c.b16 %v670, %v669
      %v701 = vpack.c.b16 %v672, %v671
      %v702 = vpack.c.b16 %v674, %v673
      %v703 = vpack.c.b16 %v676, %v675
      %v704 = vpack.c.b16 %v678, %v677
      %v705 = vpack.c.b16 %v680, %v679
      %v706 = vpack.c.b16 %v682, %v681
      %v707 = vpack.c.b16 %v684, %v683
      %v708 = vpack.c.b16 %v686, %v685
      %v709 = vpack.c.b16 %v688, %v687
      %v710 = vpack.c.b16 %v690, %v689
      %v711 = vpack.c.b16 %v692, %v691
      %v712 = vpack.c.b16 %v694, %v693
      %v713 = vpack.c.b16 %v696, %v695
      %v714 = vpack.c.b16 %v698, %v697
      %vm715 = vcmask 64512
      %v717 = vsel %vm715, %v699, 0
      %v720 = vsel %vm715, %v700, 0
      %v723 = vsel %vm715, %v701, 0
      %v726 = vsel %vm715, %v702, 0
      %v729 = vsel %vm715, %v703, 0
      %v732 = vsel %vm715, %v704, 0
      %v735 = vsel %vm715, %v705, 0
      %v738 = vsel %vm715, %v706, 0
      %v741 = vsel %vm715, %v707, 0
      %v744 = vsel %vm715, %v708, 0
      %v747 = vsel %vm715, %v709, 0
      %v750 = vsel %vm715, %v710, 0
      %v753 = vsel %vm715, %v711, 0
      %v756 = vsel %vm715, %v712, 0
      %v759 = vsel %vm715, %v713, 0
      %v762 = vsel %vm715, %v714, 0
      %vm764 = vcmask 1043456
      %v766 = vsel %vm764, %v666, 0
      %768 = vmatprep.subr.bf16.mxu0 0
      %769 = vmatpush1.bf16.msra.mxu0 0
      %770 = vmatprep.subr.bf16.mxu0 0
      %771 = vmatpush1.bf16.msra.mxu0 0
      %772 = vmatprep.subr.bf16.mxu0 0
      %773 = vmatpush1.bf16.msra.mxu0 0
      %774 = vmatprep.subr.bf16.mxu0 0
      %775 = vmatpush1.bf16.msra.mxu0 0
      %776 = vmatprep.subr.bf16.mxu0 0
      %777 = vmatpush1.bf16.msra.mxu0 0
      %778 = vmatprep.subr.bf16.mxu0 0
      %779 = vmatpush1.bf16.msra.mxu0 0
      %780 = vmatprep.subr.bf16.mxu0 0
      %781 = vmatpush1.bf16.msra.mxu0 0
      %782 = vmatprep.subr.bf16.mxu0 0
      %783 = vmatpush1.bf16.msra.mxu0 %v766
      %784 = vmatprep.subr.bf16.mxu0 0
      %785 = vmatpush2.bf16.msra.mxu0 0
      %786 = vmatprep.subr.bf16.mxu0 0
      %787 = vmatpush2.bf16.msra.mxu0 0
      %788 = vmatprep.subr.bf16.mxu0 0
      %789 = vmatpush2.bf16.msra.mxu0 0
      %790 = vmatprep.subr.bf16.mxu0 0
      %791 = vmatpush2.bf16.msra.mxu0 0
      %792 = vmatprep.subr.bf16.mxu0 0
      %793 = vmatpush2.bf16.msra.mxu0 0
      %794 = vmatprep.subr.bf16.mxu0 0
      %795 = vmatpush2.bf16.msra.mxu0 0
      %796 = vmatprep.subr.bf16.mxu0 0
      %797 = vmatpush2.bf16.msra.mxu0 0
      %798 = vmatprep.subr.bf16.mxu0 0
      %799 = vmatpush2.bf16.msra.mxu0 0
      %800 = vmatprep.mubr.bf16.mxu0 0
      %801 = vmatmul.mubr.bf16.gmra.mxu0 %v717
      %v802 = vpop.f32.mrf.mxu0
      %v803 = vadd.f32 0.0, %v802
      %v804 = vpop.f32.mrf.mxu0
      %v805 = vpop.f32.mrf.mxu0
      %v806 = vadd.f32 0.0, %v805
      %v807 = vpop.f32.mrf.mxu0
      %808 = vmatprep.mubr.bf16.mxu0 0
      %809 = vmatmul.mubr.bf16.gmra.mxu0 %v720
      %v810 = vpop.f32.mrf.mxu0
      %v811 = vadd.f32 0.0, %v810
      %v812 = vpop.f32.mrf.mxu0
      %v813 = vpop.f32.mrf.mxu0
      %v814 = vadd.f32 0.0, %v813
      %v815 = vpop.f32.mrf.mxu0
      %816 = vmatprep.mubr.bf16.mxu0 0
      %817 = vmatmul.mubr.bf16.gmra.mxu0 %v723
      %v818 = vpop.f32.mrf.mxu0
      %v819 = vadd.f32 0.0, %v818
      %v820 = vpop.f32.mrf.mxu0
      %v821 = vpop.f32.mrf.mxu0
      %v822 = vadd.f32 0.0, %v821
      %v823 = vpop.f32.mrf.mxu0
      %824 = vmatprep.mubr.bf16.mxu0 0
      %825 = vmatmul.mubr.bf16.gmra.mxu0 %v726
      %v826 = vpop.f32.mrf.mxu0
      %v827 = vadd.f32 0.0, %v826
      %v828 = vpop.f32.mrf.mxu0
      %v829 = vpop.f32.mrf.mxu0
      %v830 = vadd.f32 0.0, %v829
      %v831 = vpop.f32.mrf.mxu0
      %832 = vmatprep.mubr.bf16.mxu0 0
      %833 = vmatmul.mubr.bf16.gmra.mxu0 %v729
      %v834 = vpop.f32.mrf.mxu0
      %v835 = vadd.f32 0.0, %v834
      %v836 = vpop.f32.mrf.mxu0
      %v837 = vpop.f32.mrf.mxu0
      %v838 = vadd.f32 0.0, %v837
      %v839 = vpop.f32.mrf.mxu0
      %840 = vmatprep.mubr.bf16.mxu0 0
      %841 = vmatmul.mubr.bf16.gmra.mxu0 %v732
      %v842 = vpop.f32.mrf.mxu0
      %v843 = vadd.f32 0.0, %v842
      %v844 = vpop.f32.mrf.mxu0
      %v845 = vpop.f32.mrf.mxu0
      %v846 = vadd.f32 0.0, %v845
      %v847 = vpop.f32.mrf.mxu0
      %848 = vmatprep.mubr.bf16.mxu0 0
      %849 = vmatmul.mubr.bf16.gmra.mxu0 %v735
      %v850 = vpop.f32.mrf.mxu0
      %v851 = vadd.f32 0.0, %v850
      %v852 = vpop.f32.mrf.mxu0
      %v853 = vpop.f32.mrf.mxu0
      %v854 = vadd.f32 0.0, %v853
      %v855 = vpop.f32.mrf.mxu0
      %856 = vmatprep.mubr.bf16.mxu0 0
      %857 = vmatmul.mubr.bf16.gmra.mxu0 %v738
      %v858 = vpop.f32.mrf.mxu0
      %v859 = vadd.f32 0.0, %v858
      %v860 = vpop.f32.mrf.mxu0
      %v861 = vpop.f32.mrf.mxu0
      %v862 = vadd.f32 0.0, %v861
      %v863 = vpop.f32.mrf.mxu0
      %864 = vmatprep.mubr.bf16.mxu0 0
      %865 = vmatmul.mubr.bf16.gmra.mxu0 %v741
      %v866 = vpop.f32.mrf.mxu0
      %v867 = vadd.f32 0.0, %v866
      %v868 = vpop.f32.mrf.mxu0
      %v869 = vpop.f32.mrf.mxu0
      %v870 = vadd.f32 0.0, %v869
      %v871 = vpop.f32.mrf.mxu0
      %872 = vmatprep.mubr.bf16.mxu0 0
      %873 = vmatmul.mubr.bf16.gmra.mxu0 %v744
      %v874 = vpop.f32.mrf.mxu0
      %v875 = vadd.f32 0.0, %v874
      %v876 = vpop.f32.mrf.mxu0
      %v877 = vpop.f32.mrf.mxu0
      %v878 = vadd.f32 0.0, %v877
      %v879 = vpop.f32.mrf.mxu0
      %880 = vmatprep.mubr.bf16.mxu0 0
      %881 = vmatmul.mubr.bf16.gmra.mxu0 %v747
      %v882 = vpop.f32.mrf.mxu0
      %v883 = vadd.f32 0.0, %v882
      %v884 = vpop.f32.mrf.mxu0
      %v885 = vpop.f32.mrf.mxu0
      %v886 = vadd.f32 0.0, %v885
      %v887 = vpop.f32.mrf.mxu0
      %888 = vmatprep.mubr.bf16.mxu0 0
      %889 = vmatmul.mubr.bf16.gmra.mxu0 %v750
      %v890 = vpop.f32.mrf.mxu0
      %v891 = vadd.f32 0.0, %v890
      %v892 = vpop.f32.mrf.mxu0
      %v893 = vpop.f32.mrf.mxu0
      %v894 = vadd.f32 0.0, %v893
      %v895 = vpop.f32.mrf.mxu0
      %896 = vmatprep.mubr.bf16.mxu0 0
      %897 = vmatmul.mubr.bf16.gmra.mxu0 %v753
      %v898 = vpop.f32.mrf.mxu0
      %v899 = vadd.f32 0.0, %v898
      %v900 = vpop.f32.mrf.mxu0
      %v901 = vpop.f32.mrf.mxu0
      %v902 = vadd.f32 0.0, %v901
      %v903 = vpop.f32.mrf.mxu0
      %904 = vmatprep.mubr.bf16.mxu0 0
      %905 = vmatmul.mubr.bf16.gmra.mxu0 %v756
      %v906 = vpop.f32.mrf.mxu0
      %v907 = vadd.f32 0.0, %v906
      %v908 = vpop.f32.mrf.mxu0
      %v909 = vpop.f32.mrf.mxu0
      %v910 = vadd.f32 0.0, %v909
      %v911 = vpop.f32.mrf.mxu0
      %912 = vmatprep.mubr.bf16.mxu0 0
      %913 = vmatmul.mubr.bf16.gmra.mxu0 %v759
      %v914 = vpop.f32.mrf.mxu0
      %v915 = vadd.f32 0.0, %v914
      %v916 = vpop.f32.mrf.mxu0
      %v917 = vpop.f32.mrf.mxu0
      %v918 = vadd.f32 0.0, %v917
      %v919 = vpop.f32.mrf.mxu0
      %920 = vmatprep.mubr.bf16.mxu0 0
      %921 = vmatmul.mubr.bf16.gmra.mxu0 %v762
      %v922 = vpop.f32.mrf.mxu0
      %v923 = vadd.f32 0.0, %v922
      %v924 = vpop.f32.mrf.mxu0
      %v925 = vpop.f32.mrf.mxu0
      %v926 = vadd.f32 0.0, %v925
      %v927 = vpop.f32.mrf.mxu0
      %928 = vdwg.mxu0
      %v961 = vunpack.c.l.b16 %v223
      %v962 = vunpack.c.l.b16 %v224
      %v963 = vunpack.c.l.b16 %v226
      %v964 = vunpack.c.l.b16 %v227
      %v965 = vunpack.c.l.b16 %v229
      %v966 = vunpack.c.l.b16 %v230
      %v967 = vunpack.c.l.b16 %v232
      %v968 = vunpack.c.l.b16 %v233
      %v969 = vunpack.c.l.b16 %v235
      %v970 = vunpack.c.l.b16 %v236
      %v971 = vunpack.c.l.b16 %v238
      %v972 = vunpack.c.l.b16 %v239
      %v973 = vunpack.c.l.b16 %v241
      %v974 = vunpack.c.l.b16 %v242
      %v975 = vunpack.c.l.b16 %v244
      %v976 = vunpack.c.l.b16 %v245
      %v977 = vunpack.c.l.b16 %v247
      %v978 = vunpack.c.l.b16 %v248
      %v979 = vunpack.c.l.b16 %v250
      %v980 = vunpack.c.l.b16 %v251
      %v981 = vunpack.c.l.b16 %v253
      %v982 = vunpack.c.l.b16 %v254
      %v983 = vunpack.c.l.b16 %v256
      %v984 = vunpack.c.l.b16 %v257
      %v985 = vunpack.c.l.b16 %v259
      %v986 = vunpack.c.l.b16 %v260
      %v987 = vunpack.c.l.b16 %v262
      %v988 = vunpack.c.l.b16 %v263
      %v989 = vunpack.c.l.b16 %v265
      %v990 = vunpack.c.l.b16 %v266
      %v991 = vunpack.c.l.b16 %v268
      %v992 = vunpack.c.l.b16 %v269
      %v993 = vpack.c.b16 %v962, %v961
      %v994 = vpack.c.b16 %v964, %v963
      %v995 = vpack.c.b16 %v966, %v965
      %v996 = vpack.c.b16 %v968, %v967
      %v997 = vpack.c.b16 %v970, %v969
      %v998 = vpack.c.b16 %v972, %v971
      %v999 = vpack.c.b16 %v974, %v973
      %v1000 = vpack.c.b16 %v976, %v975
      %v1001 = vpack.c.b16 %v978, %v977
      %v1002 = vpack.c.b16 %v980, %v979
      %v1003 = vpack.c.b16 %v982, %v981
      %v1004 = vpack.c.b16 %v984, %v983
      %v1005 = vpack.c.b16 %v986, %v985
      %v1006 = vpack.c.b16 %v988, %v987
      %v1007 = vpack.c.b16 %v990, %v989
      %v1008 = vpack.c.b16 %v992, %v991
      %v1010 = vsel %vm715, %v993, 0
      %v1013 = vsel %vm715, %v994, 0
      %v1016 = vsel %vm715, %v995, 0
      %v1019 = vsel %vm715, %v996, 0
      %v1022 = vsel %vm715, %v997, 0
      %v1025 = vsel %vm715, %v998, 0
      %v1028 = vsel %vm715, %v999, 0
      %v1031 = vsel %vm715, %v1000, 0
      %v1034 = vsel %vm715, %v1001, 0
      %v1037 = vsel %vm715, %v1002, 0
      %v1040 = vsel %vm715, %v1003, 0
      %v1043 = vsel %vm715, %v1004, 0
      %v1046 = vsel %vm715, %v1005, 0
      %v1049 = vsel %vm715, %v1006, 0
      %v1052 = vsel %vm715, %v1007, 0
      %v1055 = vsel %vm715, %v1008, 0
      %v1058 = vsel %vm764, %v277, 0
      %1060 = vmatprep.subr.bf16.mxu0 0
      %1061 = vmatpush1.bf16.msra.mxu0 0
      %1062 = vmatprep.subr.bf16.mxu0 0
      %1063 = vmatpush1.bf16.msra.mxu0 0
      %1064 = vmatprep.subr.bf16.mxu0 0
      %1065 = vmatpush1.bf16.msra.mxu0 0
      %1066 = vmatprep.subr.bf16.mxu0 0
      %1067 = vmatpush1.bf16.msra.mxu0 0
      %1068 = vmatprep.subr.bf16.mxu0 0
      %1069 = vmatpush1.bf16.msra.mxu0 0
      %1070 = vmatprep.subr.bf16.mxu0 0
      %1071 = vmatpush1.bf16.msra.mxu0 0
      %1072 = vmatprep.subr.bf16.mxu0 0
      %1073 = vmatpush1.bf16.msra.mxu0 0
      %1074 = vmatprep.subr.bf16.mxu0 0
      %1075 = vmatpush1.bf16.msra.mxu0 %v1058
      %1076 = vmatprep.subr.bf16.mxu0 0
      %1077 = vmatpush2.bf16.msra.mxu0 0
      %1078 = vmatprep.subr.bf16.mxu0 0
      %1079 = vmatpush2.bf16.msra.mxu0 0
      %1080 = vmatprep.subr.bf16.mxu0 0
      %1081 = vmatpush2.bf16.msra.mxu0 0
      %1082 = vmatprep.subr.bf16.mxu0 0
      %1083 = vmatpush2.bf16.msra.mxu0 0
      %1084 = vmatprep.subr.bf16.mxu0 0
      %1085 = vmatpush2.bf16.msra.mxu0 0
      %1086 = vmatprep.subr.bf16.mxu0 0
      %1087 = vmatpush2.bf16.msra.mxu0 0
      %1088 = vmatprep.subr.bf16.mxu0 0
      %1089 = vmatpush2.bf16.msra.mxu0 0
      %1090 = vmatprep.subr.bf16.mxu0 0
      %1091 = vmatpush2.bf16.msra.mxu0 0
      %1092 = vmatprep.mubr.bf16.mxu0 0
      %1093 = vmatmul.mubr.bf16.gmra.mxu0 %v1010
      %v1094 = vpop.f32.mrf.mxu0
      %v1095 = vadd.f32 %v803, %v1094
      %v1096 = vpop.f32.mrf.mxu0
      %v1097 = vpop.f32.mrf.mxu0
      %v1098 = vadd.f32 %v806, %v1097
      %v1099 = vpop.f32.mrf.mxu0
      %1100 = vmatprep.mubr.bf16.mxu0 0
      %1101 = vmatmul.mubr.bf16.gmra.mxu0 %v1013
      %v1102 = vpop.f32.mrf.mxu0
      %v1103 = vadd.f32 %v811, %v1102
      %v1104 = vpop.f32.mrf.mxu0
      %v1105 = vpop.f32.mrf.mxu0
      %v1106 = vadd.f32 %v814, %v1105
      %v1107 = vpop.f32.mrf.mxu0
      %1108 = vmatprep.mubr.bf16.mxu0 0
      %1109 = vmatmul.mubr.bf16.gmra.mxu0 %v1016
      %v1110 = vpop.f32.mrf.mxu0
      %v1111 = vadd.f32 %v819, %v1110
      %v1112 = vpop.f32.mrf.mxu0
      %v1113 = vpop.f32.mrf.mxu0
      %v1114 = vadd.f32 %v822, %v1113
      %v1115 = vpop.f32.mrf.mxu0
      %1116 = vmatprep.mubr.bf16.mxu0 0
      %1117 = vmatmul.mubr.bf16.gmra.mxu0 %v1019
      %v1118 = vpop.f32.mrf.mxu0
      %v1119 = vadd.f32 %v827, %v1118
      %v1120 = vpop.f32.mrf.mxu0
      %v1121 = vpop.f32.mrf.mxu0
      %v1122 = vadd.f32 %v830, %v1121
      %v1123 = vpop.f32.mrf.mxu0
      %1124 = vmatprep.mubr.bf16.mxu0 0
      %1125 = vmatmul.mubr.bf16.gmra.mxu0 %v1022
      %v1126 = vpop.f32.mrf.mxu0
      %v1127 = vadd.f32 %v835, %v1126
      %v1128 = vpop.f32.mrf.mxu0
      %v1129 = vpop.f32.mrf.mxu0
      %v1130 = vadd.f32 %v838, %v1129
      %v1131 = vpop.f32.mrf.mxu0
      %1132 = vmatprep.mubr.bf16.mxu0 0
      %1133 = vmatmul.mubr.bf16.gmra.mxu0 %v1025
      %v1134 = vpop.f32.mrf.mxu0
      %v1135 = vadd.f32 %v843, %v1134
      %v1136 = vpop.f32.mrf.mxu0
      %v1137 = vpop.f32.mrf.mxu0
      %v1138 = vadd.f32 %v846, %v1137
      %v1139 = vpop.f32.mrf.mxu0
      %1140 = vmatprep.mubr.bf16.mxu0 0
      %1141 = vmatmul.mubr.bf16.gmra.mxu0 %v1028
      %v1142 = vpop.f32.mrf.mxu0
      %v1143 = vadd.f32 %v851, %v1142
      %v1144 = vpop.f32.mrf.mxu0
      %v1145 = vpop.f32.mrf.mxu0
      %v1146 = vadd.f32 %v854, %v1145
      %v1147 = vpop.f32.mrf.mxu0
      %1148 = vmatprep.mubr.bf16.mxu0 0
      %1149 = vmatmul.mubr.bf16.gmra.mxu0 %v1031
      %v1150 = vpop.f32.mrf.mxu0
      %v1151 = vadd.f32 %v859, %v1150
      %v1152 = vpop.f32.mrf.mxu0
      %v1153 = vpop.f32.mrf.mxu0
      %v1154 = vadd.f32 %v862, %v1153
      %v1155 = vpop.f32.mrf.mxu0
      %1156 = vmatprep.mubr.bf16.mxu0 0
      %1157 = vmatmul.mubr.bf16.gmra.mxu0 %v1034
      %v1158 = vpop.f32.mrf.mxu0
      %v1159 = vadd.f32 %v867, %v1158
      %v1160 = vpop.f32.mrf.mxu0
      %v1161 = vpop.f32.mrf.mxu0
      %v1162 = vadd.f32 %v870, %v1161
      %v1163 = vpop.f32.mrf.mxu0
      %1164 = vmatprep.mubr.bf16.mxu0 0
      %1165 = vmatmul.mubr.bf16.gmra.mxu0 %v1037
      %v1166 = vpop.f32.mrf.mxu0
      %v1167 = vadd.f32 %v875, %v1166
      %v1168 = vpop.f32.mrf.mxu0
      %v1169 = vpop.f32.mrf.mxu0
      %v1170 = vadd.f32 %v878, %v1169
      %v1171 = vpop.f32.mrf.mxu0
      %1172 = vmatprep.mubr.bf16.mxu0 0
      %1173 = vmatmul.mubr.bf16.gmra.mxu0 %v1040
      %v1174 = vpop.f32.mrf.mxu0
      %v1175 = vadd.f32 %v883, %v1174
      %v1176 = vpop.f32.mrf.mxu0
      %v1177 = vpop.f32.mrf.mxu0
      %v1178 = vadd.f32 %v886, %v1177
      %v1179 = vpop.f32.mrf.mxu0
      %1180 = vmatprep.mubr.bf16.mxu0 0
      %1181 = vmatmul.mubr.bf16.gmra.mxu0 %v1043
      %v1182 = vpop.f32.mrf.mxu0
      %v1183 = vadd.f32 %v891, %v1182
      %v1184 = vpop.f32.mrf.mxu0
      %v1185 = vpop.f32.mrf.mxu0
      %v1186 = vadd.f32 %v894, %v1185
      %v1187 = vpop.f32.mrf.mxu0
      %1188 = vmatprep.mubr.bf16.mxu0 0
      %1189 = vmatmul.mubr.bf16.gmra.mxu0 %v1046
      %v1190 = vpop.f32.mrf.mxu0
      %v1191 = vadd.f32 %v899, %v1190
      %v1192 = vpop.f32.mrf.mxu0
      %v1193 = vpop.f32.mrf.mxu0
      %v1194 = vadd.f32 %v902, %v1193
      %v1195 = vpop.f32.mrf.mxu0
      %1196 = vmatprep.mubr.bf16.mxu0 0
      %1197 = vmatmul.mubr.bf16.gmra.mxu0 %v1049
      %v1198 = vpop.f32.mrf.mxu0
      %v1199 = vadd.f32 %v907, %v1198
      %v1200 = vpop.f32.mrf.mxu0
      %v1201 = vpop.f32.mrf.mxu0
      %v1202 = vadd.f32 %v910, %v1201
      %v1203 = vpop.f32.mrf.mxu0
      %1204 = vmatprep.mubr.bf16.mxu0 0
      %1205 = vmatmul.mubr.bf16.gmra.mxu0 %v1052
      %v1206 = vpop.f32.mrf.mxu0
      %v1207 = vadd.f32 %v915, %v1206
      %v1208 = vpop.f32.mrf.mxu0
      %v1209 = vpop.f32.mrf.mxu0
      %v1210 = vadd.f32 %v918, %v1209
      %v1211 = vpop.f32.mrf.mxu0
      %1212 = vmatprep.mubr.bf16.mxu0 0
      %1213 = vmatmul.mubr.bf16.gmra.mxu0 %v1055
      %v1214 = vpop.f32.mrf.mxu0
      %v1215 = vadd.f32 %v923, %v1214
      %v1216 = vpop.f32.mrf.mxu0
      %v1217 = vpop.f32.mrf.mxu0
      %v1218 = vadd.f32 %v926, %v1217
      %v1219 = vpop.f32.mrf.mxu0
      %1220 = vdwg.mxu0
      %vm1237 = vcmask 1042432
      %vm1238 = vcmask 1046532
      %vm1239 = vmor %vm1237, %vm1238
      %v1240 = vrot.slane %v223, 5
      %v1241 = vrot.slane %v1240, 4
      %v1242 = vrot.slane %v224, 5
      %v1243 = vsel %vm1239, %v1241, %v1242
      %v1244 = vrot.slane %v1242, 4
      %v1245 = vrot.slane %v225, 5
      %v1246 = vsel %vm1239, %v1244, %v1245
      %v1247 = vrot.slane %v226, 5
      %v1248 = vrot.slane %v1247, 4
      %v1249 = vrot.slane %v227, 5
      %v1250 = vsel %vm1239, %v1248, %v1249
      %v1251 = vrot.slane %v1249, 4
      %v1252 = vrot.slane %v228, 5
      %v1253 = vsel %vm1239, %v1251, %v1252
      %v1254 = vrot.slane %v229, 5
      %v1255 = vrot.slane %v1254, 4
      %v1256 = vrot.slane %v230, 5
      %v1257 = vsel %vm1239, %v1255, %v1256
      %v1258 = vrot.slane %v1256, 4
      %v1259 = vrot.slane %v231, 5
      %v1260 = vsel %vm1239, %v1258, %v1259
      %v1261 = vrot.slane %v232, 5
      %v1262 = vrot.slane %v1261, 4
      %v1263 = vrot.slane %v233, 5
      %v1264 = vsel %vm1239, %v1262, %v1263
      %v1265 = vrot.slane %v1263, 4
      %v1266 = vrot.slane %v234, 5
      %v1267 = vsel %vm1239, %v1265, %v1266
      %v1268 = vrot.slane %v235, 5
      %v1269 = vrot.slane %v1268, 4
      %v1270 = vrot.slane %v236, 5
      %v1271 = vsel %vm1239, %v1269, %v1270
      %v1272 = vrot.slane %v1270, 4
      %v1273 = vrot.slane %v237, 5
      %v1274 = vsel %vm1239, %v1272, %v1273
      %v1275 = vrot.slane %v238, 5
      %v1276 = vrot.slane %v1275, 4
      %v1277 = vrot.slane %v239, 5
      %v1278 = vsel %vm1239, %v1276, %v1277
      %v1279 = vrot.slane %v1277, 4
      %v1280 = vrot.slane %v240, 5
      %v1281 = vsel %vm1239, %v1279, %v1280
      %v1282 = vrot.slane %v241, 5
      %v1283 = vrot.slane %v1282, 4
      %v1284 = vrot.slane %v242, 5
      %v1285 = vsel %vm1239, %v1283, %v1284
      %v1286 = vrot.slane %v1284, 4
      %v1287 = vrot.slane %v243, 5
      %v1288 = vsel %vm1239, %v1286, %v1287
      %v1289 = vrot.slane %v244, 5
      %v1290 = vrot.slane %v1289, 4
      %v1291 = vrot.slane %v245, 5
      %v1292 = vsel %vm1239, %v1290, %v1291
      %v1293 = vrot.slane %v1291, 4
      %v1294 = vrot.slane %v246, 5
      %v1295 = vsel %vm1239, %v1293, %v1294
      %v1296 = vrot.slane %v247, 5
      %v1297 = vrot.slane %v1296, 4
      %v1298 = vrot.slane %v248, 5
      %v1299 = vsel %vm1239, %v1297, %v1298
      %v1300 = vrot.slane %v1298, 4
      %v1301 = vrot.slane %v249, 5
      %v1302 = vsel %vm1239, %v1300, %v1301
      %v1303 = vrot.slane %v250, 5
      %v1304 = vrot.slane %v1303, 4
      %v1305 = vrot.slane %v251, 5
      %v1306 = vsel %vm1239, %v1304, %v1305
      %v1307 = vrot.slane %v1305, 4
      %v1308 = vrot.slane %v252, 5
      %v1309 = vsel %vm1239, %v1307, %v1308
      %v1310 = vrot.slane %v253, 5
      %v1311 = vrot.slane %v1310, 4
      %v1312 = vrot.slane %v254, 5
      %v1313 = vsel %vm1239, %v1311, %v1312
      %v1314 = vrot.slane %v1312, 4
      %v1315 = vrot.slane %v255, 5
      %v1316 = vsel %vm1239, %v1314, %v1315
      %v1317 = vrot.slane %v256, 5
      %v1318 = vrot.slane %v1317, 4
      %v1319 = vrot.slane %v257, 5
      %v1320 = vsel %vm1239, %v1318, %v1319
      %v1321 = vrot.slane %v1319, 4
      %v1322 = vrot.slane %v258, 5
      %v1323 = vsel %vm1239, %v1321, %v1322
      %v1324 = vrot.slane %v259, 5
      %v1325 = vrot.slane %v1324, 4
      %v1326 = vrot.slane %v260, 5
      %v1327 = vsel %vm1239, %v1325, %v1326
      %v1328 = vrot.slane %v1326, 4
      %v1329 = vrot.slane %v261, 5
      %v1330 = vsel %vm1239, %v1328, %v1329
      %v1331 = vrot.slane %v262, 5
      %v1332 = vrot.slane %v1331, 4
      %v1333 = vrot.slane %v263, 5
      %v1334 = vsel %vm1239, %v1332, %v1333
      %v1335 = vrot.slane %v1333, 4
      %v1336 = vrot.slane %v264, 5
      %v1337 = vsel %vm1239, %v1335, %v1336
      %v1338 = vrot.slane %v265, 5
      %v1339 = vrot.slane %v1338, 4
      %v1340 = vrot.slane %v266, 5
      %v1341 = vsel %vm1239, %v1339, %v1340
      %v1342 = vrot.slane %v1340, 4
      %v1343 = vrot.slane %v267, 5
      %v1344 = vsel %vm1239, %v1342, %v1343
      %v1345 = vrot.slane %v268, 5
      %v1346 = vrot.slane %v1345, 4
      %v1347 = vrot.slane %v269, 5
      %v1348 = vsel %vm1239, %v1346, %v1347
      %v1349 = vrot.slane %v1347, 4
      %v1350 = vrot.slane %v270, 5
      %v1351 = vsel %vm1239, %v1349, %v1350
      %s1352 = scalar_lea.vmem %s210, 8
      %v1353 = vld [vmem:[%s1352] sm:$0xf]
      %v1354 = vunpack.c.l.b16 %v1243
      %v1355 = vunpack.c.l.b16 %v1246
      %v1356 = vunpack.c.l.b16 %v1250
      %v1357 = vunpack.c.l.b16 %v1253
      %v1358 = vunpack.c.l.b16 %v1257
      %v1359 = vunpack.c.l.b16 %v1260
      %v1360 = vunpack.c.l.b16 %v1264
      %v1361 = vunpack.c.l.b16 %v1267
      %v1362 = vunpack.c.l.b16 %v1271
      %v1363 = vunpack.c.l.b16 %v1274
      %v1364 = vunpack.c.l.b16 %v1278
      %v1365 = vunpack.c.l.b16 %v1281
      %v1366 = vunpack.c.l.b16 %v1285
      %v1367 = vunpack.c.l.b16 %v1288
      %v1368 = vunpack.c.l.b16 %v1292
      %v1369 = vunpack.c.l.b16 %v1295
      %v1370 = vunpack.c.l.b16 %v1299
      %v1371 = vunpack.c.l.b16 %v1302
      %v1372 = vunpack.c.l.b16 %v1306
      %v1373 = vunpack.c.l.b16 %v1309
      %v1374 = vunpack.c.l.b16 %v1313
      %v1375 = vunpack.c.l.b16 %v1316
      %v1376 = vunpack.c.l.b16 %v1320
      %v1377 = vunpack.c.l.b16 %v1323
      %v1378 = vunpack.c.l.b16 %v1327
      %v1379 = vunpack.c.l.b16 %v1330
      %v1380 = vunpack.c.l.b16 %v1334
      %v1381 = vunpack.c.l.b16 %v1337
      %v1382 = vunpack.c.l.b16 %v1341
      %v1383 = vunpack.c.l.b16 %v1344
      %v1384 = vunpack.c.l.b16 %v1348
      %v1385 = vunpack.c.l.b16 %v1351
      %v1386 = vpack.c.b16 %v1355, %v1354
      %v1387 = vpack.c.b16 %v1357, %v1356
      %v1388 = vpack.c.b16 %v1359, %v1358
      %v1389 = vpack.c.b16 %v1361, %v1360
      %v1390 = vpack.c.b16 %v1363, %v1362
      %v1391 = vpack.c.b16 %v1365, %v1364
      %v1392 = vpack.c.b16 %v1367, %v1366
      %v1393 = vpack.c.b16 %v1369, %v1368
      %v1394 = vpack.c.b16 %v1371, %v1370
      %v1395 = vpack.c.b16 %v1373, %v1372
      %v1396 = vpack.c.b16 %v1375, %v1374
      %v1397 = vpack.c.b16 %v1377, %v1376
      %v1398 = vpack.c.b16 %v1379, %v1378
      %v1399 = vpack.c.b16 %v1381, %v1380
      %v1400 = vpack.c.b16 %v1383, %v1382
      %v1401 = vpack.c.b16 %v1385, %v1384
      %v1403 = vsel %vm715, %v1386, 0
      %v1406 = vsel %vm715, %v1387, 0
      %v1409 = vsel %vm715, %v1388, 0
      %v1412 = vsel %vm715, %v1389, 0
      %v1415 = vsel %vm715, %v1390, 0
      %v1418 = vsel %vm715, %v1391, 0
      %v1421 = vsel %vm715, %v1392, 0
      %v1424 = vsel %vm715, %v1393, 0
      %v1427 = vsel %vm715, %v1394, 0
      %v1430 = vsel %vm715, %v1395, 0
      %v1433 = vsel %vm715, %v1396, 0
      %v1436 = vsel %vm715, %v1397, 0
      %v1439 = vsel %vm715, %v1398, 0
      %v1442 = vsel %vm715, %v1399, 0
      %v1445 = vsel %vm715, %v1400, 0
      %v1448 = vsel %vm715, %v1401, 0
      %v1451 = vsel %vm764, %v1353, 0
      %1453 = vmatprep.subr.bf16.mxu0 0
      %1454 = vmatpush1.bf16.msra.mxu0 0
      %1455 = vmatprep.subr.bf16.mxu0 0
      %1456 = vmatpush1.bf16.msra.mxu0 0
      %1457 = vmatprep.subr.bf16.mxu0 0
      %1458 = vmatpush1.bf16.msra.mxu0 0
      %1459 = vmatprep.subr.bf16.mxu0 0
      %1460 = vmatpush1.bf16.msra.mxu0 0
      %1461 = vmatprep.subr.bf16.mxu0 0
      %1462 = vmatpush1.bf16.msra.mxu0 0
      %1463 = vmatprep.subr.bf16.mxu0 0
      %1464 = vmatpush1.bf16.msra.mxu0 0
      %1465 = vmatprep.subr.bf16.mxu0 0
      %1466 = vmatpush1.bf16.msra.mxu0 0
      %1467 = vmatprep.subr.bf16.mxu0 0
      %1468 = vmatpush1.bf16.msra.mxu0 %v1451
      %1469 = vmatprep.subr.bf16.mxu0 0
      %1470 = vmatpush2.bf16.msra.mxu0 0
      %1471 = vmatprep.subr.bf16.mxu0 0
      %1472 = vmatpush2.bf16.msra.mxu0 0
      %1473 = vmatprep.subr.bf16.mxu0 0
      %1474 = vmatpush2.bf16.msra.mxu0 0
      %1475 = vmatprep.subr.bf16.mxu0 0
      %1476 = vmatpush2.bf16.msra.mxu0 0
      %1477 = vmatprep.subr.bf16.mxu0 0
      %1478 = vmatpush2.bf16.msra.mxu0 0
      %1479 = vmatprep.subr.bf16.mxu0 0
      %1480 = vmatpush2.bf16.msra.mxu0 0
      %1481 = vmatprep.subr.bf16.mxu0 0
      %1482 = vmatpush2.bf16.msra.mxu0 0
      %1483 = vmatprep.subr.bf16.mxu0 0
      %1484 = vmatpush2.bf16.msra.mxu0 0
      %1485 = vmatprep.mubr.bf16.mxu0 0
      %1486 = vmatmul.mubr.bf16.gmra.mxu0 %v1403
      %v1487 = vpop.f32.mrf.mxu0
      %v1488 = vadd.f32 0.0, %v1487
      %v1489 = vpop.f32.mrf.mxu0
      %v1490 = vpop.f32.mrf.mxu0
      %v1491 = vadd.f32 0.0, %v1490
      %v1492 = vpop.f32.mrf.mxu0
      %1493 = vmatprep.mubr.bf16.mxu0 0
      %1494 = vmatmul.mubr.bf16.gmra.mxu0 %v1406
      %v1495 = vpop.f32.mrf.mxu0
      %v1496 = vadd.f32 0.0, %v1495
      %v1497 = vpop.f32.mrf.mxu0
      %v1498 = vpop.f32.mrf.mxu0
      %v1499 = vadd.f32 0.0, %v1498
      %v1500 = vpop.f32.mrf.mxu0
      %1501 = vmatprep.mubr.bf16.mxu0 0
      %1502 = vmatmul.mubr.bf16.gmra.mxu0 %v1409
      %v1503 = vpop.f32.mrf.mxu0
      %v1504 = vadd.f32 0.0, %v1503
      %v1505 = vpop.f32.mrf.mxu0
      %v1506 = vpop.f32.mrf.mxu0
      %v1507 = vadd.f32 0.0, %v1506
      %v1508 = vpop.f32.mrf.mxu0
      %1509 = vmatprep.mubr.bf16.mxu0 0
      %1510 = vmatmul.mubr.bf16.gmra.mxu0 %v1412
      %v1511 = vpop.f32.mrf.mxu0
      %v1512 = vadd.f32 0.0, %v1511
      %v1513 = vpop.f32.mrf.mxu0
      %v1514 = vpop.f32.mrf.mxu0
      %v1515 = vadd.f32 0.0, %v1514
      %v1516 = vpop.f32.mrf.mxu0
      %1517 = vmatprep.mubr.bf16.mxu0 0
      %1518 = vmatmul.mubr.bf16.gmra.mxu0 %v1415
      %v1519 = vpop.f32.mrf.mxu0
      %v1520 = vadd.f32 0.0, %v1519
      %v1521 = vpop.f32.mrf.mxu0
      %v1522 = vpop.f32.mrf.mxu0
      %v1523 = vadd.f32 0.0, %v1522
      %v1524 = vpop.f32.mrf.mxu0
      %1525 = vmatprep.mubr.bf16.mxu0 0
      %1526 = vmatmul.mubr.bf16.gmra.mxu0 %v1418
      %v1527 = vpop.f32.mrf.mxu0
      %v1528 = vadd.f32 0.0, %v1527
      %v1529 = vpop.f32.mrf.mxu0
      %v1530 = vpop.f32.mrf.mxu0
      %v1531 = vadd.f32 0.0, %v1530
      %v1532 = vpop.f32.mrf.mxu0
      %1533 = vmatprep.mubr.bf16.mxu0 0
      %1534 = vmatmul.mubr.bf16.gmra.mxu0 %v1421
      %v1535 = vpop.f32.mrf.mxu0
      %v1536 = vadd.f32 0.0, %v1535
      %v1537 = vpop.f32.mrf.mxu0
      %v1538 = vpop.f32.mrf.mxu0
      %v1539 = vadd.f32 0.0, %v1538
      %v1540 = vpop.f32.mrf.mxu0
      %1541 = vmatprep.mubr.bf16.mxu0 0
      %1542 = vmatmul.mubr.bf16.gmra.mxu0 %v1424
      %v1543 = vpop.f32.mrf.mxu0
      %v1544 = vadd.f32 0.0, %v1543
      %v1545 = vpop.f32.mrf.mxu0
      %v1546 = vpop.f32.mrf.mxu0
      %v1547 = vadd.f32 0.0, %v1546
      %v1548 = vpop.f32.mrf.mxu0
      %1549 = vmatprep.mubr.bf16.mxu0 0
      %1550 = vmatmul.mubr.bf16.gmra.mxu0 %v1427
      %v1551 = vpop.f32.mrf.mxu0
      %v1552 = vadd.f32 0.0, %v1551
      %v1553 = vpop.f32.mrf.mxu0
      %v1554 = vpop.f32.mrf.mxu0
      %v1555 = vadd.f32 0.0, %v1554
      %v1556 = vpop.f32.mrf.mxu0
      %1557 = vmatprep.mubr.bf16.mxu0 0
      %1558 = vmatmul.mubr.bf16.gmra.mxu0 %v1430
      %v1559 = vpop.f32.mrf.mxu0
      %v1560 = vadd.f32 0.0, %v1559
      %v1561 = vpop.f32.mrf.mxu0
      %v1562 = vpop.f32.mrf.mxu0
      %v1563 = vadd.f32 0.0, %v1562
      %v1564 = vpop.f32.mrf.mxu0
      %1565 = vmatprep.mubr.bf16.mxu0 0
      %1566 = vmatmul.mubr.bf16.gmra.mxu0 %v1433
      %v1567 = vpop.f32.mrf.mxu0
      %v1568 = vadd.f32 0.0, %v1567
      %v1569 = vpop.f32.mrf.mxu0
      %v1570 = vpop.f32.mrf.mxu0
      %v1571 = vadd.f32 0.0, %v1570
      %v1572 = vpop.f32.mrf.mxu0
      %1573 = vmatprep.mubr.bf16.mxu0 0
      %1574 = vmatmul.mubr.bf16.gmra.mxu0 %v1436
      %v1575 = vpop.f32.mrf.mxu0
      %v1576 = vadd.f32 0.0, %v1575
      %v1577 = vpop.f32.mrf.mxu0
      %v1578 = vpop.f32.mrf.mxu0
      %v1579 = vadd.f32 0.0, %v1578
      %v1580 = vpop.f32.mrf.mxu0
      %1581 = vmatprep.mubr.bf16.mxu0 0
      %1582 = vmatmul.mubr.bf16.gmra.mxu0 %v1439
      %v1583 = vpop.f32.mrf.mxu0
      %v1584 = vadd.f32 0.0, %v1583
      %v1585 = vpop.f32.mrf.mxu0
      %v1586 = vpop.f32.mrf.mxu0
      %v1587 = vadd.f32 0.0, %v1586
      %v1588 = vpop.f32.mrf.mxu0
      %1589 = vmatprep.mubr.bf16.mxu0 0
      %1590 = vmatmul.mubr.bf16.gmra.mxu0 %v1442
      %v1591 = vpop.f32.mrf.mxu0
      %v1592 = vadd.f32 0.0, %v1591
      %v1593 = vpop.f32.mrf.mxu0
      %v1594 = vpop.f32.mrf.mxu0
      %v1595 = vadd.f32 0.0, %v1594
      %v1596 = vpop.f32.mrf.mxu0
      %1597 = vmatprep.mubr.bf16.mxu0 0
      %1598 = vmatmul.mubr.bf16.gmra.mxu0 %v1445
      %v1599 = vpop.f32.mrf.mxu0
      %v1600 = vadd.f32 0.0, %v1599
      %v1601 = vpop.f32.mrf.mxu0
      %v1602 = vpop.f32.mrf.mxu0
      %v1603 = vadd.f32 0.0, %v1602
      %v1604 = vpop.f32.mrf.mxu0
      %1605 = vmatprep.mubr.bf16.mxu0 0
      %1606 = vmatmul.mubr.bf16.gmra.mxu0 %v1448
      %v1607 = vpop.f32.mrf.mxu0
      %v1608 = vadd.f32 0.0, %v1607
      %v1609 = vpop.f32.mrf.mxu0
      %v1610 = vpop.f32.mrf.mxu0
      %v1611 = vadd.f32 0.0, %v1610
      %v1612 = vpop.f32.mrf.mxu0
      %1613 = vdwg.mxu0
      %v1614 = vadd.f32 %v1095, %v1488
      %v1615 = vadd.f32 %v1098, %v1491
      %v1616 = vadd.f32 %v1103, %v1496
      %v1617 = vadd.f32 %v1106, %v1499
      %v1618 = vadd.f32 %v1111, %v1504
      %v1619 = vadd.f32 %v1114, %v1507
      %v1620 = vadd.f32 %v1119, %v1512
      %v1621 = vadd.f32 %v1122, %v1515
      %v1622 = vadd.f32 %v1127, %v1520
      %v1623 = vadd.f32 %v1130, %v1523
      %v1624 = vadd.f32 %v1135, %v1528
      %v1625 = vadd.f32 %v1138, %v1531
      %v1626 = vadd.f32 %v1143, %v1536
      %v1627 = vadd.f32 %v1146, %v1539
      %v1628 = vadd.f32 %v1151, %v1544
      %v1629 = vadd.f32 %v1154, %v1547
      %v1630 = vadd.f32 %v1159, %v1552
      %v1631 = vadd.f32 %v1162, %v1555
      %v1632 = vadd.f32 %v1167, %v1560
      %v1633 = vadd.f32 %v1170, %v1563
      %v1634 = vadd.f32 %v1175, %v1568
      %v1635 = vadd.f32 %v1178, %v1571
      %v1636 = vadd.f32 %v1183, %v1576
      %v1637 = vadd.f32 %v1186, %v1579
      %v1638 = vadd.f32 %v1191, %v1584
      %v1639 = vadd.f32 %v1194, %v1587
      %v1640 = vadd.f32 %v1199, %v1592
      %v1641 = vadd.f32 %v1202, %v1595
      %v1642 = vadd.f32 %v1207, %v1600
      %v1643 = vadd.f32 %v1210, %v1603
      %v1644 = vadd.f32 %v1215, %v1608
      %v1645 = vadd.f32 %v1218, %v1611
      %s1646 = scalar_lea.vmem %s210, 12
      %v1647 = vld [vmem:[%s1646] sm:$0xf]
      %v1650 = vunpack.c.l.b16 %v271
      %v1651 = vunpack.c.l.b16 %v272
      %v1652 = vpack.c.b16 %v1651, %v1650
      %v1654 = vsel %vm715, %v1652, 0
      %v1657 = vsel %vm764, %v1647, 0
      %1659 = vmatprep.subr.bf16.mxu0 0
      %1660 = vmatpush1.bf16.msra.mxu0 0
      %1661 = vmatprep.subr.bf16.mxu0 0
      %1662 = vmatpush1.bf16.msra.mxu0 0
      %1663 = vmatprep.subr.bf16.mxu0 0
      %1664 = vmatpush1.bf16.msra.mxu0 0
      %1665 = vmatprep.subr.bf16.mxu0 0
      %1666 = vmatpush1.bf16.msra.mxu0 0
      %1667 = vmatprep.subr.bf16.mxu0 0
      %1668 = vmatpush1.bf16.msra.mxu0 0
      %1669 = vmatprep.subr.bf16.mxu0 0
      %1670 = vmatpush1.bf16.msra.mxu0 0
      %1671 = vmatprep.subr.bf16.mxu0 0
      %1672 = vmatpush1.bf16.msra.mxu0 0
      %1673 = vmatprep.subr.bf16.mxu0 0
      %1674 = vmatpush1.bf16.msra.mxu0 %v1657
      %1675 = vmatprep.subr.bf16.mxu0 0
      %1676 = vmatpush2.bf16.msra.mxu0 0
      %1677 = vmatprep.subr.bf16.mxu0 0
      %1678 = vmatpush2.bf16.msra.mxu0 0
      %1679 = vmatprep.subr.bf16.mxu0 0
      %1680 = vmatpush2.bf16.msra.mxu0 0
      %1681 = vmatprep.subr.bf16.mxu0 0
      %1682 = vmatpush2.bf16.msra.mxu0 0
      %1683 = vmatprep.subr.bf16.mxu0 0
      %1684 = vmatpush2.bf16.msra.mxu0 0
      %1685 = vmatprep.subr.bf16.mxu0 0
      %1686 = vmatpush2.bf16.msra.mxu0 0
      %1687 = vmatprep.subr.bf16.mxu0 0
      %1688 = vmatpush2.bf16.msra.mxu0 0
      %1689 = vmatprep.subr.bf16.mxu0 0
      %1690 = vmatpush2.bf16.msra.mxu0 0
      %1691 = vmatprep.mubr.bf16.mxu0 0
      %1692 = vmatmul.mubr.bf16.gmra.mxu0 %v1013
      %v1693 = vpop.f32.mrf.mxu0
      %v1694 = vadd.f32 0.0, %v1693
      %v1695 = vpop.f32.mrf.mxu0
      %v1696 = vpop.f32.mrf.mxu0
      %v1697 = vadd.f32 0.0, %v1696
      %v1698 = vpop.f32.mrf.mxu0
      %1699 = vmatprep.mubr.bf16.mxu0 0
      %1700 = vmatmul.mubr.bf16.gmra.mxu0 %v1016
      %v1701 = vpop.f32.mrf.mxu0
      %v1702 = vadd.f32 0.0, %v1701
      %v1703 = vpop.f32.mrf.mxu0
      %v1704 = vpop.f32.mrf.mxu0
      %v1705 = vadd.f32 0.0, %v1704
      %v1706 = vpop.f32.mrf.mxu0
      %1707 = vmatprep.mubr.bf16.mxu0 0
      %1708 = vmatmul.mubr.bf16.gmra.mxu0 %v1019
      %v1709 = vpop.f32.mrf.mxu0
      %v1710 = vadd.f32 0.0, %v1709
      %v1711 = vpop.f32.mrf.mxu0
      %v1712 = vpop.f32.mrf.mxu0
      %v1713 = vadd.f32 0.0, %v1712
      %v1714 = vpop.f32.mrf.mxu0
      %1715 = vmatprep.mubr.bf16.mxu0 0
      %1716 = vmatmul.mubr.bf16.gmra.mxu0 %v1022
      %v1717 = vpop.f32.mrf.mxu0
      %v1718 = vadd.f32 0.0, %v1717
      %v1719 = vpop.f32.mrf.mxu0
      %v1720 = vpop.f32.mrf.mxu0
      %v1721 = vadd.f32 0.0, %v1720
      %v1722 = vpop.f32.mrf.mxu0
      %1723 = vmatprep.mubr.bf16.mxu0 0
      %1724 = vmatmul.mubr.bf16.gmra.mxu0 %v1025
      %v1725 = vpop.f32.mrf.mxu0
      %v1726 = vadd.f32 0.0, %v1725
      %v1727 = vpop.f32.mrf.mxu0
      %v1728 = vpop.f32.mrf.mxu0
      %v1729 = vadd.f32 0.0, %v1728
      %v1730 = vpop.f32.mrf.mxu0
      %1731 = vmatprep.mubr.bf16.mxu0 0
      %1732 = vmatmul.mubr.bf16.gmra.mxu0 %v1028
      %v1733 = vpop.f32.mrf.mxu0
      %v1734 = vadd.f32 0.0, %v1733
      %v1735 = vpop.f32.mrf.mxu0
      %v1736 = vpop.f32.mrf.mxu0
      %v1737 = vadd.f32 0.0, %v1736
      %v1738 = vpop.f32.mrf.mxu0
      %1739 = vmatprep.mubr.bf16.mxu0 0
      %1740 = vmatmul.mubr.bf16.gmra.mxu0 %v1031
      %v1741 = vpop.f32.mrf.mxu0
      %v1742 = vadd.f32 0.0, %v1741
      %v1743 = vpop.f32.mrf.mxu0
      %v1744 = vpop.f32.mrf.mxu0
      %v1745 = vadd.f32 0.0, %v1744
      %v1746 = vpop.f32.mrf.mxu0
      %1747 = vmatprep.mubr.bf16.mxu0 0
      %1748 = vmatmul.mubr.bf16.gmra.mxu0 %v1034
      %v1749 = vpop.f32.mrf.mxu0
      %v1750 = vadd.f32 0.0, %v1749
      %v1751 = vpop.f32.mrf.mxu0
      %v1752 = vpop.f32.mrf.mxu0
      %v1753 = vadd.f32 0.0, %v1752
      %v1754 = vpop.f32.mrf.mxu0
      %1755 = vmatprep.mubr.bf16.mxu0 0
      %1756 = vmatmul.mubr.bf16.gmra.mxu0 %v1037
      %v1757 = vpop.f32.mrf.mxu0
      %v1758 = vadd.f32 0.0, %v1757
      %v1759 = vpop.f32.mrf.mxu0
      %v1760 = vpop.f32.mrf.mxu0
      %v1761 = vadd.f32 0.0, %v1760
      %v1762 = vpop.f32.mrf.mxu0
      %1763 = vmatprep.mubr.bf16.mxu0 0
      %1764 = vmatmul.mubr.bf16.gmra.mxu0 %v1040
      %v1765 = vpop.f32.mrf.mxu0
      %v1766 = vadd.f32 0.0, %v1765
      %v1767 = vpop.f32.mrf.mxu0
      %v1768 = vpop.f32.mrf.mxu0
      %v1769 = vadd.f32 0.0, %v1768
      %v1770 = vpop.f32.mrf.mxu0
      %1771 = vmatprep.mubr.bf16.mxu0 0
      %1772 = vmatmul.mubr.bf16.gmra.mxu0 %v1043
      %v1773 = vpop.f32.mrf.mxu0
      %v1774 = vadd.f32 0.0, %v1773
      %v1775 = vpop.f32.mrf.mxu0
      %v1776 = vpop.f32.mrf.mxu0
      %v1777 = vadd.f32 0.0, %v1776
      %v1778 = vpop.f32.mrf.mxu0
      %1779 = vmatprep.mubr.bf16.mxu0 0
      %1780 = vmatmul.mubr.bf16.gmra.mxu0 %v1046
      %v1781 = vpop.f32.mrf.mxu0
      %v1782 = vadd.f32 0.0, %v1781
      %v1783 = vpop.f32.mrf.mxu0
      %v1784 = vpop.f32.mrf.mxu0
      %v1785 = vadd.f32 0.0, %v1784
      %v1786 = vpop.f32.mrf.mxu0
      %1787 = vmatprep.mubr.bf16.mxu0 0
      %1788 = vmatmul.mubr.bf16.gmra.mxu0 %v1049
      %v1789 = vpop.f32.mrf.mxu0
      %v1790 = vadd.f32 0.0, %v1789
      %v1791 = vpop.f32.mrf.mxu0
      %v1792 = vpop.f32.mrf.mxu0
      %v1793 = vadd.f32 0.0, %v1792
      %v1794 = vpop.f32.mrf.mxu0
      %1795 = vmatprep.mubr.bf16.mxu0 0
      %1796 = vmatmul.mubr.bf16.gmra.mxu0 %v1052
      %v1797 = vpop.f32.mrf.mxu0
      %v1798 = vadd.f32 0.0, %v1797
      %v1799 = vpop.f32.mrf.mxu0
      %v1800 = vpop.f32.mrf.mxu0
      %v1801 = vadd.f32 0.0, %v1800
      %v1802 = vpop.f32.mrf.mxu0
      %1803 = vmatprep.mubr.bf16.mxu0 0
      %1804 = vmatmul.mubr.bf16.gmra.mxu0 %v1055
      %v1805 = vpop.f32.mrf.mxu0
      %v1806 = vadd.f32 0.0, %v1805
      %v1807 = vpop.f32.mrf.mxu0
      %v1808 = vpop.f32.mrf.mxu0
      %v1809 = vadd.f32 0.0, %v1808
      %v1810 = vpop.f32.mrf.mxu0
      %1811 = vmatprep.mubr.bf16.mxu0 0
      %1812 = vmatmul.mubr.bf16.gmra.mxu0 %v1654
      %v1813 = vpop.f32.mrf.mxu0
      %v1814 = vadd.f32 0.0, %v1813
      %v1815 = vpop.f32.mrf.mxu0
      %v1816 = vpop.f32.mrf.mxu0
      %v1817 = vadd.f32 0.0, %v1816
      %v1818 = vpop.f32.mrf.mxu0
      %1819 = vdwg.mxu0
      %v1820 = vadd.f32 %v1614, %v1694
      %v1821 = vadd.f32 %v1615, %v1697
      %v1822 = vadd.f32 %v1616, %v1702
      %v1823 = vadd.f32 %v1617, %v1705
      %v1824 = vadd.f32 %v1618, %v1710
      %v1825 = vadd.f32 %v1619, %v1713
      %v1826 = vadd.f32 %v1620, %v1718
      %v1827 = vadd.f32 %v1621, %v1721
      %v1828 = vadd.f32 %v1622, %v1726
      %v1829 = vadd.f32 %v1623, %v1729
      %v1830 = vadd.f32 %v1624, %v1734
      %v1831 = vadd.f32 %v1625, %v1737
      %v1832 = vadd.f32 %v1626, %v1742
      %v1833 = vadd.f32 %v1627, %v1745
      %v1834 = vadd.f32 %v1628, %v1750
      %v1835 = vadd.f32 %v1629, %v1753
      %v1836 = vadd.f32 %v1630, %v1758
      %v1837 = vadd.f32 %v1631, %v1761
      %v1838 = vadd.f32 %v1632, %v1766
      %v1839 = vadd.f32 %v1633, %v1769
      %v1840 = vadd.f32 %v1634, %v1774
      %v1841 = vadd.f32 %v1635, %v1777
      %v1842 = vadd.f32 %v1636, %v1782
      %v1843 = vadd.f32 %v1637, %v1785
      %v1844 = vadd.f32 %v1638, %v1790
      %v1845 = vadd.f32 %v1639, %v1793
      %v1846 = vadd.f32 %v1640, %v1798
      %v1847 = vadd.f32 %v1641, %v1801
      %v1848 = vadd.f32 %v1642, %v1806
      %v1849 = vadd.f32 %v1643, %v1809
      %v1850 = vadd.f32 %v1644, %v1814
      %v1851 = vadd.f32 %v1645, %v1817
      %v1853 = vshrl.u32 %v271, 16
      %v1855 = vrot.slane %v1853, 4
      %v1856 = vshll.u32 %v271, 16
      %v1858 = vrot.slane %v1856, 5
      %v1859 = vor.u32 %v1855, %v1858
      %v1860 = vrot.slane %v1859, 4
      %v1862 = vshll.u32 %v272, 16
      %v1864 = vrot.slane %v1862, 5
      %v1865 = vsel %vm280, %v1860, %v1864
      %v1866 = vshrl.u32 %v272, 16
      %v1868 = vrot.slane %v1866, 4
      %v1869 = vor.u32 %v1868, %v1864
      %v1870 = vrot.slane %v1869, 4
      %v1872 = vshll.u32 %v273, 16
      %v1874 = vrot.slane %v1872, 5
      %v1875 = vsel %vm280, %v1870, %v1874
      %s1876 = scalar_lea.vmem %s210, 16
      %v1877 = vld [vmem:[%s1876] sm:$0xf]
      %v1878 = vunpack.c.l.b16 %v1865
      %v1879 = vunpack.c.l.b16 %v1875
      %v1880 = vpack.c.b16 %v1879, %v1878
      %v1882 = vsel %vm715, %v1880, 0
      %v1885 = vsel %vm764, %v1877, 0
      %1887 = vmatprep.subr.bf16.mxu0 0
      %1888 = vmatpush1.bf16.msra.mxu0 0
      %1889 = vmatprep.subr.bf16.mxu0 0
      %1890 = vmatpush1.bf16.msra.mxu0 0
      %1891 = vmatprep.subr.bf16.mxu0 0
      %1892 = vmatpush1.bf16.msra.mxu0 0
      %1893 = vmatprep.subr.bf16.mxu0 0
      %1894 = vmatpush1.bf16.msra.mxu0 0
      %1895 = vmatprep.subr.bf16.mxu0 0
      %1896 = vmatpush1.bf16.msra.mxu0 0
      %1897 = vmatprep.subr.bf16.mxu0 0
      %1898 = vmatpush1.bf16.msra.mxu0 0
      %1899 = vmatprep.subr.bf16.mxu0 0
      %1900 = vmatpush1.bf16.msra.mxu0 0
      %1901 = vmatprep.subr.bf16.mxu0 0
      %1902 = vmatpush1.bf16.msra.mxu0 %v1885
      %1903 = vmatprep.subr.bf16.mxu0 0
      %1904 = vmatpush2.bf16.msra.mxu0 0
      %1905 = vmatprep.subr.bf16.mxu0 0
      %1906 = vmatpush2.bf16.msra.mxu0 0
      %1907 = vmatprep.subr.bf16.mxu0 0
      %1908 = vmatpush2.bf16.msra.mxu0 0
      %1909 = vmatprep.subr.bf16.mxu0 0
      %1910 = vmatpush2.bf16.msra.mxu0 0
      %1911 = vmatprep.subr.bf16.mxu0 0
      %1912 = vmatpush2.bf16.msra.mxu0 0
      %1913 = vmatprep.subr.bf16.mxu0 0
      %1914 = vmatpush2.bf16.msra.mxu0 0
      %1915 = vmatprep.subr.bf16.mxu0 0
      %1916 = vmatpush2.bf16.msra.mxu0 0
      %1917 = vmatprep.subr.bf16.mxu0 0
      %1918 = vmatpush2.bf16.msra.mxu0 0
      %1919 = vmatprep.mubr.bf16.mxu0 0
      %1920 = vmatmul.mubr.bf16.gmra.mxu0 %v720
      %v1921 = vpop.f32.mrf.mxu0
      %v1922 = vadd.f32 0.0, %v1921
      %v1923 = vpop.f32.mrf.mxu0
      %v1924 = vpop.f32.mrf.mxu0
      %v1925 = vadd.f32 0.0, %v1924
      %v1926 = vpop.f32.mrf.mxu0
      %1927 = vmatprep.mubr.bf16.mxu0 0
      %1928 = vmatmul.mubr.bf16.gmra.mxu0 %v723
      %v1929 = vpop.f32.mrf.mxu0
      %v1930 = vadd.f32 0.0, %v1929
      %v1931 = vpop.f32.mrf.mxu0
      %v1932 = vpop.f32.mrf.mxu0
      %v1933 = vadd.f32 0.0, %v1932
      %v1934 = vpop.f32.mrf.mxu0
      %1935 = vmatprep.mubr.bf16.mxu0 0
      %1936 = vmatmul.mubr.bf16.gmra.mxu0 %v726
      %v1937 = vpop.f32.mrf.mxu0
      %v1938 = vadd.f32 0.0, %v1937
      %v1939 = vpop.f32.mrf.mxu0
      %v1940 = vpop.f32.mrf.mxu0
      %v1941 = vadd.f32 0.0, %v1940
      %v1942 = vpop.f32.mrf.mxu0
      %1943 = vmatprep.mubr.bf16.mxu0 0
      %1944 = vmatmul.mubr.bf16.gmra.mxu0 %v729
      %v1945 = vpop.f32.mrf.mxu0
      %v1946 = vadd.f32 0.0, %v1945
      %v1947 = vpop.f32.mrf.mxu0
      %v1948 = vpop.f32.mrf.mxu0
      %v1949 = vadd.f32 0.0, %v1948
      %v1950 = vpop.f32.mrf.mxu0
      %1951 = vmatprep.mubr.bf16.mxu0 0
      %1952 = vmatmul.mubr.bf16.gmra.mxu0 %v732
      %v1953 = vpop.f32.mrf.mxu0
      %v1954 = vadd.f32 0.0, %v1953
      %v1955 = vpop.f32.mrf.mxu0
      %v1956 = vpop.f32.mrf.mxu0
      %v1957 = vadd.f32 0.0, %v1956
      %v1958 = vpop.f32.mrf.mxu0
      %1959 = vmatprep.mubr.bf16.mxu0 0
      %1960 = vmatmul.mubr.bf16.gmra.mxu0 %v735
      %v1961 = vpop.f32.mrf.mxu0
      %v1962 = vadd.f32 0.0, %v1961
      %v1963 = vpop.f32.mrf.mxu0
      %v1964 = vpop.f32.mrf.mxu0
      %v1965 = vadd.f32 0.0, %v1964
      %v1966 = vpop.f32.mrf.mxu0
      %1967 = vmatprep.mubr.bf16.mxu0 0
      %1968 = vmatmul.mubr.bf16.gmra.mxu0 %v738
      %v1969 = vpop.f32.mrf.mxu0
      %v1970 = vadd.f32 0.0, %v1969
      %v1971 = vpop.f32.mrf.mxu0
      %v1972 = vpop.f32.mrf.mxu0
      %v1973 = vadd.f32 0.0, %v1972
      %v1974 = vpop.f32.mrf.mxu0
      %1975 = vmatprep.mubr.bf16.mxu0 0
      %1976 = vmatmul.mubr.bf16.gmra.mxu0 %v741
      %v1977 = vpop.f32.mrf.mxu0
      %v1978 = vadd.f32 0.0, %v1977
      %v1979 = vpop.f32.mrf.mxu0
      %v1980 = vpop.f32.mrf.mxu0
      %v1981 = vadd.f32 0.0, %v1980
      %v1982 = vpop.f32.mrf.mxu0
      %1983 = vmatprep.mubr.bf16.mxu0 0
      %1984 = vmatmul.mubr.bf16.gmra.mxu0 %v744
      %v1985 = vpop.f32.mrf.mxu0
      %v1986 = vadd.f32 0.0, %v1985
      %v1987 = vpop.f32.mrf.mxu0
      %v1988 = vpop.f32.mrf.mxu0
      %v1989 = vadd.f32 0.0, %v1988
      %v1990 = vpop.f32.mrf.mxu0
      %1991 = vmatprep.mubr.bf16.mxu0 0
      %1992 = vmatmul.mubr.bf16.gmra.mxu0 %v747
      %v1993 = vpop.f32.mrf.mxu0
      %v1994 = vadd.f32 0.0, %v1993
      %v1995 = vpop.f32.mrf.mxu0
      %v1996 = vpop.f32.mrf.mxu0
      %v1997 = vadd.f32 0.0, %v1996
      %v1998 = vpop.f32.mrf.mxu0
      %1999 = vmatprep.mubr.bf16.mxu0 0
      %2000 = vmatmul.mubr.bf16.gmra.mxu0 %v750
      %v2001 = vpop.f32.mrf.mxu0
      %v2002 = vadd.f32 0.0, %v2001
      %v2003 = vpop.f32.mrf.mxu0
      %v2004 = vpop.f32.mrf.mxu0
      %v2005 = vadd.f32 0.0, %v2004
      %v2006 = vpop.f32.mrf.mxu0
      %2007 = vmatprep.mubr.bf16.mxu0 0
      %2008 = vmatmul.mubr.bf16.gmra.mxu0 %v753
      %v2009 = vpop.f32.mrf.mxu0
      %v2010 = vadd.f32 0.0, %v2009
      %v2011 = vpop.f32.mrf.mxu0
      %v2012 = vpop.f32.mrf.mxu0
      %v2013 = vadd.f32 0.0, %v2012
      %v2014 = vpop.f32.mrf.mxu0
      %2015 = vmatprep.mubr.bf16.mxu0 0
      %2016 = vmatmul.mubr.bf16.gmra.mxu0 %v756
      %v2017 = vpop.f32.mrf.mxu0
      %v2018 = vadd.f32 0.0, %v2017
      %v2019 = vpop.f32.mrf.mxu0
      %v2020 = vpop.f32.mrf.mxu0
      %v2021 = vadd.f32 0.0, %v2020
      %v2022 = vpop.f32.mrf.mxu0
      %2023 = vmatprep.mubr.bf16.mxu0 0
      %2024 = vmatmul.mubr.bf16.gmra.mxu0 %v759
      %v2025 = vpop.f32.mrf.mxu0
      %v2026 = vadd.f32 0.0, %v2025
      %v2027 = vpop.f32.mrf.mxu0
      %v2028 = vpop.f32.mrf.mxu0
      %v2029 = vadd.f32 0.0, %v2028
      %v2030 = vpop.f32.mrf.mxu0
      %2031 = vmatprep.mubr.bf16.mxu0 0
      %2032 = vmatmul.mubr.bf16.gmra.mxu0 %v762
      %v2033 = vpop.f32.mrf.mxu0
      %v2034 = vadd.f32 0.0, %v2033
      %v2035 = vpop.f32.mrf.mxu0
      %v2036 = vpop.f32.mrf.mxu0
      %v2037 = vadd.f32 0.0, %v2036
      %v2038 = vpop.f32.mrf.mxu0
      %2039 = vmatprep.mubr.bf16.mxu0 0
      %2040 = vmatmul.mubr.bf16.gmra.mxu0 %v1882
      %v2041 = vpop.f32.mrf.mxu0
      %v2042 = vadd.f32 0.0, %v2041
      %v2043 = vpop.f32.mrf.mxu0
      %v2044 = vpop.f32.mrf.mxu0
      %v2045 = vadd.f32 0.0, %v2044
      %v2046 = vpop.f32.mrf.mxu0
      %2047 = vdwg.mxu0
      %v2048 = vadd.f32 %v1820, %v1922
      %v2049 = vadd.f32 %v1821, %v1925
      %v2050 = vadd.f32 %v1822, %v1930
      %v2051 = vadd.f32 %v1823, %v1933
      %v2052 = vadd.f32 %v1824, %v1938
      %v2053 = vadd.f32 %v1825, %v1941
      %v2054 = vadd.f32 %v1826, %v1946
      %v2055 = vadd.f32 %v1827, %v1949
      %v2056 = vadd.f32 %v1828, %v1954
      %v2057 = vadd.f32 %v1829, %v1957
      %v2058 = vadd.f32 %v1830, %v1962
      %v2059 = vadd.f32 %v1831, %v1965
      %v2060 = vadd.f32 %v1832, %v1970
      %v2061 = vadd.f32 %v1833, %v1973
      %v2062 = vadd.f32 %v1834, %v1978
      %v2063 = vadd.f32 %v1835, %v1981
      %v2064 = vadd.f32 %v1836, %v1986
      %v2065 = vadd.f32 %v1837, %v1989
      %v2066 = vadd.f32 %v1838, %v1994
      %v2067 = vadd.f32 %v1839, %v1997
      %v2068 = vadd.f32 %v1840, %v2002
      %v2069 = vadd.f32 %v1841, %v2005
      %v2070 = vadd.f32 %v1842, %v2010
      %v2071 = vadd.f32 %v1843, %v2013
      %v2072 = vadd.f32 %v1844, %v2018
      %v2073 = vadd.f32 %v1845, %v2021
      %v2074 = vadd.f32 %v1846, %v2026
      %v2075 = vadd.f32 %v1847, %v2029
      %v2076 = vadd.f32 %v1848, %v2034
      %v2077 = vadd.f32 %v1849, %v2037
      %v2078 = vadd.f32 %v1850, %v2042
      %v2079 = vadd.f32 %v1851, %v2045
      %v2081 = vrot.slane %v271, 5
      %v2082 = vrot.slane %v2081, 4
      %v2083 = vrot.slane %v272, 5
      %v2084 = vsel %vm1239, %v2082, %v2083
      %v2085 = vrot.slane %v2083, 4
      %v2086 = vrot.slane %v273, 5
      %v2087 = vsel %vm1239, %v2085, %v2086
      %s2088 = scalar_lea.vmem %s210, 20
      %v2089 = vld [vmem:[%s2088] sm:$0xf]
      %v2090 = vunpack.c.l.b16 %v2084
      %v2091 = vunpack.c.l.b16 %v2087
      %v2092 = vpack.c.b16 %v2091, %v2090
      %v2094 = vsel %vm715, %v2092, 0
      %v2097 = vsel %vm764, %v2089, 0
      %2099 = vmatprep.subr.bf16.mxu0 0
      %2100 = vmatpush1.bf16.msra.mxu0 0
      %2101 = vmatprep.subr.bf16.mxu0 0
      %2102 = vmatpush1.bf16.msra.mxu0 0
      %2103 = vmatprep.subr.bf16.mxu0 0
      %2104 = vmatpush1.bf16.msra.mxu0 0
      %2105 = vmatprep.subr.bf16.mxu0 0
      %2106 = vmatpush1.bf16.msra.mxu0 0
      %2107 = vmatprep.subr.bf16.mxu0 0
      %2108 = vmatpush1.bf16.msra.mxu0 0
      %2109 = vmatprep.subr.bf16.mxu0 0
      %2110 = vmatpush1.bf16.msra.mxu0 0
      %2111 = vmatprep.subr.bf16.mxu0 0
      %2112 = vmatpush1.bf16.msra.mxu0 0
      %2113 = vmatprep.subr.bf16.mxu0 0
      %2114 = vmatpush1.bf16.msra.mxu0 %v2097
      %2115 = vmatprep.subr.bf16.mxu0 0
      %2116 = vmatpush2.bf16.msra.mxu0 0
      %2117 = vmatprep.subr.bf16.mxu0 0
      %2118 = vmatpush2.bf16.msra.mxu0 0
      %2119 = vmatprep.subr.bf16.mxu0 0
      %2120 = vmatpush2.bf16.msra.mxu0 0
      %2121 = vmatprep.subr.bf16.mxu0 0
      %2122 = vmatpush2.bf16.msra.mxu0 0
      %2123 = vmatprep.subr.bf16.mxu0 0
      %2124 = vmatpush2.bf16.msra.mxu0 0
      %2125 = vmatprep.subr.bf16.mxu0 0
      %2126 = vmatpush2.bf16.msra.mxu0 0
      %2127 = vmatprep.subr.bf16.mxu0 0
      %2128 = vmatpush2.bf16.msra.mxu0 0
      %2129 = vmatprep.subr.bf16.mxu0 0
      %2130 = vmatpush2.bf16.msra.mxu0 0
      %2131 = vmatprep.mubr.bf16.mxu0 0
      %2132 = vmatmul.mubr.bf16.gmra.mxu0 %v1406
      %v2133 = vpop.f32.mrf.mxu0
      %v2134 = vadd.f32 0.0, %v2133
      %v2135 = vpop.f32.mrf.mxu0
      %v2136 = vpop.f32.mrf.mxu0
      %v2137 = vadd.f32 0.0, %v2136
      %v2138 = vpop.f32.mrf.mxu0
      %2139 = vmatprep.mubr.bf16.mxu0 0
      %2140 = vmatmul.mubr.bf16.gmra.mxu0 %v1409
      %v2141 = vpop.f32.mrf.mxu0
      %v2142 = vadd.f32 0.0, %v2141
      %v2143 = vpop.f32.mrf.mxu0
      %v2144 = vpop.f32.mrf.mxu0
      %v2145 = vadd.f32 0.0, %v2144
      %v2146 = vpop.f32.mrf.mxu0
      %2147 = vmatprep.mubr.bf16.mxu0 0
      %2148 = vmatmul.mubr.bf16.gmra.mxu0 %v1412
      %v2149 = vpop.f32.mrf.mxu0
      %v2150 = vadd.f32 0.0, %v2149
      %v2151 = vpop.f32.mrf.mxu0
      %v2152 = vpop.f32.mrf.mxu0
      %v2153 = vadd.f32 0.0, %v2152
      %v2154 = vpop.f32.mrf.mxu0
      %2155 = vmatprep.mubr.bf16.mxu0 0
      %2156 = vmatmul.mubr.bf16.gmra.mxu0 %v1415
      %v2157 = vpop.f32.mrf.mxu0
      %v2158 = vadd.f32 0.0, %v2157
      %v2159 = vpop.f32.mrf.mxu0
      %v2160 = vpop.f32.mrf.mxu0
      %v2161 = vadd.f32 0.0, %v2160
      %v2162 = vpop.f32.mrf.mxu0
      %2163 = vmatprep.mubr.bf16.mxu0 0
      %2164 = vmatmul.mubr.bf16.gmra.mxu0 %v1418
      %v2165 = vpop.f32.mrf.mxu0
      %v2166 = vadd.f32 0.0, %v2165
      %v2167 = vpop.f32.mrf.mxu0
      %v2168 = vpop.f32.mrf.mxu0
      %v2169 = vadd.f32 0.0, %v2168
      %v2170 = vpop.f32.mrf.mxu0
      %2171 = vmatprep.mubr.bf16.mxu0 0
      %2172 = vmatmul.mubr.bf16.gmra.mxu0 %v1421
      %v2173 = vpop.f32.mrf.mxu0
      %v2174 = vadd.f32 0.0, %v2173
      %v2175 = vpop.f32.mrf.mxu0
      %v2176 = vpop.f32.mrf.mxu0
      %v2177 = vadd.f32 0.0, %v2176
      %v2178 = vpop.f32.mrf.mxu0
      %2179 = vmatprep.mubr.bf16.mxu0 0
      %2180 = vmatmul.mubr.bf16.gmra.mxu0 %v1424
      %v2181 = vpop.f32.mrf.mxu0
      %v2182 = vadd.f32 0.0, %v2181
      %v2183 = vpop.f32.mrf.mxu0
      %v2184 = vpop.f32.mrf.mxu0
      %v2185 = vadd.f32 0.0, %v2184
      %v2186 = vpop.f32.mrf.mxu0
      %2187 = vmatprep.mubr.bf16.mxu0 0
      %2188 = vmatmul.mubr.bf16.gmra.mxu0 %v1427
      %v2189 = vpop.f32.mrf.mxu0
      %v2190 = vadd.f32 0.0, %v2189
      %v2191 = vpop.f32.mrf.mxu0
      %v2192 = vpop.f32.mrf.mxu0
      %v2193 = vadd.f32 0.0, %v2192
      %v2194 = vpop.f32.mrf.mxu0
      %2195 = vmatprep.mubr.bf16.mxu0 0
      %2196 = vmatmul.mubr.bf16.gmra.mxu0 %v1430
      %v2197 = vpop.f32.mrf.mxu0
      %v2198 = vadd.f32 0.0, %v2197
      %v2199 = vpop.f32.mrf.mxu0
      %v2200 = vpop.f32.mrf.mxu0
      %v2201 = vadd.f32 0.0, %v2200
      %v2202 = vpop.f32.mrf.mxu0
      %2203 = vmatprep.mubr.bf16.mxu0 0
      %2204 = vmatmul.mubr.bf16.gmra.mxu0 %v1433
      %v2205 = vpop.f32.mrf.mxu0
      %v2206 = vadd.f32 0.0, %v2205
      %v2207 = vpop.f32.mrf.mxu0
      %v2208 = vpop.f32.mrf.mxu0
      %v2209 = vadd.f32 0.0, %v2208
      %v2210 = vpop.f32.mrf.mxu0
      %2211 = vmatprep.mubr.bf16.mxu0 0
      %2212 = vmatmul.mubr.bf16.gmra.mxu0 %v1436
      %v2213 = vpop.f32.mrf.mxu0
      %v2214 = vadd.f32 0.0, %v2213
      %v2215 = vpop.f32.mrf.mxu0
      %v2216 = vpop.f32.mrf.mxu0
      %v2217 = vadd.f32 0.0, %v2216
      %v2218 = vpop.f32.mrf.mxu0
      %2219 = vmatprep.mubr.bf16.mxu0 0
      %2220 = vmatmul.mubr.bf16.gmra.mxu0 %v1439
      %v2221 = vpop.f32.mrf.mxu0
      %v2222 = vadd.f32 0.0, %v2221
      %v2223 = vpop.f32.mrf.mxu0
      %v2224 = vpop.f32.mrf.mxu0
      %v2225 = vadd.f32 0.0, %v2224
      %v2226 = vpop.f32.mrf.mxu0
      %2227 = vmatprep.mubr.bf16.mxu0 0
      %2228 = vmatmul.mubr.bf16.gmra.mxu0 %v1442
      %v2229 = vpop.f32.mrf.mxu0
      %v2230 = vadd.f32 0.0, %v2229
      %v2231 = vpop.f32.mrf.mxu0
      %v2232 = vpop.f32.mrf.mxu0
      %v2233 = vadd.f32 0.0, %v2232
      %v2234 = vpop.f32.mrf.mxu0
      %2235 = vmatprep.mubr.bf16.mxu0 0
      %2236 = vmatmul.mubr.bf16.gmra.mxu0 %v1445
      %v2237 = vpop.f32.mrf.mxu0
      %v2238 = vadd.f32 0.0, %v2237
      %v2239 = vpop.f32.mrf.mxu0
      %v2240 = vpop.f32.mrf.mxu0
      %v2241 = vadd.f32 0.0, %v2240
      %v2242 = vpop.f32.mrf.mxu0
      %2243 = vmatprep.mubr.bf16.mxu0 0
      %2244 = vmatmul.mubr.bf16.gmra.mxu0 %v1448
      %v2245 = vpop.f32.mrf.mxu0
      %v2246 = vadd.f32 0.0, %v2245
      %v2247 = vpop.f32.mrf.mxu0
      %v2248 = vpop.f32.mrf.mxu0
      %v2249 = vadd.f32 0.0, %v2248
      %v2250 = vpop.f32.mrf.mxu0
      %2251 = vmatprep.mubr.bf16.mxu0 0
      %2252 = vmatmul.mubr.bf16.gmra.mxu0 %v2094
      %v2253 = vpop.f32.mrf.mxu0
      %v2254 = vadd.f32 0.0, %v2253
      %v2255 = vpop.f32.mrf.mxu0
      %v2256 = vpop.f32.mrf.mxu0
      %v2257 = vadd.f32 0.0, %v2256
      %v2258 = vpop.f32.mrf.mxu0
      %2259 = vdwg.mxu0
      %v2260 = vadd.f32 %v2048, %v2134
      %v2261 = vadd.f32 %v2049, %v2137
      %v2262 = vadd.f32 %v2050, %v2142
      %v2263 = vadd.f32 %v2051, %v2145
      %v2264 = vadd.f32 %v2052, %v2150
      %v2265 = vadd.f32 %v2053, %v2153
      %v2266 = vadd.f32 %v2054, %v2158
      %v2267 = vadd.f32 %v2055, %v2161
      %v2268 = vadd.f32 %v2056, %v2166
      %v2269 = vadd.f32 %v2057, %v2169
      %v2270 = vadd.f32 %v2058, %v2174
      %v2271 = vadd.f32 %v2059, %v2177
      %v2272 = vadd.f32 %v2060, %v2182
      %v2273 = vadd.f32 %v2061, %v2185
      %v2274 = vadd.f32 %v2062, %v2190
      %v2275 = vadd.f32 %v2063, %v2193
      %v2276 = vadd.f32 %v2064, %v2198
      %v2277 = vadd.f32 %v2065, %v2201
      %v2278 = vadd.f32 %v2066, %v2206
      %v2279 = vadd.f32 %v2067, %v2209
      %v2280 = vadd.f32 %v2068, %v2214
      %v2281 = vadd.f32 %v2069, %v2217
      %v2282 = vadd.f32 %v2070, %v2222
      %v2283 = vadd.f32 %v2071, %v2225
      %v2284 = vadd.f32 %v2072, %v2230
      %v2285 = vadd.f32 %v2073, %v2233
      %v2286 = vadd.f32 %v2074, %v2238
      %v2287 = vadd.f32 %v2075, %v2241
      %v2288 = vadd.f32 %v2076, %v2246
      %v2289 = vadd.f32 %v2077, %v2249
      %v2290 = vadd.f32 %v2078, %v2254
      %v2291 = vadd.f32 %v2079, %v2257
      %s2292 = scalar_lea.vmem %s210, 24
      %v2293 = vld [vmem:[%s2292] sm:$0xf]
      %v2296 = vunpack.c.l.b16 %v274
      %v2297 = vunpack.c.l.b16 %v275
      %v2298 = vpack.c.b16 %v2297, %v2296
      %v2300 = vsel %vm715, %v2298, 0
      %v2303 = vsel %vm764, %v2293, 0
      %2305 = vmatprep.subr.bf16.mxu0 0
      %2306 = vmatpush1.bf16.msra.mxu0 0
      %2307 = vmatprep.subr.bf16.mxu0 0
      %2308 = vmatpush1.bf16.msra.mxu0 0
      %2309 = vmatprep.subr.bf16.mxu0 0
      %2310 = vmatpush1.bf16.msra.mxu0 0
      %2311 = vmatprep.subr.bf16.mxu0 0
      %2312 = vmatpush1.bf16.msra.mxu0 0
      %2313 = vmatprep.subr.bf16.mxu0 0
      %2314 = vmatpush1.bf16.msra.mxu0 0
      %2315 = vmatprep.subr.bf16.mxu0 0
      %2316 = vmatpush1.bf16.msra.mxu0 0
      %2317 = vmatprep.subr.bf16.mxu0 0
      %2318 = vmatpush1.bf16.msra.mxu0 0
      %2319 = vmatprep.subr.bf16.mxu0 0
      %2320 = vmatpush1.bf16.msra.mxu0 %v2303
      %2321 = vmatprep.subr.bf16.mxu0 0
      %2322 = vmatpush2.bf16.msra.mxu0 0
      %2323 = vmatprep.subr.bf16.mxu0 0
      %2324 = vmatpush2.bf16.msra.mxu0 0
      %2325 = vmatprep.subr.bf16.mxu0 0
      %2326 = vmatpush2.bf16.msra.mxu0 0
      %2327 = vmatprep.subr.bf16.mxu0 0
      %2328 = vmatpush2.bf16.msra.mxu0 0
      %2329 = vmatprep.subr.bf16.mxu0 0
      %2330 = vmatpush2.bf16.msra.mxu0 0
      %2331 = vmatprep.subr.bf16.mxu0 0
      %2332 = vmatpush2.bf16.msra.mxu0 0
      %2333 = vmatprep.subr.bf16.mxu0 0
      %2334 = vmatpush2.bf16.msra.mxu0 0
      %2335 = vmatprep.subr.bf16.mxu0 0
      %2336 = vmatpush2.bf16.msra.mxu0 0
      %2337 = vmatprep.mubr.bf16.mxu0 0
      %2338 = vmatmul.mubr.bf16.gmra.mxu0 %v1016
      %v2339 = vpop.f32.mrf.mxu0
      %v2340 = vadd.f32 0.0, %v2339
      %v2341 = vpop.f32.mrf.mxu0
      %v2342 = vpop.f32.mrf.mxu0
      %v2343 = vadd.f32 0.0, %v2342
      %v2344 = vpop.f32.mrf.mxu0
      %2345 = vmatprep.mubr.bf16.mxu0 0
      %2346 = vmatmul.mubr.bf16.gmra.mxu0 %v1019
      %v2347 = vpop.f32.mrf.mxu0
      %v2348 = vadd.f32 0.0, %v2347
      %v2349 = vpop.f32.mrf.mxu0
      %v2350 = vpop.f32.mrf.mxu0
      %v2351 = vadd.f32 0.0, %v2350
      %v2352 = vpop.f32.mrf.mxu0
      %2353 = vmatprep.mubr.bf16.mxu0 0
      %2354 = vmatmul.mubr.bf16.gmra.mxu0 %v1022
      %v2355 = vpop.f32.mrf.mxu0
      %v2356 = vadd.f32 0.0, %v2355
      %v2357 = vpop.f32.mrf.mxu0
      %v2358 = vpop.f32.mrf.mxu0
      %v2359 = vadd.f32 0.0, %v2358
      %v2360 = vpop.f32.mrf.mxu0
      %2361 = vmatprep.mubr.bf16.mxu0 0
      %2362 = vmatmul.mubr.bf16.gmra.mxu0 %v1025
      %v2363 = vpop.f32.mrf.mxu0
      %v2364 = vadd.f32 0.0, %v2363
      %v2365 = vpop.f32.mrf.mxu0
      %v2366 = vpop.f32.mrf.mxu0
      %v2367 = vadd.f32 0.0, %v2366
      %v2368 = vpop.f32.mrf.mxu0
      %2369 = vmatprep.mubr.bf16.mxu0 0
      %2370 = vmatmul.mubr.bf16.gmra.mxu0 %v1028
      %v2371 = vpop.f32.mrf.mxu0
      %v2372 = vadd.f32 0.0, %v2371
      %v2373 = vpop.f32.mrf.mxu0
      %v2374 = vpop.f32.mrf.mxu0
      %v2375 = vadd.f32 0.0, %v2374
      %v2376 = vpop.f32.mrf.mxu0
      %2377 = vmatprep.mubr.bf16.mxu0 0
      %2378 = vmatmul.mubr.bf16.gmra.mxu0 %v1031
      %v2379 = vpop.f32.mrf.mxu0
      %v2380 = vadd.f32 0.0, %v2379
      %v2381 = vpop.f32.mrf.mxu0
      %v2382 = vpop.f32.mrf.mxu0
      %v2383 = vadd.f32 0.0, %v2382
      %v2384 = vpop.f32.mrf.mxu0
      %2385 = vmatprep.mubr.bf16.mxu0 0
      %2386 = vmatmul.mubr.bf16.gmra.mxu0 %v1034
      %v2387 = vpop.f32.mrf.mxu0
      %v2388 = vadd.f32 0.0, %v2387
      %v2389 = vpop.f32.mrf.mxu0
      %v2390 = vpop.f32.mrf.mxu0
      %v2391 = vadd.f32 0.0, %v2390
      %v2392 = vpop.f32.mrf.mxu0
      %2393 = vmatprep.mubr.bf16.mxu0 0
      %2394 = vmatmul.mubr.bf16.gmra.mxu0 %v1037
      %v2395 = vpop.f32.mrf.mxu0
      %v2396 = vadd.f32 0.0, %v2395
      %v2397 = vpop.f32.mrf.mxu0
      %v2398 = vpop.f32.mrf.mxu0
      %v2399 = vadd.f32 0.0, %v2398
      %v2400 = vpop.f32.mrf.mxu0
      %2401 = vmatprep.mubr.bf16.mxu0 0
      %2402 = vmatmul.mubr.bf16.gmra.mxu0 %v1040
      %v2403 = vpop.f32.mrf.mxu0
      %v2404 = vadd.f32 0.0, %v2403
      %v2405 = vpop.f32.mrf.mxu0
      %v2406 = vpop.f32.mrf.mxu0
      %v2407 = vadd.f32 0.0, %v2406
      %v2408 = vpop.f32.mrf.mxu0
      %2409 = vmatprep.mubr.bf16.mxu0 0
      %2410 = vmatmul.mubr.bf16.gmra.mxu0 %v1043
      %v2411 = vpop.f32.mrf.mxu0
      %v2412 = vadd.f32 0.0, %v2411
      %v2413 = vpop.f32.mrf.mxu0
      %v2414 = vpop.f32.mrf.mxu0
      %v2415 = vadd.f32 0.0, %v2414
      %v2416 = vpop.f32.mrf.mxu0
      %2417 = vmatprep.mubr.bf16.mxu0 0
      %2418 = vmatmul.mubr.bf16.gmra.mxu0 %v1046
      %v2419 = vpop.f32.mrf.mxu0
      %v2420 = vadd.f32 0.0, %v2419
      %v2421 = vpop.f32.mrf.mxu0
      %v2422 = vpop.f32.mrf.mxu0
      %v2423 = vadd.f32 0.0, %v2422
      %v2424 = vpop.f32.mrf.mxu0
      %2425 = vmatprep.mubr.bf16.mxu0 0
      %2426 = vmatmul.mubr.bf16.gmra.mxu0 %v1049
      %v2427 = vpop.f32.mrf.mxu0
      %v2428 = vadd.f32 0.0, %v2427
      %v2429 = vpop.f32.mrf.mxu0
      %v2430 = vpop.f32.mrf.mxu0
      %v2431 = vadd.f32 0.0, %v2430
      %v2432 = vpop.f32.mrf.mxu0
      %2433 = vmatprep.mubr.bf16.mxu0 0
      %2434 = vmatmul.mubr.bf16.gmra.mxu0 %v1052
      %v2435 = vpop.f32.mrf.mxu0
      %v2436 = vadd.f32 0.0, %v2435
      %v2437 = vpop.f32.mrf.mxu0
      %v2438 = vpop.f32.mrf.mxu0
      %v2439 = vadd.f32 0.0, %v2438
      %v2440 = vpop.f32.mrf.mxu0
      %2441 = vmatprep.mubr.bf16.mxu0 0
      %2442 = vmatmul.mubr.bf16.gmra.mxu0 %v1055
      %v2443 = vpop.f32.mrf.mxu0
      %v2444 = vadd.f32 0.0, %v2443
      %v2445 = vpop.f32.mrf.mxu0
      %v2446 = vpop.f32.mrf.mxu0
      %v2447 = vadd.f32 0.0, %v2446
      %v2448 = vpop.f32.mrf.mxu0
      %2449 = vmatprep.mubr.bf16.mxu0 0
      %2450 = vmatmul.mubr.bf16.gmra.mxu0 %v1654
      %v2451 = vpop.f32.mrf.mxu0
      %v2452 = vadd.f32 0.0, %v2451
      %v2453 = vpop.f32.mrf.mxu0
      %v2454 = vpop.f32.mrf.mxu0
      %v2455 = vadd.f32 0.0, %v2454
      %v2456 = vpop.f32.mrf.mxu0
      %2457 = vmatprep.mubr.bf16.mxu0 0
      %2458 = vmatmul.mubr.bf16.gmra.mxu0 %v2300
      %v2459 = vpop.f32.mrf.mxu0
      %v2460 = vadd.f32 0.0, %v2459
      %v2461 = vpop.f32.mrf.mxu0
      %v2462 = vpop.f32.mrf.mxu0
      %v2463 = vadd.f32 0.0, %v2462
      %v2464 = vpop.f32.mrf.mxu0
      %2465 = vdwg.mxu0
      %v2466 = vadd.f32 %v2260, %v2340
      %v2467 = vadd.f32 %v2261, %v2343
      %v2468 = vadd.f32 %v2262, %v2348
      %v2469 = vadd.f32 %v2263, %v2351
      %v2470 = vadd.f32 %v2264, %v2356
      %v2471 = vadd.f32 %v2265, %v2359
      %v2472 = vadd.f32 %v2266, %v2364
      %v2473 = vadd.f32 %v2267, %v2367
      %v2474 = vadd.f32 %v2268, %v2372
      %v2475 = vadd.f32 %v2269, %v2375
      %v2476 = vadd.f32 %v2270, %v2380
      %v2477 = vadd.f32 %v2271, %v2383
      %v2478 = vadd.f32 %v2272, %v2388
      %v2479 = vadd.f32 %v2273, %v2391
      %v2480 = vadd.f32 %v2274, %v2396
      %v2481 = vadd.f32 %v2275, %v2399
      %v2482 = vadd.f32 %v2276, %v2404
      %v2483 = vadd.f32 %v2277, %v2407
      %v2484 = vadd.f32 %v2278, %v2412
      %v2485 = vadd.f32 %v2279, %v2415
      %v2486 = vadd.f32 %v2280, %v2420
      %v2487 = vadd.f32 %v2281, %v2423
      %v2488 = vadd.f32 %v2282, %v2428
      %v2489 = vadd.f32 %v2283, %v2431
      %v2490 = vadd.f32 %v2284, %v2436
      %v2491 = vadd.f32 %v2285, %v2439
      %v2492 = vadd.f32 %v2286, %v2444
      %v2493 = vadd.f32 %v2287, %v2447
      %v2494 = vadd.f32 %v2288, %v2452
      %v2495 = vadd.f32 %v2289, %v2455
      %v2496 = vadd.f32 %v2290, %v2460
      %v2497 = vadd.f32 %v2291, %v2463
      %v2499 = vshrl.u32 %v274, 16
      %v2501 = vrot.slane %v2499, 4
      %v2502 = vshll.u32 %v274, 16
      %v2504 = vrot.slane %v2502, 5
      %v2505 = vor.u32 %v2501, %v2504
      %v2506 = vrot.slane %v2505, 4
      %v2508 = vshll.u32 %v275, 16
      %v2510 = vrot.slane %v2508, 5
      %v2511 = vsel %vm280, %v2506, %v2510
      %v2512 = vshrl.u32 %v275, 16
      %v2514 = vrot.slane %v2512, 4
      %v2515 = vor.u32 %v2514, %v2510
      %v2516 = vrot.slane %v2515, 4
      %v2518 = vshll.u32 %v276, 16
      %v2520 = vrot.slane %v2518, 5
      %v2521 = vsel %vm280, %v2516, %v2520
      %s2522 = scalar_lea.vmem %s210, 28
      %v2523 = vld [vmem:[%s2522] sm:$0xf]
      %v2524 = vunpack.c.l.b16 %v2511
      %v2525 = vunpack.c.l.b16 %v2521
      %v2526 = vpack.c.b16 %v2525, %v2524
      %v2528 = vsel %vm715, %v2526, 0
      %v2531 = vsel %vm764, %v2523, 0
      %2533 = vmatprep.subr.bf16.mxu0 0
      %2534 = vmatpush1.bf16.msra.mxu0 0
      %2535 = vmatprep.subr.bf16.mxu0 0
      %2536 = vmatpush1.bf16.msra.mxu0 0
      %2537 = vmatprep.subr.bf16.mxu0 0
      %2538 = vmatpush1.bf16.msra.mxu0 0
      %2539 = vmatprep.subr.bf16.mxu0 0
      %2540 = vmatpush1.bf16.msra.mxu0 0
      %2541 = vmatprep.subr.bf16.mxu0 0
      %2542 = vmatpush1.bf16.msra.mxu0 0
      %2543 = vmatprep.subr.bf16.mxu0 0
      %2544 = vmatpush1.bf16.msra.mxu0 0
      %2545 = vmatprep.subr.bf16.mxu0 0
      %2546 = vmatpush1.bf16.msra.mxu0 0
      %2547 = vmatprep.subr.bf16.mxu0 0
      %2548 = vmatpush1.bf16.msra.mxu0 %v2531
      %2549 = vmatprep.subr.bf16.mxu0 0
      %2550 = vmatpush2.bf16.msra.mxu0 0
      %2551 = vmatprep.subr.bf16.mxu0 0
      %2552 = vmatpush2.bf16.msra.mxu0 0
      %2553 = vmatprep.subr.bf16.mxu0 0
      %2554 = vmatpush2.bf16.msra.mxu0 0
      %2555 = vmatprep.subr.bf16.mxu0 0
      %2556 = vmatpush2.bf16.msra.mxu0 0
      %2557 = vmatprep.subr.bf16.mxu0 0
      %2558 = vmatpush2.bf16.msra.mxu0 0
      %2559 = vmatprep.subr.bf16.mxu0 0
      %2560 = vmatpush2.bf16.msra.mxu0 0
      %2561 = vmatprep.subr.bf16.mxu0 0
      %2562 = vmatpush2.bf16.msra.mxu0 0
      %2563 = vmatprep.subr.bf16.mxu0 0
      %2564 = vmatpush2.bf16.msra.mxu0 0
      %2565 = vmatprep.mubr.bf16.mxu0 0
      %2566 = vmatmul.mubr.bf16.gmra.mxu0 %v723
      %v2567 = vpop.f32.mrf.mxu0
      %v2568 = vadd.f32 0.0, %v2567
      %v2569 = vpop.f32.mrf.mxu0
      %v2570 = vpop.f32.mrf.mxu0
      %v2571 = vadd.f32 0.0, %v2570
      %v2572 = vpop.f32.mrf.mxu0
      %2573 = vmatprep.mubr.bf16.mxu0 0
      %2574 = vmatmul.mubr.bf16.gmra.mxu0 %v726
      %v2575 = vpop.f32.mrf.mxu0
      %v2576 = vadd.f32 0.0, %v2575
      %v2577 = vpop.f32.mrf.mxu0
      %v2578 = vpop.f32.mrf.mxu0
      %v2579 = vadd.f32 0.0, %v2578
      %v2580 = vpop.f32.mrf.mxu0
      %2581 = vmatprep.mubr.bf16.mxu0 0
      %2582 = vmatmul.mubr.bf16.gmra.mxu0 %v729
      %v2583 = vpop.f32.mrf.mxu0
      %v2584 = vadd.f32 0.0, %v2583
      %v2585 = vpop.f32.mrf.mxu0
      %v2586 = vpop.f32.mrf.mxu0
      %v2587 = vadd.f32 0.0, %v2586
      %v2588 = vpop.f32.mrf.mxu0
      %2589 = vmatprep.mubr.bf16.mxu0 0
      %2590 = vmatmul.mubr.bf16.gmra.mxu0 %v732
      %v2591 = vpop.f32.mrf.mxu0
      %v2592 = vadd.f32 0.0, %v2591
      %v2593 = vpop.f32.mrf.mxu0
      %v2594 = vpop.f32.mrf.mxu0
      %v2595 = vadd.f32 0.0, %v2594
      %v2596 = vpop.f32.mrf.mxu0
      %2597 = vmatprep.mubr.bf16.mxu0 0
      %2598 = vmatmul.mubr.bf16.gmra.mxu0 %v735
      %v2599 = vpop.f32.mrf.mxu0
      %v2600 = vadd.f32 0.0, %v2599
      %v2601 = vpop.f32.mrf.mxu0
      %v2602 = vpop.f32.mrf.mxu0
      %v2603 = vadd.f32 0.0, %v2602
      %v2604 = vpop.f32.mrf.mxu0
      %2605 = vmatprep.mubr.bf16.mxu0 0
      %2606 = vmatmul.mubr.bf16.gmra.mxu0 %v738
      %v2607 = vpop.f32.mrf.mxu0
      %v2608 = vadd.f32 0.0, %v2607
      %v2609 = vpop.f32.mrf.mxu0
      %v2610 = vpop.f32.mrf.mxu0
      %v2611 = vadd.f32 0.0, %v2610
      %v2612 = vpop.f32.mrf.mxu0
      %2613 = vmatprep.mubr.bf16.mxu0 0
      %2614 = vmatmul.mubr.bf16.gmra.mxu0 %v741
      %v2615 = vpop.f32.mrf.mxu0
      %v2616 = vadd.f32 0.0, %v2615
      %v2617 = vpop.f32.mrf.mxu0
      %v2618 = vpop.f32.mrf.mxu0
      %v2619 = vadd.f32 0.0, %v2618
      %v2620 = vpop.f32.mrf.mxu0
      %2621 = vmatprep.mubr.bf16.mxu0 0
      %2622 = vmatmul.mubr.bf16.gmra.mxu0 %v744
      %v2623 = vpop.f32.mrf.mxu0
      %v2624 = vadd.f32 0.0, %v2623
      %v2625 = vpop.f32.mrf.mxu0
      %v2626 = vpop.f32.mrf.mxu0
      %v2627 = vadd.f32 0.0, %v2626
      %v2628 = vpop.f32.mrf.mxu0
      %2629 = vmatprep.mubr.bf16.mxu0 0
      %2630 = vmatmul.mubr.bf16.gmra.mxu0 %v747
      %v2631 = vpop.f32.mrf.mxu0
      %v2632 = vadd.f32 0.0, %v2631
      %v2633 = vpop.f32.mrf.mxu0
      %v2634 = vpop.f32.mrf.mxu0
      %v2635 = vadd.f32 0.0, %v2634
      %v2636 = vpop.f32.mrf.mxu0
      %2637 = vmatprep.mubr.bf16.mxu0 0
      %2638 = vmatmul.mubr.bf16.gmra.mxu0 %v750
      %v2639 = vpop.f32.mrf.mxu0
      %v2640 = vadd.f32 0.0, %v2639
      %v2641 = vpop.f32.mrf.mxu0
      %v2642 = vpop.f32.mrf.mxu0
      %v2643 = vadd.f32 0.0, %v2642
      %v2644 = vpop.f32.mrf.mxu0
      %2645 = vmatprep.mubr.bf16.mxu0 0
      %2646 = vmatmul.mubr.bf16.gmra.mxu0 %v753
      %v2647 = vpop.f32.mrf.mxu0
      %v2648 = vadd.f32 0.0, %v2647
      %v2649 = vpop.f32.mrf.mxu0
      %v2650 = vpop.f32.mrf.mxu0
      %v2651 = vadd.f32 0.0, %v2650
      %v2652 = vpop.f32.mrf.mxu0
      %2653 = vmatprep.mubr.bf16.mxu0 0
      %2654 = vmatmul.mubr.bf16.gmra.mxu0 %v756
      %v2655 = vpop.f32.mrf.mxu0
      %v2656 = vadd.f32 0.0, %v2655
      %v2657 = vpop.f32.mrf.mxu0
      %v2658 = vpop.f32.mrf.mxu0
      %v2659 = vadd.f32 0.0, %v2658
      %v2660 = vpop.f32.mrf.mxu0
      %2661 = vmatprep.mubr.bf16.mxu0 0
      %2662 = vmatmul.mubr.bf16.gmra.mxu0 %v759
      %v2663 = vpop.f32.mrf.mxu0
      %v2664 = vadd.f32 0.0, %v2663
      %v2665 = vpop.f32.mrf.mxu0
      %v2666 = vpop.f32.mrf.mxu0
      %v2667 = vadd.f32 0.0, %v2666
      %v2668 = vpop.f32.mrf.mxu0
      %2669 = vmatprep.mubr.bf16.mxu0 0
      %2670 = vmatmul.mubr.bf16.gmra.mxu0 %v762
      %v2671 = vpop.f32.mrf.mxu0
      %v2672 = vadd.f32 0.0, %v2671
      %v2673 = vpop.f32.mrf.mxu0
      %v2674 = vpop.f32.mrf.mxu0
      %v2675 = vadd.f32 0.0, %v2674
      %v2676 = vpop.f32.mrf.mxu0
      %2677 = vmatprep.mubr.bf16.mxu0 0
      %2678 = vmatmul.mubr.bf16.gmra.mxu0 %v1882
      %v2679 = vpop.f32.mrf.mxu0
      %v2680 = vadd.f32 0.0, %v2679
      %v2681 = vpop.f32.mrf.mxu0
      %v2682 = vpop.f32.mrf.mxu0
      %v2683 = vadd.f32 0.0, %v2682
      %v2684 = vpop.f32.mrf.mxu0
      %2685 = vmatprep.mubr.bf16.mxu0 0
      %2686 = vmatmul.mubr.bf16.gmra.mxu0 %v2528
      %v2687 = vpop.f32.mrf.mxu0
      %v2688 = vadd.f32 0.0, %v2687
      %v2689 = vpop.f32.mrf.mxu0
      %v2690 = vpop.f32.mrf.mxu0
      %v2691 = vadd.f32 0.0, %v2690
      %v2692 = vpop.f32.mrf.mxu0
      %2693 = vdwg.mxu0
      %v2694 = vadd.f32 %v2466, %v2568
      %v2695 = vadd.f32 %v2467, %v2571
      %v2696 = vadd.f32 %v2468, %v2576
      %v2697 = vadd.f32 %v2469, %v2579
      %v2698 = vadd.f32 %v2470, %v2584
      %v2699 = vadd.f32 %v2471, %v2587
      %v2700 = vadd.f32 %v2472, %v2592
      %v2701 = vadd.f32 %v2473, %v2595
      %v2702 = vadd.f32 %v2474, %v2600
      %v2703 = vadd.f32 %v2475, %v2603
      %v2704 = vadd.f32 %v2476, %v2608
      %v2705 = vadd.f32 %v2477, %v2611
      %v2706 = vadd.f32 %v2478, %v2616
      %v2707 = vadd.f32 %v2479, %v2619
      %v2708 = vadd.f32 %v2480, %v2624
      %v2709 = vadd.f32 %v2481, %v2627
      %v2710 = vadd.f32 %v2482, %v2632
      %v2711 = vadd.f32 %v2483, %v2635
      %v2712 = vadd.f32 %v2484, %v2640
      %v2713 = vadd.f32 %v2485, %v2643
      %v2714 = vadd.f32 %v2486, %v2648
      %v2715 = vadd.f32 %v2487, %v2651
      %v2716 = vadd.f32 %v2488, %v2656
      %v2717 = vadd.f32 %v2489, %v2659
      %v2718 = vadd.f32 %v2490, %v2664
      %v2719 = vadd.f32 %v2491, %v2667
      %v2720 = vadd.f32 %v2492, %v2672
      %v2721 = vadd.f32 %v2493, %v2675
      %v2722 = vadd.f32 %v2494, %v2680
      %v2723 = vadd.f32 %v2495, %v2683
      %v2724 = vadd.f32 %v2496, %v2688
      %v2725 = vadd.f32 %v2497, %v2691
      %v2727 = vrot.slane %v274, 5
      %v2728 = vrot.slane %v2727, 4
      %v2729 = vrot.slane %v275, 5
      %v2730 = vsel %vm1239, %v2728, %v2729
      %v2731 = vrot.slane %v2729, 4
      %v2732 = vrot.slane %v276, 5
      %v2733 = vsel %vm1239, %v2731, %v2732
      %s2734 = scalar_lea.vmem %s210, 32
      %v2735 = vld [vmem:[%s2734] sm:$0xf]
      %v2736 = vunpack.c.l.b16 %v2730
      %v2737 = vunpack.c.l.b16 %v2733
      %v2738 = vpack.c.b16 %v2737, %v2736
      %v2740 = vsel %vm715, %v2738, 0
      %v2743 = vsel %vm764, %v2735, 0
      %2745 = vmatprep.subr.bf16.mxu0 0
      %2746 = vmatpush1.bf16.msra.mxu0 0
      %2747 = vmatprep.subr.bf16.mxu0 0
      %2748 = vmatpush1.bf16.msra.mxu0 0
      %2749 = vmatprep.subr.bf16.mxu0 0
      %2750 = vmatpush1.bf16.msra.mxu0 0
      %2751 = vmatprep.subr.bf16.mxu0 0
      %2752 = vmatpush1.bf16.msra.mxu0 0
      %2753 = vmatprep.subr.bf16.mxu0 0
      %2754 = vmatpush1.bf16.msra.mxu0 0
      %2755 = vmatprep.subr.bf16.mxu0 0
      %2756 = vmatpush1.bf16.msra.mxu0 0
      %2757 = vmatprep.subr.bf16.mxu0 0
      %2758 = vmatpush1.bf16.msra.mxu0 0
      %2759 = vmatprep.subr.bf16.mxu0 0
      %2760 = vmatpush1.bf16.msra.mxu0 %v2743
      %2761 = vmatprep.subr.bf16.mxu0 0
      %2762 = vmatpush2.bf16.msra.mxu0 0
      %2763 = vmatprep.subr.bf16.mxu0 0
      %2764 = vmatpush2.bf16.msra.mxu0 0
      %2765 = vmatprep.subr.bf16.mxu0 0
      %2766 = vmatpush2.bf16.msra.mxu0 0
      %2767 = vmatprep.subr.bf16.mxu0 0
      %2768 = vmatpush2.bf16.msra.mxu0 0
      %2769 = vmatprep.subr.bf16.mxu0 0
      %2770 = vmatpush2.bf16.msra.mxu0 0
      %2771 = vmatprep.subr.bf16.mxu0 0
      %2772 = vmatpush2.bf16.msra.mxu0 0
      %2773 = vmatprep.subr.bf16.mxu0 0
      %2774 = vmatpush2.bf16.msra.mxu0 0
      %2775 = vmatprep.subr.bf16.mxu0 0
      %2776 = vmatpush2.bf16.msra.mxu0 0
      %2777 = vmatprep.mubr.bf16.mxu0 0
      %2778 = vmatmul.mubr.bf16.gmra.mxu0 %v1409
      %v2779 = vpop.f32.mrf.mxu0
      %v2780 = vadd.f32 0.0, %v2779
      %v2781 = vpop.f32.mrf.mxu0
      %v2782 = vpop.f32.mrf.mxu0
      %v2783 = vadd.f32 0.0, %v2782
      %v2784 = vpop.f32.mrf.mxu0
      %2785 = vmatprep.mubr.bf16.mxu0 0
      %2786 = vmatmul.mubr.bf16.gmra.mxu0 %v1412
      %v2787 = vpop.f32.mrf.mxu0
      %v2788 = vadd.f32 0.0, %v2787
      %v2789 = vpop.f32.mrf.mxu0
      %v2790 = vpop.f32.mrf.mxu0
      %v2791 = vadd.f32 0.0, %v2790
      %v2792 = vpop.f32.mrf.mxu0
      %2793 = vmatprep.mubr.bf16.mxu0 0
      %2794 = vmatmul.mubr.bf16.gmra.mxu0 %v1415
      %v2795 = vpop.f32.mrf.mxu0
      %v2796 = vadd.f32 0.0, %v2795
      %v2797 = vpop.f32.mrf.mxu0
      %v2798 = vpop.f32.mrf.mxu0
      %v2799 = vadd.f32 0.0, %v2798
      %v2800 = vpop.f32.mrf.mxu0
      %2801 = vmatprep.mubr.bf16.mxu0 0
      %2802 = vmatmul.mubr.bf16.gmra.mxu0 %v1418
      %v2803 = vpop.f32.mrf.mxu0
      %v2804 = vadd.f32 0.0, %v2803
      %v2805 = vpop.f32.mrf.mxu0
      %v2806 = vpop.f32.mrf.mxu0
      %v2807 = vadd.f32 0.0, %v2806
      %v2808 = vpop.f32.mrf.mxu0
      %2809 = vmatprep.mubr.bf16.mxu0 0
      %2810 = vmatmul.mubr.bf16.gmra.mxu0 %v1421
      %v2811 = vpop.f32.mrf.mxu0
      %v2812 = vadd.f32 0.0, %v2811
      %v2813 = vpop.f32.mrf.mxu0
      %v2814 = vpop.f32.mrf.mxu0
      %v2815 = vadd.f32 0.0, %v2814
      %v2816 = vpop.f32.mrf.mxu0
      %2817 = vmatprep.mubr.bf16.mxu0 0
      %2818 = vmatmul.mubr.bf16.gmra.mxu0 %v1424
      %v2819 = vpop.f32.mrf.mxu0
      %v2820 = vadd.f32 0.0, %v2819
      %v2821 = vpop.f32.mrf.mxu0
      %v2822 = vpop.f32.mrf.mxu0
      %v2823 = vadd.f32 0.0, %v2822
      %v2824 = vpop.f32.mrf.mxu0
      %2825 = vmatprep.mubr.bf16.mxu0 0
      %2826 = vmatmul.mubr.bf16.gmra.mxu0 %v1427
      %v2827 = vpop.f32.mrf.mxu0
      %v2828 = vadd.f32 0.0, %v2827
      %v2829 = vpop.f32.mrf.mxu0
      %v2830 = vpop.f32.mrf.mxu0
      %v2831 = vadd.f32 0.0, %v2830
      %v2832 = vpop.f32.mrf.mxu0
      %2833 = vmatprep.mubr.bf16.mxu0 0
      %2834 = vmatmul.mubr.bf16.gmra.mxu0 %v1430
      %v2835 = vpop.f32.mrf.mxu0
      %v2836 = vadd.f32 0.0, %v2835
      %v2837 = vpop.f32.mrf.mxu0
      %v2838 = vpop.f32.mrf.mxu0
      %v2839 = vadd.f32 0.0, %v2838
      %v2840 = vpop.f32.mrf.mxu0
      %2841 = vmatprep.mubr.bf16.mxu0 0
      %2842 = vmatmul.mubr.bf16.gmra.mxu0 %v1433
      %v2843 = vpop.f32.mrf.mxu0
      %v2844 = vadd.f32 0.0, %v2843
      %v2845 = vpop.f32.mrf.mxu0
      %v2846 = vpop.f32.mrf.mxu0
      %v2847 = vadd.f32 0.0, %v2846
      %v2848 = vpop.f32.mrf.mxu0
      %2849 = vmatprep.mubr.bf16.mxu0 0
      %2850 = vmatmul.mubr.bf16.gmra.mxu0 %v1436
      %v2851 = vpop.f32.mrf.mxu0
      %v2852 = vadd.f32 0.0, %v2851
      %v2853 = vpop.f32.mrf.mxu0
      %v2854 = vpop.f32.mrf.mxu0
      %v2855 = vadd.f32 0.0, %v2854
      %v2856 = vpop.f32.mrf.mxu0
      %2857 = vmatprep.mubr.bf16.mxu0 0
      %2858 = vmatmul.mubr.bf16.gmra.mxu0 %v1439
      %v2859 = vpop.f32.mrf.mxu0
      %v2860 = vadd.f32 0.0, %v2859
      %v2861 = vpop.f32.mrf.mxu0
      %v2862 = vpop.f32.mrf.mxu0
      %v2863 = vadd.f32 0.0, %v2862
      %v2864 = vpop.f32.mrf.mxu0
      %2865 = vmatprep.mubr.bf16.mxu0 0
      %2866 = vmatmul.mubr.bf16.gmra.mxu0 %v1442
      %v2867 = vpop.f32.mrf.mxu0
      %v2868 = vadd.f32 0.0, %v2867
      %v2869 = vpop.f32.mrf.mxu0
      %v2870 = vpop.f32.mrf.mxu0
      %v2871 = vadd.f32 0.0, %v2870
      %v2872 = vpop.f32.mrf.mxu0
      %2873 = vmatprep.mubr.bf16.mxu0 0
      %2874 = vmatmul.mubr.bf16.gmra.mxu0 %v1445
      %v2875 = vpop.f32.mrf.mxu0
      %v2876 = vadd.f32 0.0, %v2875
      %v2877 = vpop.f32.mrf.mxu0
      %v2878 = vpop.f32.mrf.mxu0
      %v2879 = vadd.f32 0.0, %v2878
      %v2880 = vpop.f32.mrf.mxu0
      %2881 = vmatprep.mubr.bf16.mxu0 0
      %2882 = vmatmul.mubr.bf16.gmra.mxu0 %v1448
      %v2883 = vpop.f32.mrf.mxu0
      %v2884 = vadd.f32 0.0, %v2883
      %v2885 = vpop.f32.mrf.mxu0
      %v2886 = vpop.f32.mrf.mxu0
      %v2887 = vadd.f32 0.0, %v2886
      %v2888 = vpop.f32.mrf.mxu0
      %2889 = vmatprep.mubr.bf16.mxu0 0
      %2890 = vmatmul.mubr.bf16.gmra.mxu0 %v2094
      %v2891 = vpop.f32.mrf.mxu0
      %v2892 = vadd.f32 0.0, %v2891
      %v2893 = vpop.f32.mrf.mxu0
      %v2894 = vpop.f32.mrf.mxu0
      %v2895 = vadd.f32 0.0, %v2894
      %v2896 = vpop.f32.mrf.mxu0
      %2897 = vmatprep.mubr.bf16.mxu0 0
      %2898 = vmatmul.mubr.bf16.gmra.mxu0 %v2740
      %v2899 = vpop.f32.mrf.mxu0
      %v2900 = vadd.f32 0.0, %v2899
      %v2901 = vpop.f32.mrf.mxu0
      %v2902 = vpop.f32.mrf.mxu0
      %v2903 = vadd.f32 0.0, %v2902
      %v2904 = vpop.f32.mrf.mxu0
      %2905 = vdwg.mxu0
      %v2906 = vadd.f32 %v2694, %v2780
      %v2907 = vadd.f32 %v2695, %v2783
      %v2908 = vadd.f32 %v2696, %v2788
      %v2909 = vadd.f32 %v2697, %v2791
      %v2910 = vadd.f32 %v2698, %v2796
      %v2911 = vadd.f32 %v2699, %v2799
      %v2912 = vadd.f32 %v2700, %v2804
      %v2913 = vadd.f32 %v2701, %v2807
      %v2914 = vadd.f32 %v2702, %v2812
      %v2915 = vadd.f32 %v2703, %v2815
      %v2916 = vadd.f32 %v2704, %v2820
      %v2917 = vadd.f32 %v2705, %v2823
      %v2918 = vadd.f32 %v2706, %v2828
      %v2919 = vadd.f32 %v2707, %v2831
      %v2920 = vadd.f32 %v2708, %v2836
      %v2921 = vadd.f32 %v2709, %v2839
      %v2922 = vadd.f32 %v2710, %v2844
      %v2923 = vadd.f32 %v2711, %v2847
      %v2924 = vadd.f32 %v2712, %v2852
      %v2925 = vadd.f32 %v2713, %v2855
      %v2926 = vadd.f32 %v2714, %v2860
      %v2927 = vadd.f32 %v2715, %v2863
      %v2928 = vadd.f32 %v2716, %v2868
      %v2929 = vadd.f32 %v2717, %v2871
      %v2930 = vadd.f32 %v2718, %v2876
      %v2931 = vadd.f32 %v2719, %v2879
      %v2932 = vadd.f32 %v2720, %v2884
      %v2933 = vadd.f32 %v2721, %v2887
      %v2934 = vadd.f32 %v2722, %v2892
      %v2935 = vadd.f32 %v2723, %v2895
      %v2936 = vadd.f32 %v2724, %v2900
      %v2937 = vadd.f32 %v2725, %v2903
      %v2938 = vld [vmem:[%s213] sm:$0x1]
      %v2940 = vlaneseq
      %v2941 = vshrl.u32 %v2940, 7
      %v2942 = vsub.s32 0, %v2941
      %v2943 = vrot.slane %v2938, %v2942
      %v2945 = vadd.f32 %v2906, %v2943
      %v2946 = vadd.f32 %v2907, %v2943
      %v2947 = vadd.f32 %v2908, %v2943
      %v2948 = vadd.f32 %v2909, %v2943
      %v2949 = vadd.f32 %v2910, %v2943
      %v2950 = vadd.f32 %v2911, %v2943
      %v2951 = vadd.f32 %v2912, %v2943
      %v2952 = vadd.f32 %v2913, %v2943
      %v2953 = vadd.f32 %v2914, %v2943
      %v2954 = vadd.f32 %v2915, %v2943
      %v2955 = vadd.f32 %v2916, %v2943
      %v2956 = vadd.f32 %v2917, %v2943
      %v2957 = vadd.f32 %v2918, %v2943
      %v2958 = vadd.f32 %v2919, %v2943
      %v2959 = vadd.f32 %v2920, %v2943
      %v2960 = vadd.f32 %v2921, %v2943
      %v2961 = vadd.f32 %v2922, %v2943
      %v2962 = vadd.f32 %v2923, %v2943
      %v2963 = vadd.f32 %v2924, %v2943
      %v2964 = vadd.f32 %v2925, %v2943
      %v2965 = vadd.f32 %v2926, %v2943
      %v2966 = vadd.f32 %v2927, %v2943
      %v2967 = vadd.f32 %v2928, %v2943
      %v2968 = vadd.f32 %v2929, %v2943
      %v2969 = vadd.f32 %v2930, %v2943
      %v2970 = vadd.f32 %v2931, %v2943
      %v2971 = vadd.f32 %v2932, %v2943
      %v2972 = vadd.f32 %v2933, %v2943
      %v2973 = vadd.f32 %v2934, %v2943
      %v2974 = vadd.f32 %v2935, %v2943
      %v2975 = vadd.f32 %v2936, %v2943
      %v2976 = vadd.f32 %v2937, %v2943
      %v2977 = vmax.f32 %v2945, 0.0
      %v2978 = vmax.f32 %v2946, 0.0
      %v2979 = vmax.f32 %v2947, 0.0
      %v2980 = vmax.f32 %v2948, 0.0
      %v2981 = vmax.f32 %v2949, 0.0
      %v2982 = vmax.f32 %v2950, 0.0
      %v2983 = vmax.f32 %v2951, 0.0
      %v2984 = vmax.f32 %v2952, 0.0
      %v2985 = vmax.f32 %v2953, 0.0
      %v2986 = vmax.f32 %v2954, 0.0
      %v2987 = vmax.f32 %v2955, 0.0
      %v2988 = vmax.f32 %v2956, 0.0
      %v2989 = vmax.f32 %v2957, 0.0
      %v2990 = vmax.f32 %v2958, 0.0
      %v2991 = vmax.f32 %v2959, 0.0
      %v2992 = vmax.f32 %v2960, 0.0
      %v2993 = vmax.f32 %v2961, 0.0
      %v2994 = vmax.f32 %v2962, 0.0
      %v2995 = vmax.f32 %v2963, 0.0
      %v2996 = vmax.f32 %v2964, 0.0
      %v2997 = vmax.f32 %v2965, 0.0
      %v2998 = vmax.f32 %v2966, 0.0
      %v2999 = vmax.f32 %v2967, 0.0
      %v3000 = vmax.f32 %v2968, 0.0
      %v3001 = vmax.f32 %v2969, 0.0
      %v3002 = vmax.f32 %v2970, 0.0
      %v3003 = vmax.f32 %v2971, 0.0
      %v3004 = vmax.f32 %v2972, 0.0
      %v3005 = vmax.f32 %v2973, 0.0
      %v3006 = vmax.f32 %v2974, 0.0
      %v3007 = vmax.f32 %v2975, 0.0
      %v3008 = vmax.f32 %v2976, 0.0
      %3009 = vst.msk [vmem:[%s221] sm:$0xff] %vm715, %v2977
      %3010 = vst.msk [vmem:[%s221 + $0x8] sm:$0xff] %vm715, %v2978
      %3011 = vst.msk [vmem:[%s221 + $0x10] sm:$0xff] %vm715, %v2979
      %3012 = vst.msk [vmem:[%s221 + $0x18] sm:$0xff] %vm715, %v2980
      %3013 = vst.msk [vmem:[%s221 + $0x20] sm:$0xff] %vm715, %v2981
      %3014 = vst.msk [vmem:[%s221 + $0x28] sm:$0xff] %vm715, %v2982
      %3015 = vst.msk [vmem:[%s221 + $0x30] sm:$0xff] %vm715, %v2983
      %3016 = vst.msk [vmem:[%s221 + $0x38] sm:$0xff] %vm715, %v2984
      %3017 = vst.msk [vmem:[%s221 + $0x40] sm:$0xff] %vm715, %v2985
      %3018 = vst.msk [vmem:[%s221 + $0x48] sm:$0xff] %vm715, %v2986
      %3019 = vst.msk [vmem:[%s221 + $0x50] sm:$0xff] %vm715, %v2987
      %3020 = vst.msk [vmem:[%s221 + $0x58] sm:$0xff] %vm715, %v2988
      %3021 = vst.msk [vmem:[%s221 + $0x60] sm:$0xff] %vm715, %v2989
      %3022 = vst.msk [vmem:[%s221 + $0x68] sm:$0xff] %vm715, %v2990
      %3023 = vst.msk [vmem:[%s221 + $0x70] sm:$0xff] %vm715, %v2991
      %3024 = vst.msk [vmem:[%s221 + $0x78] sm:$0xff] %vm715, %v2992
      %3025 = vst.msk [vmem:[%s221 + $0x80] sm:$0xff] %vm715, %v2993
      %3026 = vst.msk [vmem:[%s221 + $0x88] sm:$0xff] %vm715, %v2994
      %3027 = vst.msk [vmem:[%s221 + $0x90] sm:$0xff] %vm715, %v2995
      %3028 = vst.msk [vmem:[%s221 + $0x98] sm:$0xff] %vm715, %v2996
      %3029 = vst.msk [vmem:[%s221 + $0xa0] sm:$0xff] %vm715, %v2997
      %3030 = vst.msk [vmem:[%s221 + $0xa8] sm:$0xff] %vm715, %v2998
      %3031 = vst.msk [vmem:[%s221 + $0xb0] sm:$0xff] %vm715, %v2999
      %3032 = vst.msk [vmem:[%s221 + $0xb8] sm:$0xff] %vm715, %v3000
      %3033 = vst.msk [vmem:[%s221 + $0xc0] sm:$0xff] %vm715, %v3001
      %3034 = vst.msk [vmem:[%s221 + $0xc8] sm:$0xff] %vm715, %v3002
      %3035 = vst.msk [vmem:[%s221 + $0xd0] sm:$0xff] %vm715, %v3003
      %3036 = vst.msk [vmem:[%s221 + $0xd8] sm:$0xff] %vm715, %v3004
      %3037 = vst.msk [vmem:[%s221 + $0xe0] sm:$0xff] %vm715, %v3005
      %3038 = vst.msk [vmem:[%s221 + $0xe8] sm:$0xff] %vm715, %v3006
      %3039 = vst.msk [vmem:[%s221 + $0xf0] sm:$0xff] %vm715, %v3007
      %3040 = vst.msk [vmem:[%s221 + $0xf8] sm:$0xff] %vm715, %v3008
      %p3041 = scmp.lt.s32.totalorder %s18, 1
      %s3042 = scalar_select %p3041, %s18, 1
      %p3043 = scmp.lt.s32.totalorder %s19, 0
      %s3044 = scalar_select %p3043, %s19, 0
      %s3045 = smul.addr %s3042, 32
      %s3046 = sadd.s32 %s3044, %s3045
      %s3047 = smul.addr %s3046, 8
      %s3048 = scalar_lea.vmem %s3, %s3047
      // Predicated region
      $region33: #{double_conv.3} parent=31 // pred_check
        %p3049 = pneg %p124
      $region34: #{double_conv.3} parent=31 // pred_check_branch
        %3051 = sbr.rel (%p3049) target = $region36
      $region35: #{double_conv.3} parent=31 // pred_region
        _
      $region36: #{double_conv.3} parent=31 // pred_fallthru
        _
    $region32: #{double_conv.3} parent=5 // pred_fallthru
      _
    %p3052 = scmp.le.s32.totalorder 2, %s9
    // Predicated region
    $region37: #{double_conv.3} parent=5 // pred_check
      %p3053 = pneg %p3052
    $region38: #{double_conv.3} parent=5 // pred_check_branch
      %3055 = sbr.rel (%p3053) target = $region40
    $region39: #{double_conv.3} parent=5 // pred_region
      %s3056 = ssub.s32 %s9, 2
      // Predicated region
      $region41: #{double_conv.3} parent=39 // pred_check
        %p3057 = pneg %p130
      $region42: #{double_conv.3} parent=39 // pred_check_branch
        %3059 = sbr.rel (%p3057) target = $region44
      $region43: #{double_conv.3} parent=39 // pred_region
        %p3060 = scmp.lt.s32.totalorder %s20, 1
        %s3061 = scalar_select %p3060, %s20, 1
        %p3062 = scmp.lt.s32.totalorder %s21, 0
        %s3063 = scalar_select %p3062, %s21, 0
        %s3064 = smul.addr %s3061, 32
        %s3065 = sadd.s32 %s3063, %s3064
        %s3066 = smul.addr %s3065, 8
        %s3067 = scalar_lea.vmem %s3, %s3066
      $region44: #{double_conv.3} parent=39 // pred_fallthru
        _
    $region40: #{double_conv.3} parent=5 // pred_fallthru
      _
  $region6: #{double_conv.3} parent=0 // loop_footer
    %s13 = sadd.s32 1, %s9
  $region7: #{double_conv.3} parent=0 // loop_footer_branch
    %8 = sbr.rel target = $region3
  $region8: #{double_conv.3} parent=0 // loop_exit
    _

</llo_original>
